<compile_context>
chip_gen: v6e
topology: v6e:2x2x1
jax: 0.10.0
libtpu: 0.0.40
codegen_flags: <defaults>
</compile_context>

<pallas_src>
import functools

import jax
import jax.numpy as jnp
import numpy as np
from jax import lax
from jax.experimental import pallas as pl
from jax.experimental.pallas import tpu as pltpu

_EPS = 1e-5
_LANES = 128  # TPU lane width; all channel axes are zero-padded up to this.


def _interior(full, s, q):
    """(start, count) of phase q holding real (non zero-pad) spatial positions.

    Padded coordinate hp = s*i + q corresponds to original coordinate h = hp - 1
    (spatial zero-padding of 1 for the 3x3 conv); real positions are 0 <= h < full.
    """
    lo = 1 if q == 0 else 0
    hi = (full - q) // s
    return lo, max(0, hi - lo + 1)


def _bottleneck_kernel(xs_ref, w1_ref, w2_ref, w3_ref, gb_ref, o_ref, y1s_ref, *,
                       n, s, ho, wo, hs, ws, cp, m1, m2, eps, ih, iw):
    f32 = jnp.float32
    gb = gb_ref[...]
    g1, b1, g2, b2, g3, b3 = (gb[i:i + 1] for i in range(6))

    # ---- stage 1: 1x1 conv per stride-phase; raw f32 result into padded VMEM scratch ----
    w1 = w1_ref[...]
    s1 = jnp.zeros((1, cp), f32)
    q1 = jnp.zeros((1, cp), f32)
    for qi in range(s):
        r0, nr = ih[qi]
        for pi in range(s):
            c0, nc = iw[pi]
            # zero the whole phase plane so the spatial pad border is exactly 0
            y1s_ref[qi, pi] = jnp.zeros((n, hs, ws, cp), f32)
            if nr <= 0 or nc <= 0:
                continue
            xm = xs_ref[qi, pi, :, r0:r0 + nr, c0:c0 + nc, :].reshape(n * nr * nc, cp)
            y = jnp.dot(xm, w1, preferred_element_type=f32)
            s1 = s1 + jnp.sum(y, axis=0, keepdims=True)
            q1 = q1 + jnp.sum(y * y, axis=0, keepdims=True)
            y1s_ref[qi, pi, :, r0:r0 + nr, c0:c0 + nc, :] = y.reshape(n, nr, nc, cp)

    # BN1 (batch stats over the m1 real positions) folded into scale/shift
    mean1 = s1 / m1
    var1 = q1 / m1 - mean1 * mean1
    sc1 = g1 * lax.rsqrt(var1 + eps)
    sh1 = b1 - mean1 * sc1

    # apply BN1 + ReLU in place on the interiors (pad border stays exactly 0 for conv2)
    for qi in range(s):
        r0, nr = ih[qi]
        for pi in range(s):
            c0, nc = iw[pi]
            if nr <= 0 or nc <= 0:
                continue
            blk = y1s_ref[qi, pi, :, r0:r0 + nr, c0:c0 + nc, :]
            y1s_ref[qi, pi, :, r0:r0 + nr, c0:c0 + nc, :] = jnp.maximum(
                blk * sc1 + sh1, 0.0)

    # ---- stage 2: 3x3 stride-s conv = 9 shifted tap matmuls accumulated in f32 ----
    acc2 = jnp.zeros((m2, cp), f32)
    for ky in range(3):
        for kx in range(3):
            tap = y1s_ref[ky % s, kx % s, :,
                          ky // s:ky // s + ho,
                          kx // s:kx // s + wo, :]
            tap = tap.reshape(m2, cp).astype(jnp.bfloat16)
            acc2 = acc2 + jnp.dot(tap, w2_ref[ky * 3 + kx],
                                  preferred_element_type=f32)

    s2 = jnp.sum(acc2, axis=0, keepdims=True)
    q2 = jnp.sum(acc2 * acc2, axis=0, keepdims=True)
    mean2 = s2 / m2
    var2 = q2 / m2 - mean2 * mean2
    sc2 = g2 * lax.rsqrt(var2 + eps)
    sh2 = b2 - mean2 * sc2
    y2 = jnp.maximum(acc2 * sc2 + sh2, 0.0).astype(jnp.bfloat16)

    # ---- stage 3: 1x1 conv + BN3 (no ReLU) ----
    y3 = jnp.dot(y2, w3_ref[...], preferred_element_type=f32)
    s3 = jnp.sum(y3, axis=0, keepdims=True)
    q3 = jnp.sum(y3 * y3, axis=0, keepdims=True)
    mean3 = s3 / m2
    var3 = q3 / m2 - mean3 * mean3
    sc3 = g3 * lax.rsqrt(var3 + eps)
    sh3 = b3 - mean3 * sc3
    o_ref[...] = (y3 * sc3 + sh3).astype(o_ref.dtype)


# ---------------------------------------------------------------------------
# One-time (hoisted) parameter repacking: lane-dense, MXU-ready layouts
# ---------------------------------------------------------------------------
def prepare_params(p):
    hid, cin = p["w1"].shape[0], p["w1"].shape[1]
    cout = p["w3"].shape[0]
    cp = _LANES
    assert max(cin, hid, cout) <= cp, "channel padding beyond one lane tile not implemented"

    def pad2(m):
        return jnp.pad(m, ((0, cp - m.shape[0]), (0, cp - m.shape[1])))

    def pad1(v):
        return jnp.pad(v, (0, cp - v.shape[0]))

    w1 = pad2(p["w1"][:, :, 0, 0].T).astype(jnp.bfloat16)        # (cin, hid) -> (128,128)
    w2 = jnp.stack([pad2(p["w2"][:, :, ky, kx].T)                # 9 taps, each (I, O)
                    for ky in range(3) for kx in range(3)]).astype(jnp.bfloat16)
    w3 = pad2(p["w3"][:, :, 0, 0].T).astype(jnp.bfloat16)        # (hid, cout) -> (128,128)
    gb = jnp.stack([pad1(p["g1"]), pad1(p["b1"]),
                    pad1(p["g2"]), pad1(p["b2"]),
                    pad1(p["g3"]), pad1(p["b3"]),
                    jnp.zeros((cp,), jnp.float32), jnp.zeros((cp,), jnp.float32)])
    return {"w1": w1, "w2": w2, "w3": w3, "gb": gb, "cout": cout}


# ---------------------------------------------------------------------------
# Forward: layout glue in JAX, all math in one fused Pallas kernel
# ---------------------------------------------------------------------------
def bottleneck_forward(x_nchw, prep, stride):
    N, cin, H, W = x_nchw.shape
    s = int(stride)
    cp = _LANES
    Ho = (H + 2 - 3) // s + 1
    Wo = (W + 2 - 3) // s + 1
    Hs = -(-(H + 2) // s)          # cdiv(H + 2, s)
    Ws = -(-(W + 2) // s)
    M1, M2 = N * H * W, N * Ho * Wo

    # NCHW -> NHWC, channel pad to lane width, spatial pad for the 3x3 window, and a
    # space-to-batch split of the stride phases: xs[q, p, n, i, j, c] = x_padded[n, s*i+q, s*j+p, c]
    x = jnp.transpose(x_nchw, (0, 2, 3, 1))
    xp = jnp.pad(x, ((0, 0), (1, s * Hs - H - 1), (1, s * Ws - W - 1), (0, cp - cin)))
    xs = xp.reshape(N, Hs, s, Ws, s, cp).transpose(2, 4, 0, 1, 3, 5)
    xs = xs.astype(jnp.bfloat16)

    ih = tuple(_interior(H, s, q) for q in range(s))
    iw = tuple(_interior(W, s, q) for q in range(s))

    # Fused path keeps everything in VMEM.  Guard the footprint explicitly.
    # TODO(synk): tiled grid over M with a two-pass sum/sumsq BN reduction for shapes
    # that exceed this budget (ResNet-scale M).
    scratch_bytes = s * s * N * Hs * Ws * cp * 4
    est_vmem = 2 * (xs.size * 2 + prep["w1"].size * 2 + prep["w2"].size * 2
                    + prep["w3"].size * 2 + prep["gb"].size * 4 + M2 * cp * 4) + scratch_bytes
    assert est_vmem < 24 * 1024 * 1024, "fused single-block path would not fit in VMEM"

    kernel = functools.partial(
        _bottleneck_kernel, n=N, s=s, ho=Ho, wo=Wo, hs=Hs, ws=Ws, cp=cp,
        m1=M1, m2=M2, eps=_EPS, ih=ih, iw=iw)

    out2d = pl.pallas_call(
        kernel,
        out_shape=jax.ShapeDtypeStruct((M2, cp), jnp.float32),
        grid=(1,),
        in_specs=[
            pl.BlockSpec((s, s, N, Hs, Ws, cp), lambda i: (0, 0, 0, 0, 0, 0)),
            pl.BlockSpec((cp, cp), lambda i: (0, 0)),
            pl.BlockSpec((9, cp, cp), lambda i: (0, 0, 0)),
            pl.BlockSpec((cp, cp), lambda i: (0, 0)),
            pl.BlockSpec((8, cp), lambda i: (0, 0)),
        ],
        out_specs=pl.BlockSpec((M2, cp), lambda i: (0, 0)),
        scratch_shapes=[pltpu.VMEM((s, s, N, Hs, Ws, cp), jnp.float32)],
        compiler_params=pltpu.CompilerParams(
            dimension_semantics=("arbitrary",),
            vmem_limit_bytes=32 * 1024 * 1024),
    )(xs, prep["w1"], prep["w2"], prep["w3"], prep["gb"])

    cout = prep["cout"]
    y = out2d[:, :cout].reshape(N, Ho, Wo, cout)
    return jnp.transpose(y, (0, 3, 1, 2))  # back to NCHW


# ---------------------------------------------------------------------------
# Pure-JAX reference (lax conv + training-mode BN) for validation
# ---------------------------------------------------------------------------
def ref_forward(x, p, stride):
    def bn(y, g, b):
        m = y.mean(axis=(0, 2, 3), keepdims=True)
        v = y.var(axis=(0, 2, 3), keepdims=True)
        return (y - m) / jnp.sqrt(v + _EPS) * g[None, :, None, None] + b[None, :, None, None]

    dn = ("NCHW", "OIHW", "NCHW")
    y = lax.conv_general_dilated(x, p["w1"], (1, 1), "VALID", dimension_numbers=dn)
    y = jnp.maximum(bn(y, p["g1"], p["b1"]), 0.0)
    y = lax.conv_general_dilated(
        y, p["w2"], (stride, stride), ((1, 1), (1, 1)), dimension_numbers=dn)
    y = jnp.maximum(bn(y, p["g2"], p["b2"]), 0.0)
    y = lax.conv_general_dilated(y, p["w3"], (1, 1), "VALID", dimension_numbers=dn)
    return bn(y, p["g3"], p["b3"])


# ---------------------------------------------------------------------------
if __name__ == "__main__":
    key = jax.random.PRNGKey(0)
    N, in_ch, H, W = 2, 4, 16, 16
    out_ch, stride, scale = 16, 2, 4
    hid_ch = out_ch // scale

    ks = jax.random.split(key, 8)
    params = {
        "w1": 0.3 * jax.random.normal(ks[0], (hid_ch, in_ch, 1, 1), jnp.float32),
        "w2": 0.2 * jax.random.normal(ks[1], (hid_ch, hid_ch, 3, 3), jnp.float32),
        "w3": 0.3 * jax.random.normal(ks[2], (out_ch, hid_ch, 1, 1), jnp.float32),
        "g1": 1.0 + 0.1 * jnp.arange(hid_ch, dtype=jnp.float32),
        "b1": 0.05 * jnp.arange(hid_ch, dtype=jnp.float32),
        "g2": 1.0 - 0.05 * jnp.arange(hid_ch, dtype=jnp.float32),
        "b2": -0.02 * jnp.arange(hid_ch, dtype=jnp.float32),
        "g3": 1.0 + 0.03 * jnp.arange(out_ch, dtype=jnp.float32),
        "b3": 0.01 * jnp.arange(out_ch, dtype=jnp.float32),
    }
    x = jax.random.normal(ks[3], (N, in_ch, H, W), jnp.float32)

    prep = prepare_params(params)
    out = jax.block_until_ready(bottleneck_forward(x, prep, stride))

    # f32 reference fed the same bf16-rounded conv inputs (the kernel feeds the MXU bf16;
    # intermediate activations are also bf16-rounded in the kernel, hence the tolerance).
    params_q = {k: (v.astype(jnp.bfloat16).astype(jnp.float32) if k.startswith("w") else v)
                for k, v in params.items()}
    x_q = x.astype(jnp.bfloat16).astype(jnp.float32)
    ref = jax.block_until_ready(ref_forward(x_q, params_q, stride))

    assert out.shape == (N, out_ch, H // stride, W // stride), out.shape
    np.testing.assert_allclose(np.asarray(out), np.asarray(ref), rtol=5e-2, atol=5e-2)
    print("KERNEL_OK")
</pallas_src>

<mosaic_0001>
module attributes {stable_mosaic.version = 11 : i64} {
  func.func @_bottleneck_kernel(%arg0: i32, %arg1: memref<2x2x2x9x9x128xbf16, #tpu.memory_space<vmem>>, %arg2: memref<128x128xbf16, #tpu.memory_space<vmem>>, %arg3: memref<9x128x128xbf16, #tpu.memory_space<vmem>>, %arg4: memref<128x128xbf16, #tpu.memory_space<vmem>>, %arg5: memref<8x128xf32, #tpu.memory_space<vmem>>, %arg6: memref<128x128xf32, #tpu.memory_space<vmem>>, %arg7: memref<2x2x2x9x9x128xf32, #tpu.memory_space<vmem>>) attributes {dimension_semantics = [#tpu.dimension_semantics<arbitrary>], iteration_bounds = array<i64: 1>, scalar_prefetch = 0 : i64, scratch_operands = 1 : i64, tpu.core_type = #tpu.core_type<tc>, window_params = [{pipeline_mode = #tpu.pipeline_mode<synchronous>, transform_indices = @transform_0, window_bounds = array<i64: 2, 2, 2, 9, 9, 128>}, {pipeline_mode = #tpu.pipeline_mode<synchronous>, transform_indices = @transform_1, window_bounds = array<i64: 128, 128>}, {pipeline_mode = #tpu.pipeline_mode<synchronous>, transform_indices = @transform_2, window_bounds = array<i64: 9, 128, 128>}, {pipeline_mode = #tpu.pipeline_mode<synchronous>, transform_indices = @transform_3, window_bounds = array<i64: 128, 128>}, {pipeline_mode = #tpu.pipeline_mode<synchronous>, transform_indices = @transform_4, window_bounds = array<i64: 8, 128>}, {pipeline_mode = #tpu.pipeline_mode<synchronous>, transform_indices = @transform_5, window_bounds = array<i64: 128, 128>}]} {
    %c0 = arith.constant 0 : index
    %c0_0 = arith.constant 0 : index
    %0 = vector.load %arg5[%c0, %c0_0] : memref<8x128xf32, #tpu.memory_space<vmem>>, vector<8x128xf32>
    %1 = vector.extract_strided_slice %0 {offsets = [0, 0], sizes = [1, 128], strides = [1, 1]} : vector<8x128xf32> to vector<1x128xf32>
    %2 = vector.extract_strided_slice %0 {offsets = [1, 0], sizes = [1, 128], strides = [1, 1]} : vector<8x128xf32> to vector<1x128xf32>
    %3 = vector.extract_strided_slice %0 {offsets = [2, 0], sizes = [1, 128], strides = [1, 1]} : vector<8x128xf32> to vector<1x128xf32>
    %4 = vector.extract_strided_slice %0 {offsets = [3, 0], sizes = [1, 128], strides = [1, 1]} : vector<8x128xf32> to vector<1x128xf32>
    %5 = vector.extract_strided_slice %0 {offsets = [4, 0], sizes = [1, 128], strides = [1, 1]} : vector<8x128xf32> to vector<1x128xf32>
    %6 = vector.extract_strided_slice %0 {offsets = [5, 0], sizes = [1, 128], strides = [1, 1]} : vector<8x128xf32> to vector<1x128xf32>
    %c0_1 = arith.constant 0 : index
    %c0_2 = arith.constant 0 : index
    %7 = vector.load %arg2[%c0_1, %c0_2] : memref<128x128xbf16, #tpu.memory_space<vmem>>, vector<128x128xbf16>
    %cst = arith.constant 0.000000e+00 : f32
    %8 = vector.broadcast %cst : f32 to vector<1x128xf32>
    %cst_3 = arith.constant 0.000000e+00 : f32
    %9 = vector.broadcast %cst_3 : f32 to vector<1x128xf32>
    %cst_4 = arith.constant 0.000000e+00 : f32
    %10 = vector.broadcast %cst_4 : f32 to vector<2x9x9x128xf32>
    %c0_5 = arith.constant 0 : index
    %c0_6 = arith.constant 0 : index
    %c0_7 = arith.constant 0 : index
    %c0_8 = arith.constant 0 : index
    %c0_9 = arith.constant 0 : index
    %c0_10 = arith.constant 0 : index
    %11 = vector.load %arg7[%c0_5, %c0_6, %c0_7, %c0_8, %c0_9, %c0_10] : memref<2x2x2x9x9x128xf32, #tpu.memory_space<vmem>>, vector<1x1x2x9x9x128xf32>
    %12 = vector.shape_cast %11 : vector<1x1x2x9x9x128xf32> to vector<2x9x9x128xf32>
    %13 = vector.shape_cast %10 : vector<2x9x9x128xf32> to vector<1x1x2x9x9x128xf32>
    tpu.vector_store %arg7[%c0_5, %c0_6, %c0_7, %c0_8, %c0_9, %c0_10], %13 {strides = array<i32>} : memref<2x2x2x9x9x128xf32, #tpu.memory_space<vmem>>, vector<1x1x2x9x9x128xf32>,
    %c0_11 = arith.constant 0 : index
    %c0_12 = arith.constant 0 : index
    %c0_13 = arith.constant 0 : index
    %c1 = arith.constant 1 : index
    %c1_14 = arith.constant 1 : index
    %c0_15 = arith.constant 0 : index
    %14 = vector.load %arg1[%c0_11, %c0_12, %c0_13, %c1, %c1_14, %c0_15] : memref<2x2x2x9x9x128xbf16, #tpu.memory_space<vmem>>, vector<1x1x2x8x8x128xbf16>
    %15 = vector.shape_cast %14 : vector<1x1x2x8x8x128xbf16> to vector<2x8x8x128xbf16>
    %16 = vector.shape_cast %15 : vector<2x8x8x128xbf16> to vector<128x128xbf16>
    %cst_16 = arith.constant dense<0.000000e+00> : vector<128x128xf32>
    %17 = tpu.matmul %16, %7, %cst_16 {dimension_numbers = #tpu.dot_dimension_numbers<[1], [0], [0], [1], [0, 0, 1, 1], [], []>} : vector<128x128xbf16>, vector<128x128xbf16>, vector<128x128xf32> -> vector<128x128xf32>
    %cst_17 = arith.constant dense<0.000000e+00> : vector<128xf32>
    %18 = vector.multi_reduction <add>, %17, %cst_17 [0] : vector<128x128xf32> to vector<128xf32>
    %19 = vector.shape_cast %18 : vector<128xf32> to vector<1x128xf32>
    %20 = arith.addf %8, %19 : vector<1x128xf32>
    %21 = arith.mulf %17, %17 : vector<128x128xf32>
    %cst_18 = arith.constant dense<0.000000e+00> : vector<128xf32>
    %22 = vector.multi_reduction <add>, %21, %cst_18 [0] : vector<128x128xf32> to vector<128xf32>
    %23 = vector.shape_cast %22 : vector<128xf32> to vector<1x128xf32>
    %24 = arith.addf %9, %23 : vector<1x128xf32>
    %25 = vector.shape_cast %17 : vector<128x128xf32> to vector<2x8x8x128xf32>
    %c0_19 = arith.constant 0 : index
    %c0_20 = arith.constant 0 : index
    %c0_21 = arith.constant 0 : index
    %c1_22 = arith.constant 1 : index
    %c1_23 = arith.constant 1 : index
    %c0_24 = arith.constant 0 : index
    %26 = vector.load %arg7[%c0_19, %c0_20, %c0_21, %c1_22, %c1_23, %c0_24] : memref<2x2x2x9x9x128xf32, #tpu.memory_space<vmem>>, vector<1x1x2x8x8x128xf32>
    %27 = vector.shape_cast %26 : vector<1x1x2x8x8x128xf32> to vector<2x8x8x128xf32>
    %28 = vector.shape_cast %25 : vector<2x8x8x128xf32> to vector<1x1x2x8x8x128xf32>
    tpu.vector_store %arg7[%c0_19, %c0_20, %c0_21, %c1_22, %c1_23, %c0_24], %28 {strides = array<i32>} : memref<2x2x2x9x9x128xf32, #tpu.memory_space<vmem>>, vector<1x1x2x8x8x128xf32>,
    %cst_25 = arith.constant 0.000000e+00 : f32
    %29 = vector.broadcast %cst_25 : f32 to vector<2x9x9x128xf32>
    %c0_26 = arith.constant 0 : index
    %c1_27 = arith.constant 1 : index
    %c0_28 = arith.constant 0 : index
    %c0_29 = arith.constant 0 : index
    %c0_30 = arith.constant 0 : index
    %c0_31 = arith.constant 0 : index
    %30 = vector.load %arg7[%c0_26, %c1_27, %c0_28, %c0_29, %c0_30, %c0_31] : memref<2x2x2x9x9x128xf32, #tpu.memory_space<vmem>>, vector<1x1x2x9x9x128xf32>
    %31 = vector.shape_cast %30 : vector<1x1x2x9x9x128xf32> to vector<2x9x9x128xf32>
    %32 = vector.shape_cast %29 : vector<2x9x9x128xf32> to vector<1x1x2x9x9x128xf32>
    tpu.vector_store %arg7[%c0_26, %c1_27, %c0_28, %c0_29, %c0_30, %c0_31], %32 {strides = array<i32>} : memref<2x2x2x9x9x128xf32, #tpu.memory_space<vmem>>, vector<1x1x2x9x9x128xf32>,
    %c0_32 = arith.constant 0 : index
    %c1_33 = arith.constant 1 : index
    %c0_34 = arith.constant 0 : index
    %c1_35 = arith.constant 1 : index
    %c0_36 = arith.constant 0 : index
    %c0_37 = arith.constant 0 : index
    %33 = vector.load %arg1[%c0_32, %c1_33, %c0_34, %c1_35, %c0_36, %c0_37] : memref<2x2x2x9x9x128xbf16, #tpu.memory_space<vmem>>, vector<1x1x2x8x8x128xbf16>
    %34 = vector.shape_cast %33 : vector<1x1x2x8x8x128xbf16> to vector<2x8x8x128xbf16>
    %35 = vector.shape_cast %34 : vector<2x8x8x128xbf16> to vector<128x128xbf16>
    %cst_38 = arith.constant dense<0.000000e+00> : vector<128x128xf32>
    %36 = tpu.matmul %35, %7, %cst_38 {dimension_numbers = #tpu.dot_dimension_numbers<[1], [0], [0], [1], [0, 0, 1, 1], [], []>} : vector<128x128xbf16>, vector<128x128xbf16>, vector<128x128xf32> -> vector<128x128xf32>
    %cst_39 = arith.constant dense<0.000000e+00> : vector<128xf32>
    %37 = vector.multi_reduction <add>, %36, %cst_39 [0] : vector<128x128xf32> to vector<128xf32>
    %38 = vector.shape_cast %37 : vector<128xf32> to vector<1x128xf32>
    %39 = arith.addf %20, %38 : vector<1x128xf32>
    %40 = arith.mulf %36, %36 : vector<128x128xf32>
    %cst_40 = arith.constant dense<0.000000e+00> : vector<128xf32>
    %41 = vector.multi_reduction <add>, %40, %cst_40 [0] : vector<128x128xf32> to vector<128xf32>
    %42 = vector.shape_cast %41 : vector<128xf32> to vector<1x128xf32>
    %43 = arith.addf %24, %42 : vector<1x128xf32>
    %44 = vector.shape_cast %36 : vector<128x128xf32> to vector<2x8x8x128xf32>
    %c0_41 = arith.constant 0 : index
    %c1_42 = arith.constant 1 : index
    %c0_43 = arith.constant 0 : index
    %c1_44 = arith.constant 1 : index
    %c0_45 = arith.constant 0 : index
    %c0_46 = arith.constant 0 : index
    %45 = vector.load %arg7[%c0_41, %c1_42, %c0_43, %c1_44, %c0_45, %c0_46] : memref<2x2x2x9x9x128xf32, #tpu.memory_space<vmem>>, vector<1x1x2x8x8x128xf32>
    %46 = vector.shape_cast %45 : vector<1x1x2x8x8x128xf32> to vector<2x8x8x128xf32>
    %47 = vector.shape_cast %44 : vector<2x8x8x128xf32> to vector<1x1x2x8x8x128xf32>
    tpu.vector_store %arg7[%c0_41, %c1_42, %c0_43, %c1_44, %c0_45, %c0_46], %47 {strides = array<i32>} : memref<2x2x2x9x9x128xf32, #tpu.memory_space<vmem>>, vector<1x1x2x8x8x128xf32>,
    %cst_47 = arith.constant 0.000000e+00 : f32
    %48 = vector.broadcast %cst_47 : f32 to vector<2x9x9x128xf32>
    %c1_48 = arith.constant 1 : index
    %c0_49 = arith.constant 0 : index
    %c0_50 = arith.constant 0 : index
    %c0_51 = arith.constant 0 : index
    %c0_52 = arith.constant 0 : index
    %c0_53 = arith.constant 0 : index
    %49 = vector.load %arg7[%c1_48, %c0_49, %c0_50, %c0_51, %c0_52, %c0_53] : memref<2x2x2x9x9x128xf32, #tpu.memory_space<vmem>>, vector<1x1x2x9x9x128xf32>
    %50 = vector.shape_cast %49 : vector<1x1x2x9x9x128xf32> to vector<2x9x9x128xf32>
    %51 = vector.shape_cast %48 : vector<2x9x9x128xf32> to vector<1x1x2x9x9x128xf32>
    tpu.vector_store %arg7[%c1_48, %c0_49, %c0_50, %c0_51, %c0_52, %c0_53], %51 {strides = array<i32>} : memref<2x2x2x9x9x128xf32, #tpu.memory_space<vmem>>, vector<1x1x2x9x9x128xf32>,
    %c1_54 = arith.constant 1 : index
    %c0_55 = arith.constant 0 : index
    %c0_56 = arith.constant 0 : index
    %c0_57 = arith.constant 0 : index
    %c1_58 = arith.constant 1 : index
    %c0_59 = arith.constant 0 : index
    %52 = vector.load %arg1[%c1_54, %c0_55, %c0_56, %c0_57, %c1_58, %c0_59] : memref<2x2x2x9x9x128xbf16, #tpu.memory_space<vmem>>, vector<1x1x2x8x8x128xbf16>
    %53 = vector.shape_cast %52 : vector<1x1x2x8x8x128xbf16> to vector<2x8x8x128xbf16>
    %54 = vector.shape_cast %53 : vector<2x8x8x128xbf16> to vector<128x128xbf16>
    %cst_60 = arith.constant dense<0.000000e+00> : vector<128x128xf32>
    %55 = tpu.matmul %54, %7, %cst_60 {dimension_numbers = #tpu.dot_dimension_numbers<[1], [0], [0], [1], [0, 0, 1, 1], [], []>} : vector<128x128xbf16>, vector<128x128xbf16>, vector<128x128xf32> -> vector<128x128xf32>
    %cst_61 = arith.constant dense<0.000000e+00> : vector<128xf32>
    %56 = vector.multi_reduction <add>, %55, %cst_61 [0] : vector<128x128xf32> to vector<128xf32>
    %57 = vector.shape_cast %56 : vector<128xf32> to vector<1x128xf32>
    %58 = arith.addf %39, %57 : vector<1x128xf32>
    %59 = arith.mulf %55, %55 : vector<128x128xf32>
    %cst_62 = arith.constant dense<0.000000e+00> : vector<128xf32>
    %60 = vector.multi_reduction <add>, %59, %cst_62 [0] : vector<128x128xf32> to vector<128xf32>
    %61 = vector.shape_cast %60 : vector<128xf32> to vector<1x128xf32>
    %62 = arith.addf %43, %61 : vector<1x128xf32>
    %63 = vector.shape_cast %55 : vector<128x128xf32> to vector<2x8x8x128xf32>
    %c1_63 = arith.constant 1 : index
    %c0_64 = arith.constant 0 : index
    %c0_65 = arith.constant 0 : index
    %c0_66 = arith.constant 0 : index
    %c1_67 = arith.constant 1 : index
    %c0_68 = arith.constant 0 : index
    %64 = vector.load %arg7[%c1_63, %c0_64, %c0_65, %c0_66, %c1_67, %c0_68] : memref<2x2x2x9x9x128xf32, #tpu.memory_space<vmem>>, vector<1x1x2x8x8x128xf32>
    %65 = vector.shape_cast %64 : vector<1x1x2x8x8x128xf32> to vector<2x8x8x128xf32>
    %66 = vector.shape_cast %63 : vector<2x8x8x128xf32> to vector<1x1x2x8x8x128xf32>
    tpu.vector_store %arg7[%c1_63, %c0_64, %c0_65, %c0_66, %c1_67, %c0_68], %66 {strides = array<i32>} : memref<2x2x2x9x9x128xf32, #tpu.memory_space<vmem>>, vector<1x1x2x8x8x128xf32>,
    %cst_69 = arith.constant 0.000000e+00 : f32
    %67 = vector.broadcast %cst_69 : f32 to vector<2x9x9x128xf32>
    %c1_70 = arith.constant 1 : index
    %c1_71 = arith.constant 1 : index
    %c0_72 = arith.constant 0 : index
    %c0_73 = arith.constant 0 : index
    %c0_74 = arith.constant 0 : index
    %c0_75 = arith.constant 0 : index
    %68 = vector.load %arg7[%c1_70, %c1_71, %c0_72, %c0_73, %c0_74, %c0_75] : memref<2x2x2x9x9x128xf32, #tpu.memory_space<vmem>>, vector<1x1x2x9x9x128xf32>
    %69 = vector.shape_cast %68 : vector<1x1x2x9x9x128xf32> to vector<2x9x9x128xf32>
    %70 = vector.shape_cast %67 : vector<2x9x9x128xf32> to vector<1x1x2x9x9x128xf32>
    tpu.vector_store %arg7[%c1_70, %c1_71, %c0_72, %c0_73, %c0_74, %c0_75], %70 {strides = array<i32>} : memref<2x2x2x9x9x128xf32, #tpu.memory_space<vmem>>, vector<1x1x2x9x9x128xf32>,
    %c1_76 = arith.constant 1 : index
    %c1_77 = arith.constant 1 : index
    %c0_78 = arith.constant 0 : index
    %c0_79 = arith.constant 0 : index
    %c0_80 = arith.constant 0 : index
    %c0_81 = arith.constant 0 : index
    %71 = vector.load %arg1[%c1_76, %c1_77, %c0_78, %c0_79, %c0_80, %c0_81] : memref<2x2x2x9x9x128xbf16, #tpu.memory_space<vmem>>, vector<1x1x2x8x8x128xbf16>
    %72 = vector.shape_cast %71 : vector<1x1x2x8x8x128xbf16> to vector<2x8x8x128xbf16>
    %73 = vector.shape_cast %72 : vector<2x8x8x128xbf16> to vector<128x128xbf16>
    %cst_82 = arith.constant dense<0.000000e+00> : vector<128x128xf32>
    %74 = tpu.matmul %73, %7, %cst_82 {dimension_numbers = #tpu.dot_dimension_numbers<[1], [0], [0], [1], [0, 0, 1, 1], [], []>} : vector<128x128xbf16>, vector<128x128xbf16>, vector<128x128xf32> -> vector<128x128xf32>
    %cst_83 = arith.constant dense<0.000000e+00> : vector<128xf32>
    %75 = vector.multi_reduction <add>, %74, %cst_83 [0] : vector<128x128xf32> to vector<128xf32>
    %76 = vector.shape_cast %75 : vector<128xf32> to vector<1x128xf32>
    %77 = arith.addf %58, %76 : vector<1x128xf32>
    %78 = arith.mulf %74, %74 : vector<128x128xf32>
    %cst_84 = arith.constant dense<0.000000e+00> : vector<128xf32>
    %79 = vector.multi_reduction <add>, %78, %cst_84 [0] : vector<128x128xf32> to vector<128xf32>
    %80 = vector.shape_cast %79 : vector<128xf32> to vector<1x128xf32>
    %81 = arith.addf %62, %80 : vector<1x128xf32>
    %82 = vector.shape_cast %74 : vector<128x128xf32> to vector<2x8x8x128xf32>
    %c1_85 = arith.constant 1 : index
    %c1_86 = arith.constant 1 : index
    %c0_87 = arith.constant 0 : index
    %c0_88 = arith.constant 0 : index
    %c0_89 = arith.constant 0 : index
    %c0_90 = arith.constant 0 : index
    %83 = vector.load %arg7[%c1_85, %c1_86, %c0_87, %c0_88, %c0_89, %c0_90] : memref<2x2x2x9x9x128xf32, #tpu.memory_space<vmem>>, vector<1x1x2x8x8x128xf32>
    %84 = vector.shape_cast %83 : vector<1x1x2x8x8x128xf32> to vector<2x8x8x128xf32>
    %85 = vector.shape_cast %82 : vector<2x8x8x128xf32> to vector<1x1x2x8x8x128xf32>
    tpu.vector_store %arg7[%c1_85, %c1_86, %c0_87, %c0_88, %c0_89, %c0_90], %85 {strides = array<i32>} : memref<2x2x2x9x9x128xf32, #tpu.memory_space<vmem>>, vector<1x1x2x8x8x128xf32>,
    %cst_91 = arith.constant 5.120000e+02 : f32
    %86 = vector.broadcast %cst_91 : f32 to vector<1x128xf32>
    %87 = arith.divf %77, %86 : vector<1x128xf32>
    %cst_92 = arith.constant 5.120000e+02 : f32
    %88 = vector.broadcast %cst_92 : f32 to vector<1x128xf32>
    %89 = arith.divf %81, %88 : vector<1x128xf32>
    %90 = arith.mulf %87, %87 : vector<1x128xf32>
    %91 = arith.subf %89, %90 : vector<1x128xf32>
    %cst_93 = arith.constant 9.99999974E-6 : f32
    %92 = vector.broadcast %cst_93 : f32 to vector<1x128xf32>
    %93 = arith.addf %91, %92 : vector<1x128xf32>
    %94 = math.rsqrt %93 : vector<1x128xf32>
    %95 = arith.mulf %1, %94 : vector<1x128xf32>
    %96 = arith.mulf %87, %95 : vector<1x128xf32>
    %97 = arith.subf %2, %96 : vector<1x128xf32>
    %c0_94 = arith.constant 0 : index
    %c0_95 = arith.constant 0 : index
    %c0_96 = arith.constant 0 : index
    %c1_97 = arith.constant 1 : index
    %c1_98 = arith.constant 1 : index
    %c0_99 = arith.constant 0 : index
    %98 = vector.load %arg7[%c0_94, %c0_95, %c0_96, %c1_97, %c1_98, %c0_99] : memref<2x2x2x9x9x128xf32, #tpu.memory_space<vmem>>, vector<1x1x2x8x8x128xf32>
    %99 = vector.shape_cast %98 : vector<1x1x2x8x8x128xf32> to vector<2x8x8x128xf32>
    %100 = vector.shape_cast %95 : vector<1x128xf32> to vector<1x1x1x128xf32>
    %101 = vector.broadcast %100 : vector<1x1x1x128xf32> to vector<2x8x8x128xf32>
    %102 = arith.mulf %99, %101 : vector<2x8x8x128xf32>
    %103 = vector.shape_cast %97 : vector<1x128xf32> to vector<1x1x1x128xf32>
    %104 = vector.broadcast %103 : vector<1x1x1x128xf32> to vector<2x8x8x128xf32>
    %105 = arith.addf %102, %104 : vector<2x8x8x128xf32>
    %cst_100 = arith.constant 0.000000e+00 : f32
    %106 = vector.broadcast %cst_100 : f32 to vector<2x8x8x128xf32>
    %107 = arith.maximumf %105, %106 : vector<2x8x8x128xf32>
    %c0_101 = arith.constant 0 : index
    %c0_102 = arith.constant 0 : index
    %c0_103 = arith.constant 0 : index
    %c1_104 = arith.constant 1 : index
    %c1_105 = arith.constant 1 : index
    %c0_106 = arith.constant 0 : index
    %108 = vector.load %arg7[%c0_101, %c0_102, %c0_103, %c1_104, %c1_105, %c0_106] : memref<2x2x2x9x9x128xf32, #tpu.memory_space<vmem>>, vector<1x1x2x8x8x128xf32>
    %109 = vector.shape_cast %108 : vector<1x1x2x8x8x128xf32> to vector<2x8x8x128xf32>
    %110 = vector.shape_cast %107 : vector<2x8x8x128xf32> to vector<1x1x2x8x8x128xf32>
    tpu.vector_store %arg7[%c0_101, %c0_102, %c0_103, %c1_104, %c1_105, %c0_106], %110 {strides = array<i32>} : memref<2x2x2x9x9x128xf32, #tpu.memory_space<vmem>>, vector<1x1x2x8x8x128xf32>,
    %c0_107 = arith.constant 0 : index
    %c1_108 = arith.constant 1 : index
    %c0_109 = arith.constant 0 : index
    %c1_110 = arith.constant 1 : index
    %c0_111 = arith.constant 0 : index
    %c0_112 = arith.constant 0 : index
    %111 = vector.load %arg7[%c0_107, %c1_108, %c0_109, %c1_110, %c0_111, %c0_112] : memref<2x2x2x9x9x128xf32, #tpu.memory_space<vmem>>, vector<1x1x2x8x8x128xf32>
    %112 = vector.shape_cast %111 : vector<1x1x2x8x8x128xf32> to vector<2x8x8x128xf32>
    %113 = vector.shape_cast %95 : vector<1x128xf32> to vector<1x1x1x128xf32>
    %114 = vector.broadcast %113 : vector<1x1x1x128xf32> to vector<2x8x8x128xf32>
    %115 = arith.mulf %112, %114 : vector<2x8x8x128xf32>
    %116 = vector.shape_cast %97 : vector<1x128xf32> to vector<1x1x1x128xf32>
    %117 = vector.broadcast %116 : vector<1x1x1x128xf32> to vector<2x8x8x128xf32>
    %118 = arith.addf %115, %117 : vector<2x8x8x128xf32>
    %cst_113 = arith.constant 0.000000e+00 : f32
    %119 = vector.broadcast %cst_113 : f32 to vector<2x8x8x128xf32>
    %120 = arith.maximumf %118, %119 : vector<2x8x8x128xf32>
    %c0_114 = arith.constant 0 : index
    %c1_115 = arith.constant 1 : index
    %c0_116 = arith.constant 0 : index
    %c1_117 = arith.constant 1 : index
    %c0_118 = arith.constant 0 : index
    %c0_119 = arith.constant 0 : index
    %121 = vector.load %arg7[%c0_114, %c1_115, %c0_116, %c1_117, %c0_118, %c0_119] : memref<2x2x2x9x9x128xf32, #tpu.memory_space<vmem>>, vector<1x1x2x8x8x128xf32>
    %122 = vector.shape_cast %121 : vector<1x1x2x8x8x128xf32> to vector<2x8x8x128xf32>
    %123 = vector.shape_cast %120 : vector<2x8x8x128xf32> to vector<1x1x2x8x8x128xf32>
    tpu.vector_store %arg7[%c0_114, %c1_115, %c0_116, %c1_117, %c0_118, %c0_119], %123 {strides = array<i32>} : memref<2x2x2x9x9x128xf32, #tpu.memory_space<vmem>>, vector<1x1x2x8x8x128xf32>,
    %c1_120 = arith.constant 1 : index
    %c0_121 = arith.constant 0 : index
    %c0_122 = arith.constant 0 : index
    %c0_123 = arith.constant 0 : index
    %c1_124 = arith.constant 1 : index
    %c0_125 = arith.constant 0 : index
    %124 = vector.load %arg7[%c1_120, %c0_121, %c0_122, %c0_123, %c1_124, %c0_125] : memref<2x2x2x9x9x128xf32, #tpu.memory_space<vmem>>, vector<1x1x2x8x8x128xf32>
    %125 = vector.shape_cast %124 : vector<1x1x2x8x8x128xf32> to vector<2x8x8x128xf32>
    %126 = vector.shape_cast %95 : vector<1x128xf32> to vector<1x1x1x128xf32>
    %127 = vector.broadcast %126 : vector<1x1x1x128xf32> to vector<2x8x8x128xf32>
    %128 = arith.mulf %125, %127 : vector<2x8x8x128xf32>
    %129 = vector.shape_cast %97 : vector<1x128xf32> to vector<1x1x1x128xf32>
    %130 = vector.broadcast %129 : vector<1x1x1x128xf32> to vector<2x8x8x128xf32>
    %131 = arith.addf %128, %130 : vector<2x8x8x128xf32>
    %cst_126 = arith.constant 0.000000e+00 : f32
    %132 = vector.broadcast %cst_126 : f32 to vector<2x8x8x128xf32>
    %133 = arith.maximumf %131, %132 : vector<2x8x8x128xf32>
    %c1_127 = arith.constant 1 : index
    %c0_128 = arith.constant 0 : index
    %c0_129 = arith.constant 0 : index
    %c0_130 = arith.constant 0 : index
    %c1_131 = arith.constant 1 : index
    %c0_132 = arith.constant 0 : index
    %134 = vector.load %arg7[%c1_127, %c0_128, %c0_129, %c0_130, %c1_131, %c0_132] : memref<2x2x2x9x9x128xf32, #tpu.memory_space<vmem>>, vector<1x1x2x8x8x128xf32>
    %135 = vector.shape_cast %134 : vector<1x1x2x8x8x128xf32> to vector<2x8x8x128xf32>
    %136 = vector.shape_cast %133 : vector<2x8x8x128xf32> to vector<1x1x2x8x8x128xf32>
    tpu.vector_store %arg7[%c1_127, %c0_128, %c0_129, %c0_130, %c1_131, %c0_132], %136 {strides = array<i32>} : memref<2x2x2x9x9x128xf32, #tpu.memory_space<vmem>>, vector<1x1x2x8x8x128xf32>,
    %c1_133 = arith.constant 1 : index
    %c1_134 = arith.constant 1 : index
    %c0_135 = arith.constant 0 : index
    %c0_136 = arith.constant 0 : index
    %c0_137 = arith.constant 0 : index
    %c0_138 = arith.constant 0 : index
    %137 = vector.load %arg7[%c1_133, %c1_134, %c0_135, %c0_136, %c0_137, %c0_138] : memref<2x2x2x9x9x128xf32, #tpu.memory_space<vmem>>, vector<1x1x2x8x8x128xf32>
    %138 = vector.shape_cast %137 : vector<1x1x2x8x8x128xf32> to vector<2x8x8x128xf32>
    %139 = vector.shape_cast %95 : vector<1x128xf32> to vector<1x1x1x128xf32>
    %140 = vector.broadcast %139 : vector<1x1x1x128xf32> to vector<2x8x8x128xf32>
    %141 = arith.mulf %138, %140 : vector<2x8x8x128xf32>
    %142 = vector.shape_cast %97 : vector<1x128xf32> to vector<1x1x1x128xf32>
    %143 = vector.broadcast %142 : vector<1x1x1x128xf32> to vector<2x8x8x128xf32>
    %144 = arith.addf %141, %143 : vector<2x8x8x128xf32>
    %cst_139 = arith.constant 0.000000e+00 : f32
    %145 = vector.broadcast %cst_139 : f32 to vector<2x8x8x128xf32>
    %146 = arith.maximumf %144, %145 : vector<2x8x8x128xf32>
    %c1_140 = arith.constant 1 : index
    %c1_141 = arith.constant 1 : index
    %c0_142 = arith.constant 0 : index
    %c0_143 = arith.constant 0 : index
    %c0_144 = arith.constant 0 : index
    %c0_145 = arith.constant 0 : index
    %147 = vector.load %arg7[%c1_140, %c1_141, %c0_142, %c0_143, %c0_144, %c0_145] : memref<2x2x2x9x9x128xf32, #tpu.memory_space<vmem>>, vector<1x1x2x8x8x128xf32>
    %148 = vector.shape_cast %147 : vector<1x1x2x8x8x128xf32> to vector<2x8x8x128xf32>
    %149 = vector.shape_cast %146 : vector<2x8x8x128xf32> to vector<1x1x2x8x8x128xf32>
    tpu.vector_store %arg7[%c1_140, %c1_141, %c0_142, %c0_143, %c0_144, %c0_145], %149 {strides = array<i32>} : memref<2x2x2x9x9x128xf32, #tpu.memory_space<vmem>>, vector<1x1x2x8x8x128xf32>,
    %cst_146 = arith.constant 0.000000e+00 : f32
    %150 = vector.broadcast %cst_146 : f32 to vector<128x128xf32>
    %c0_147 = arith.constant 0 : index
    %c0_148 = arith.constant 0 : index
    %c0_149 = arith.constant 0 : index
    %c0_150 = arith.constant 0 : index
    %c0_151 = arith.constant 0 : index
    %c0_152 = arith.constant 0 : index
    %151 = vector.load %arg7[%c0_147, %c0_148, %c0_149, %c0_150, %c0_151, %c0_152] : memref<2x2x2x9x9x128xf32, #tpu.memory_space<vmem>>, vector<1x1x2x8x8x128xf32>
    %152 = vector.shape_cast %151 : vector<1x1x2x8x8x128xf32> to vector<2x8x8x128xf32>
    %153 = vector.shape_cast %152 : vector<2x8x8x128xf32> to vector<128x128xf32>
    %154 = arith.truncf %153 : vector<128x128xf32> to vector<128x128xbf16>
    %c0_153 = arith.constant 0 : index
    %c0_154 = arith.constant 0 : index
    %c0_155 = arith.constant 0 : index
    %155 = vector.load %arg3[%c0_153, %c0_154, %c0_155] : memref<9x128x128xbf16, #tpu.memory_space<vmem>>, vector<1x128x128xbf16>
    %156 = vector.shape_cast %155 : vector<1x128x128xbf16> to vector<128x128xbf16>
    %cst_156 = arith.constant dense<0.000000e+00> : vector<128x128xf32>
    %157 = tpu.matmul %154, %156, %cst_156 {dimension_numbers = #tpu.dot_dimension_numbers<[1], [0], [0], [1], [0, 0, 1, 1], [], []>} : vector<128x128xbf16>, vector<128x128xbf16>, vector<128x128xf32> -> vector<128x128xf32>
    %158 = arith.addf %150, %157 : vector<128x128xf32>
    %c0_157 = arith.constant 0 : index
    %c1_158 = arith.constant 1 : index
    %c0_159 = arith.constant 0 : index
    %c0_160 = arith.constant 0 : index
    %c0_161 = arith.constant 0 : index
    %c0_162 = arith.constant 0 : index
    %159 = vector.load %arg7[%c0_157, %c1_158, %c0_159, %c0_160, %c0_161, %c0_162] : memref<2x2x2x9x9x128xf32, #tpu.memory_space<vmem>>, vector<1x1x2x8x8x128xf32>
    %160 = vector.shape_cast %159 : vector<1x1x2x8x8x128xf32> to vector<2x8x8x128xf32>
    %161 = vector.shape_cast %160 : vector<2x8x8x128xf32> to vector<128x128xf32>
    %162 = arith.truncf %161 : vector<128x128xf32> to vector<128x128xbf16>
    %c1_163 = arith.constant 1 : index
    %c0_164 = arith.constant 0 : index
    %c0_165 = arith.constant 0 : index
    %163 = vector.load %arg3[%c1_163, %c0_164, %c0_165] : memref<9x128x128xbf16, #tpu.memory_space<vmem>>, vector<1x128x128xbf16>
    %164 = vector.shape_cast %163 : vector<1x128x128xbf16> to vector<128x128xbf16>
    %cst_166 = arith.constant dense<0.000000e+00> : vector<128x128xf32>
    %165 = tpu.matmul %162, %164, %cst_166 {dimension_numbers = #tpu.dot_dimension_numbers<[1], [0], [0], [1], [0, 0, 1, 1], [], []>} : vector<128x128xbf16>, vector<128x128xbf16>, vector<128x128xf32> -> vector<128x128xf32>
    %166 = arith.addf %158, %165 : vector<128x128xf32>
    %c0_167 = arith.constant 0 : index
    %c0_168 = arith.constant 0 : index
    %c0_169 = arith.constant 0 : index
    %c0_170 = arith.constant 0 : index
    %c1_171 = arith.constant 1 : index
    %c0_172 = arith.constant 0 : index
    %167 = vector.load %arg7[%c0_167, %c0_168, %c0_169, %c0_170, %c1_171, %c0_172] : memref<2x2x2x9x9x128xf32, #tpu.memory_space<vmem>>, vector<1x1x2x8x8x128xf32>
    %168 = vector.shape_cast %167 : vector<1x1x2x8x8x128xf32> to vector<2x8x8x128xf32>
    %169 = vector.shape_cast %168 : vector<2x8x8x128xf32> to vector<128x128xf32>
    %170 = arith.truncf %169 : vector<128x128xf32> to vector<128x128xbf16>
    %c2 = arith.constant 2 : index
    %c0_173 = arith.constant 0 : index
    %c0_174 = arith.constant 0 : index
    %171 = vector.load %arg3[%c2, %c0_173, %c0_174] : memref<9x128x128xbf16, #tpu.memory_space<vmem>>, vector<1x128x128xbf16>
    %172 = vector.shape_cast %171 : vector<1x128x128xbf16> to vector<128x128xbf16>
    %cst_175 = arith.constant dense<0.000000e+00> : vector<128x128xf32>
    %173 = tpu.matmul %170, %172, %cst_175 {dimension_numbers = #tpu.dot_dimension_numbers<[1], [0], [0], [1], [0, 0, 1, 1], [], []>} : vector<128x128xbf16>, vector<128x128xbf16>, vector<128x128xf32> -> vector<128x128xf32>
    %174 = arith.addf %166, %173 : vector<128x128xf32>
    %c1_176 = arith.constant 1 : index
    %c0_177 = arith.constant 0 : index
    %c0_178 = arith.constant 0 : index
    %c0_179 = arith.constant 0 : index
    %c0_180 = arith.constant 0 : index
    %c0_181 = arith.constant 0 : index
    %175 = vector.load %arg7[%c1_176, %c0_177, %c0_178, %c0_179, %c0_180, %c0_181] : memref<2x2x2x9x9x128xf32, #tpu.memory_space<vmem>>, vector<1x1x2x8x8x128xf32>
    %176 = vector.shape_cast %175 : vector<1x1x2x8x8x128xf32> to vector<2x8x8x128xf32>
    %177 = vector.shape_cast %176 : vector<2x8x8x128xf32> to vector<128x128xf32>
    %178 = arith.truncf %177 : vector<128x128xf32> to vector<128x128xbf16>
    %c3 = arith.constant 3 : index
    %c0_182 = arith.constant 0 : index
    %c0_183 = arith.constant 0 : index
    %179 = vector.load %arg3[%c3, %c0_182, %c0_183] : memref<9x128x128xbf16, #tpu.memory_space<vmem>>, vector<1x128x128xbf16>
    %180 = vector.shape_cast %179 : vector<1x128x128xbf16> to vector<128x128xbf16>
    %cst_184 = arith.constant dense<0.000000e+00> : vector<128x128xf32>
    %181 = tpu.matmul %178, %180, %cst_184 {dimension_numbers = #tpu.dot_dimension_numbers<[1], [0], [0], [1], [0, 0, 1, 1], [], []>} : vector<128x128xbf16>, vector<128x128xbf16>, vector<128x128xf32> -> vector<128x128xf32>
    %182 = arith.addf %174, %181 : vector<128x128xf32>
    %c1_185 = arith.constant 1 : index
    %c1_186 = arith.constant 1 : index
    %c0_187 = arith.constant 0 : index
    %c0_188 = arith.constant 0 : index
    %c0_189 = arith.constant 0 : index
    %c0_190 = arith.constant 0 : index
    %183 = vector.load %arg7[%c1_185, %c1_186, %c0_187, %c0_188, %c0_189, %c0_190] : memref<2x2x2x9x9x128xf32, #tpu.memory_space<vmem>>, vector<1x1x2x8x8x128xf32>
    %184 = vector.shape_cast %183 : vector<1x1x2x8x8x128xf32> to vector<2x8x8x128xf32>
    %185 = vector.shape_cast %184 : vector<2x8x8x128xf32> to vector<128x128xf32>
    %186 = arith.truncf %185 : vector<128x128xf32> to vector<128x128xbf16>
    %c4 = arith.constant 4 : index
    %c0_191 = arith.constant 0 : index
    %c0_192 = arith.constant 0 : index
    %187 = vector.load %arg3[%c4, %c0_191, %c0_192] : memref<9x128x128xbf16, #tpu.memory_space<vmem>>, vector<1x128x128xbf16>
    %188 = vector.shape_cast %187 : vector<1x128x128xbf16> to vector<128x128xbf16>
    %cst_193 = arith.constant dense<0.000000e+00> : vector<128x128xf32>
    %189 = tpu.matmul %186, %188, %cst_193 {dimension_numbers = #tpu.dot_dimension_numbers<[1], [0], [0], [1], [0, 0, 1, 1], [], []>} : vector<128x128xbf16>, vector<128x128xbf16>, vector<128x128xf32> -> vector<128x128xf32>
    %190 = arith.addf %182, %189 : vector<128x128xf32>
    %c1_194 = arith.constant 1 : index
    %c0_195 = arith.constant 0 : index
    %c0_196 = arith.constant 0 : index
    %c0_197 = arith.constant 0 : index
    %c1_198 = arith.constant 1 : index
    %c0_199 = arith.constant 0 : index
    %191 = vector.load %arg7[%c1_194, %c0_195, %c0_196, %c0_197, %c1_198, %c0_199] : memref<2x2x2x9x9x128xf32, #tpu.memory_space<vmem>>, vector<1x1x2x8x8x128xf32>
    %192 = vector.shape_cast %191 : vector<1x1x2x8x8x128xf32> to vector<2x8x8x128xf32>
    %193 = vector.shape_cast %192 : vector<2x8x8x128xf32> to vector<128x128xf32>
    %194 = arith.truncf %193 : vector<128x128xf32> to vector<128x128xbf16>
    %c5 = arith.constant 5 : index
    %c0_200 = arith.constant 0 : index
    %c0_201 = arith.constant 0 : index
    %195 = vector.load %arg3[%c5, %c0_200, %c0_201] : memref<9x128x128xbf16, #tpu.memory_space<vmem>>, vector<1x128x128xbf16>
    %196 = vector.shape_cast %195 : vector<1x128x128xbf16> to vector<128x128xbf16>
    %cst_202 = arith.constant dense<0.000000e+00> : vector<128x128xf32>
    %197 = tpu.matmul %194, %196, %cst_202 {dimension_numbers = #tpu.dot_dimension_numbers<[1], [0], [0], [1], [0, 0, 1, 1], [], []>} : vector<128x128xbf16>, vector<128x128xbf16>, vector<128x128xf32> -> vector<128x128xf32>
    %198 = arith.addf %190, %197 : vector<128x128xf32>
    %c0_203 = arith.constant 0 : index
    %c0_204 = arith.constant 0 : index
    %c0_205 = arith.constant 0 : index
    %c1_206 = arith.constant 1 : index
    %c0_207 = arith.constant 0 : index
    %c0_208 = arith.constant 0 : index
    %199 = vector.load %arg7[%c0_203, %c0_204, %c0_205, %c1_206, %c0_207, %c0_208] : memref<2x2x2x9x9x128xf32, #tpu.memory_space<vmem>>, vector<1x1x2x8x8x128xf32>
    %200 = vector.shape_cast %199 : vector<1x1x2x8x8x128xf32> to vector<2x8x8x128xf32>
    %201 = vector.shape_cast %200 : vector<2x8x8x128xf32> to vector<128x128xf32>
    %202 = arith.truncf %201 : vector<128x128xf32> to vector<128x128xbf16>
    %c6 = arith.constant 6 : index
    %c0_209 = arith.constant 0 : index
    %c0_210 = arith.constant 0 : index
    %203 = vector.load %arg3[%c6, %c0_209, %c0_210] : memref<9x128x128xbf16, #tpu.memory_space<vmem>>, vector<1x128x128xbf16>
    %204 = vector.shape_cast %203 : vector<1x128x128xbf16> to vector<128x128xbf16>
    %cst_211 = arith.constant dense<0.000000e+00> : vector<128x128xf32>
    %205 = tpu.matmul %202, %204, %cst_211 {dimension_numbers = #tpu.dot_dimension_numbers<[1], [0], [0], [1], [0, 0, 1, 1], [], []>} : vector<128x128xbf16>, vector<128x128xbf16>, vector<128x128xf32> -> vector<128x128xf32>
    %206 = arith.addf %198, %205 : vector<128x128xf32>
    %c0_212 = arith.constant 0 : index
    %c1_213 = arith.constant 1 : index
    %c0_214 = arith.constant 0 : index
    %c1_215 = arith.constant 1 : index
    %c0_216 = arith.constant 0 : index
    %c0_217 = arith.constant 0 : index
    %207 = vector.load %arg7[%c0_212, %c1_213, %c0_214, %c1_215, %c0_216, %c0_217] : memref<2x2x2x9x9x128xf32, #tpu.memory_space<vmem>>, vector<1x1x2x8x8x128xf32>
    %208 = vector.shape_cast %207 : vector<1x1x2x8x8x128xf32> to vector<2x8x8x128xf32>
    %209 = vector.shape_cast %208 : vector<2x8x8x128xf32> to vector<128x128xf32>
    %210 = arith.truncf %209 : vector<128x128xf32> to vector<128x128xbf16>
    %c7 = arith.constant 7 : index
    %c0_218 = arith.constant 0 : index
    %c0_219 = arith.constant 0 : index
    %211 = vector.load %arg3[%c7, %c0_218, %c0_219] : memref<9x128x128xbf16, #tpu.memory_space<vmem>>, vector<1x128x128xbf16>
    %212 = vector.shape_cast %211 : vector<1x128x128xbf16> to vector<128x128xbf16>
    %cst_220 = arith.constant dense<0.000000e+00> : vector<128x128xf32>
    %213 = tpu.matmul %210, %212, %cst_220 {dimension_numbers = #tpu.dot_dimension_numbers<[1], [0], [0], [1], [0, 0, 1, 1], [], []>} : vector<128x128xbf16>, vector<128x128xbf16>, vector<128x128xf32> -> vector<128x128xf32>
    %214 = arith.addf %206, %213 : vector<128x128xf32>
    %c0_221 = arith.constant 0 : index
    %c0_222 = arith.constant 0 : index
    %c0_223 = arith.constant 0 : index
    %c1_224 = arith.constant 1 : index
    %c1_225 = arith.constant 1 : index
    %c0_226 = arith.constant 0 : index
    %215 = vector.load %arg7[%c0_221, %c0_222, %c0_223, %c1_224, %c1_225, %c0_226] : memref<2x2x2x9x9x128xf32, #tpu.memory_space<vmem>>, vector<1x1x2x8x8x128xf32>
    %216 = vector.shape_cast %215 : vector<1x1x2x8x8x128xf32> to vector<2x8x8x128xf32>
    %217 = vector.shape_cast %216 : vector<2x8x8x128xf32> to vector<128x128xf32>
    %218 = arith.truncf %217 : vector<128x128xf32> to vector<128x128xbf16>
    %c8 = arith.constant 8 : index
    %c0_227 = arith.constant 0 : index
    %c0_228 = arith.constant 0 : index
    %219 = vector.load %arg3[%c8, %c0_227, %c0_228] : memref<9x128x128xbf16, #tpu.memory_space<vmem>>, vector<1x128x128xbf16>
    %220 = vector.shape_cast %219 : vector<1x128x128xbf16> to vector<128x128xbf16>
    %cst_229 = arith.constant dense<0.000000e+00> : vector<128x128xf32>
    %221 = tpu.matmul %218, %220, %cst_229 {dimension_numbers = #tpu.dot_dimension_numbers<[1], [0], [0], [1], [0, 0, 1, 1], [], []>} : vector<128x128xbf16>, vector<128x128xbf16>, vector<128x128xf32> -> vector<128x128xf32>
    %222 = arith.addf %214, %221 : vector<128x128xf32>
    %cst_230 = arith.constant dense<0.000000e+00> : vector<128xf32>
    %223 = vector.multi_reduction <add>, %222, %cst_230 [0] : vector<128x128xf32> to vector<128xf32>
    %224 = vector.shape_cast %223 : vector<128xf32> to vector<1x128xf32>
    %225 = arith.mulf %222, %222 : vector<128x128xf32>
    %cst_231 = arith.constant dense<0.000000e+00> : vector<128xf32>
    %226 = vector.multi_reduction <add>, %225, %cst_231 [0] : vector<128x128xf32> to vector<128xf32>
    %227 = vector.shape_cast %226 : vector<128xf32> to vector<1x128xf32>
    %cst_232 = arith.constant 1.280000e+02 : f32
    %228 = vector.broadcast %cst_232 : f32 to vector<1x128xf32>
    %229 = arith.divf %224, %228 : vector<1x128xf32>
    %cst_233 = arith.constant 1.280000e+02 : f32
    %230 = vector.broadcast %cst_233 : f32 to vector<1x128xf32>
    %231 = arith.divf %227, %230 : vector<1x128xf32>
    %232 = arith.mulf %229, %229 : vector<1x128xf32>
    %233 = arith.subf %231, %232 : vector<1x128xf32>
    %cst_234 = arith.constant 9.99999974E-6 : f32
    %234 = vector.broadcast %cst_234 : f32 to vector<1x128xf32>
    %235 = arith.addf %233, %234 : vector<1x128xf32>
    %236 = math.rsqrt %235 : vector<1x128xf32>
    %237 = arith.mulf %3, %236 : vector<1x128xf32>
    %238 = arith.mulf %229, %237 : vector<1x128xf32>
    %239 = arith.subf %4, %238 : vector<1x128xf32>
    %240 = vector.broadcast %237 : vector<1x128xf32> to vector<128x128xf32>
    %241 = arith.mulf %222, %240 : vector<128x128xf32>
    %242 = vector.broadcast %239 : vector<1x128xf32> to vector<128x128xf32>
    %243 = arith.addf %241, %242 : vector<128x128xf32>
    %cst_235 = arith.constant 0.000000e+00 : f32
    %244 = vector.broadcast %cst_235 : f32 to vector<128x128xf32>
    %245 = arith.maximumf %243, %244 : vector<128x128xf32>
    %246 = arith.truncf %245 : vector<128x128xf32> to vector<128x128xbf16>
    %c0_236 = arith.constant 0 : index
    %c0_237 = arith.constant 0 : index
    %247 = vector.load %arg4[%c0_236, %c0_237] : memref<128x128xbf16, #tpu.memory_space<vmem>>, vector<128x128xbf16>
    %cst_238 = arith.constant dense<0.000000e+00> : vector<128x128xf32>
    %248 = tpu.matmul %246, %247, %cst_238 {dimension_numbers = #tpu.dot_dimension_numbers<[1], [0], [0], [1], [0, 0, 1, 1], [], []>} : vector<128x128xbf16>, vector<128x128xbf16>, vector<128x128xf32> -> vector<128x128xf32>
    %cst_239 = arith.constant dense<0.000000e+00> : vector<128xf32>
    %249 = vector.multi_reduction <add>, %248, %cst_239 [0] : vector<128x128xf32> to vector<128xf32>
    %250 = vector.shape_cast %249 : vector<128xf32> to vector<1x128xf32>
    %251 = arith.mulf %248, %248 : vector<128x128xf32>
    %cst_240 = arith.constant dense<0.000000e+00> : vector<128xf32>
    %252 = vector.multi_reduction <add>, %251, %cst_240 [0] : vector<128x128xf32> to vector<128xf32>
    %253 = vector.shape_cast %252 : vector<128xf32> to vector<1x128xf32>
    %cst_241 = arith.constant 1.280000e+02 : f32
    %254 = vector.broadcast %cst_241 : f32 to vector<1x128xf32>
    %255 = arith.divf %250, %254 : vector<1x128xf32>
    %cst_242 = arith.constant 1.280000e+02 : f32
    %256 = vector.broadcast %cst_242 : f32 to vector<1x128xf32>
    %257 = arith.divf %253, %256 : vector<1x128xf32>
    %258 = arith.mulf %255, %255 : vector<1x128xf32>
    %259 = arith.subf %257, %258 : vector<1x128xf32>
    %cst_243 = arith.constant 9.99999974E-6 : f32
    %260 = vector.broadcast %cst_243 : f32 to vector<1x128xf32>
    %261 = arith.addf %259, %260 : vector<1x128xf32>
    %262 = math.rsqrt %261 : vector<1x128xf32>
    %263 = arith.mulf %5, %262 : vector<1x128xf32>
    %264 = arith.mulf %255, %263 : vector<1x128xf32>
    %265 = arith.subf %6, %264 : vector<1x128xf32>
    %266 = vector.broadcast %263 : vector<1x128xf32> to vector<128x128xf32>
    %267 = arith.mulf %248, %266 : vector<128x128xf32>
    %268 = vector.broadcast %265 : vector<1x128xf32> to vector<128x128xf32>
    %269 = arith.addf %267, %268 : vector<128x128xf32>
    %c0_244 = arith.constant 0 : index
    %c0_245 = arith.constant 0 : index
    %270 = vector.load %arg6[%c0_244, %c0_245] : memref<128x128xf32, #tpu.memory_space<vmem>>, vector<128x128xf32>
    tpu.vector_store %arg6[%c0_244, %c0_245], %269 {strides = array<i32>} : memref<128x128xf32, #tpu.memory_space<vmem>>, vector<128x128xf32>,
    return
  }
  func.func @transform_0(%arg0: i32) -> (i32, i32, i32, i32, i32, i32) {
    %c0_i32 = arith.constant 0 : i32
    %c0_i32_0 = arith.constant 0 : i32
    %c0_i32_1 = arith.constant 0 : i32
    %c0_i32_2 = arith.constant 0 : i32
    %c0_i32_3 = arith.constant 0 : i32
    %c0_i32_4 = arith.constant 0 : i32
    %c0_i32_5 = arith.constant 0 : i32
    return %c0_i32, %c0_i32_0, %c0_i32_1, %c0_i32_2, %c0_i32_3, %c0_i32_4 : i32, i32, i32, i32, i32, i32
  }
  func.func @transform_1(%arg0: i32) -> (i32, i32) {
    %c0_i32 = arith.constant 0 : i32
    %c0_i32_0 = arith.constant 0 : i32
    %c0_i32_1 = arith.constant 0 : i32
    return %c0_i32, %c0_i32_0 : i32, i32
  }
  func.func @transform_2(%arg0: i32) -> (i32, i32, i32) {
    %c0_i32 = arith.constant 0 : i32
    %c0_i32_0 = arith.constant 0 : i32
    %c0_i32_1 = arith.constant 0 : i32
    %c0_i32_2 = arith.constant 0 : i32
    return %c0_i32, %c0_i32_0, %c0_i32_1 : i32, i32, i32
  }
  func.func @transform_3(%arg0: i32) -> (i32, i32) {
    %c0_i32 = arith.constant 0 : i32
    %c0_i32_0 = arith.constant 0 : i32
    %c0_i32_1 = arith.constant 0 : i32
    return %c0_i32, %c0_i32_0 : i32, i32
  }
  func.func @transform_4(%arg0: i32) -> (i32, i32) {
    %c0_i32 = arith.constant 0 : i32
    %c0_i32_0 = arith.constant 0 : i32
    %c0_i32_1 = arith.constant 0 : i32
    return %c0_i32, %c0_i32_0 : i32, i32
  }
  func.func @transform_5(%arg0: i32) -> (i32, i32) {
    %c0_i32 = arith.constant 0 : i32
    %c0_i32_0 = arith.constant 0 : i32
    %c0_i32_1 = arith.constant 0 : i32
    return %c0_i32, %c0_i32_0 : i32, i32
  }
}

</mosaic_0001>

<llo_original>
// kernel: tpu_custom_call.1
$region0: #{tpu_custom_call.1}
  #allocation0 [shape = 'u32[]', space=smem, size = 0x4, offset = 0x4, fixed_abs, tag = 'smem constant byte address 0x4 - core index']
  #allocation1 [shape = 'u32[144,128]{1,0:T(1,128)}', space=vmem, size = 0x12000, scoped, tag = 'internal scratch']
  #allocation2 [shape = 'f32[2,2,2,9,9,128]{5,4,3,2,1,0:T(8,128)}', space=vmem, size = 0x90000, scoped, tag = 'scratch operand']
  %s0 = inlined_call_operand.vmem [shape: bf16[2,2,2,9,9,128], index: 0, kind: input, shape index: {}]
  %s1 = inlined_call_operand.vmem [shape: bf16[128,128], index: 1, kind: input, shape index: {}]
  %s2 = inlined_call_operand.vmem [shape: bf16[9,128,128], index: 2, kind: input, shape index: {}]
  %s3 = inlined_call_operand.vmem [shape: bf16[128,128], index: 3, kind: input, shape index: {}]
  %s4 = inlined_call_operand.vmem [shape: f32[8,128], index: 4, kind: input, shape index: {}]
  %s5 = inlined_call_operand.hbm [shape: f32[128,128], index: 5, kind: output, shape index: {}]
  %s6 = sld [smem:[#allocation0]]
  $region30: #{tpu_custom_call.1} parent=0
    _
  %s8 = ssub.s32 1, %s6
  %s9 = scalar_select 0, %s8, %s6
  $region1: #{tpu_custom_call.1} parent=0
    #allocation3 [shape = 'u8[65536]{0}', space=vmem, size = 0x10000, scoped, tag = 'output window, operand 0, single buffered']
    #allocation4 [shape = 's32[1]{0}', space=sflag, size = 0x4, scoped, tag = 'scoped memory for tpu_custom_call.1']
    %10 = vsyncpa [#allocation4], 0
    // Predicated region
    $region2: #{tpu_custom_call.1} parent=1 // pred_check
      _
    $region3: #{tpu_custom_call.1} parent=1 // pred_check_branch
      %12 = sbr.rel (0) target = $region5
    $region4: #{tpu_custom_call.1} parent=1 // pred_region
      _
    $region5: #{tpu_custom_call.1} parent=1 // pred_fallthru
      _
    // Predicated region
    $region6: #{tpu_custom_call.1} parent=1 // pred_check
      _
    $region7: #{tpu_custom_call.1} parent=1 // pred_check_branch
      %14 = sbr.rel (0) target = $region9
    $region8: #{tpu_custom_call.1} parent=1 // pred_region
      _
    $region9: #{tpu_custom_call.1} parent=1 // pred_fallthru
      _
    // Predicated region
    $region10: #{tpu_custom_call.1} parent=1 // pred_check
      _
    $region11: #{tpu_custom_call.1} parent=1 // pred_check_branch
      %16 = sbr.rel (0) target = $region13
    $region12: #{tpu_custom_call.1} parent=1 // pred_region
      _
    $region13: #{tpu_custom_call.1} parent=1 // pred_fallthru
      _
    // Predicated region
    $region14: #{tpu_custom_call.1} parent=1 // pred_check
      _
    $region15: #{tpu_custom_call.1} parent=1 // pred_check_branch
      %18 = sbr.rel (0) target = $region17
    $region16: #{tpu_custom_call.1} parent=1 // pred_region
      _
    $region17: #{tpu_custom_call.1} parent=1 // pred_fallthru
      _
    // Predicated region
    $region18: #{tpu_custom_call.1} parent=1 // pred_check
      _
    $region19: #{tpu_custom_call.1} parent=1 // pred_check_branch
      %20 = sbr.rel (0) target = $region21
    $region20: #{tpu_custom_call.1} parent=1 // pred_region
      _
    $region21: #{tpu_custom_call.1} parent=1 // pred_fallthru
      _
    %v22 = vld [vmem:[%s4] sm:$0xff]
    %v23 = vld [vmem:[%s1] sm:$0xf]
    %v24 = vld [vmem:[%s1 + $0x4] sm:$0xf]
    %v25 = vld [vmem:[%s1 + $0x8] sm:$0xf]
    %v26 = vld [vmem:[%s1 + $0xc] sm:$0xf]
    %v27 = vld [vmem:[%s1 + $0x10] sm:$0xf]
    %v28 = vld [vmem:[%s1 + $0x14] sm:$0xf]
    %v29 = vld [vmem:[%s1 + $0x18] sm:$0xf]
    %v30 = vld [vmem:[%s1 + $0x1c] sm:$0xf]
    %v31 = vld [vmem:[%s1 + $0x20] sm:$0xf]
    %v32 = vld [vmem:[%s1 + $0x24] sm:$0xf]
    %v33 = vld [vmem:[%s1 + $0x28] sm:$0xf]
    %v34 = vld [vmem:[%s1 + $0x2c] sm:$0xf]
    %v35 = vld [vmem:[%s1 + $0x30] sm:$0xf]
    %v36 = vld [vmem:[%s1 + $0x34] sm:$0xf]
    %v37 = vld [vmem:[%s1 + $0x38] sm:$0xf]
    %v38 = vld [vmem:[%s1 + $0x3c] sm:$0xf]
    %39 = vst [vmem:[#allocation2] sm:$0xff] 0.0
    %40 = vst [vmem:[#allocation2 + $0x8] sm:$0x1] 0.0
    %41 = vst [vmem:[#allocation2 + $0x10] sm:$0xff] 0.0
    %42 = vst [vmem:[#allocation2 + $0x18] sm:$0x1] 0.0
    %43 = vst [vmem:[#allocation2 + $0x20] sm:$0xff] 0.0
    %44 = vst [vmem:[#allocation2 + $0x28] sm:$0x1] 0.0
    %45 = vst [vmem:[#allocation2 + $0x30] sm:$0xff] 0.0
    %46 = vst [vmem:[#allocation2 + $0x38] sm:$0x1] 0.0
    %47 = vst [vmem:[#allocation2 + $0x40] sm:$0xff] 0.0
    %48 = vst [vmem:[#allocation2 + $0x48] sm:$0x1] 0.0
    %49 = vst [vmem:[#allocation2 + $0x50] sm:$0xff] 0.0
    %50 = vst [vmem:[#allocation2 + $0x58] sm:$0x1] 0.0
    %51 = vst [vmem:[#allocation2 + $0x60] sm:$0xff] 0.0
    %52 = vst [vmem:[#allocation2 + $0x68] sm:$0x1] 0.0
    %53 = vst [vmem:[#allocation2 + $0x70] sm:$0xff] 0.0
    %54 = vst [vmem:[#allocation2 + $0x78] sm:$0x1] 0.0
    %55 = vst [vmem:[#allocation2 + $0x80] sm:$0xff] 0.0
    %56 = vst [vmem:[#allocation2 + $0x88] sm:$0x1] 0.0
    %57 = vst [vmem:[#allocation2 + $0x90] sm:$0xff] 0.0
    %58 = vst [vmem:[#allocation2 + $0x98] sm:$0x1] 0.0
    %59 = vst [vmem:[#allocation2 + $0xa0] sm:$0xff] 0.0
    %60 = vst [vmem:[#allocation2 + $0xa8] sm:$0x1] 0.0
    %61 = vst [vmem:[#allocation2 + $0xb0] sm:$0xff] 0.0
    %62 = vst [vmem:[#allocation2 + $0xb8] sm:$0x1] 0.0
    %63 = vst [vmem:[#allocation2 + $0xc0] sm:$0xff] 0.0
    %64 = vst [vmem:[#allocation2 + $0xc8] sm:$0x1] 0.0
    %65 = vst [vmem:[#allocation2 + $0xd0] sm:$0xff] 0.0
    %66 = vst [vmem:[#allocation2 + $0xd8] sm:$0x1] 0.0
    %67 = vst [vmem:[#allocation2 + $0xe0] sm:$0xff] 0.0
    %68 = vst [vmem:[#allocation2 + $0xe8] sm:$0x1] 0.0
    %69 = vst [vmem:[#allocation2 + $0xf0] sm:$0xff] 0.0
    %70 = vst [vmem:[#allocation2 + $0xf8] sm:$0x1] 0.0
    %71 = vst [vmem:[#allocation2 + $0x100] sm:$0xff] 0.0
    %72 = vst [vmem:[#allocation2 + $0x108] sm:$0x1] 0.0
    %73 = vst [vmem:[#allocation2 + $0x110] sm:$0xff] 0.0
    %74 = vst [vmem:[#allocation2 + $0x118] sm:$0x1] 0.0
    %s75 = scalar_lea.vmem %s0, 8
    %v76 = vld [vmem:[%s75] sm:$0xf]
    %v77 = vld [vmem:[%s75 + $0x4] sm:$0x1]
    %v78 = vld [vmem:[%s75 + $0x8] sm:$0xf]
    %v79 = vld [vmem:[%s75 + $0xc] sm:$0x1]
    %v80 = vld [vmem:[%s75 + $0x10] sm:$0xf]
    %v81 = vld [vmem:[%s75 + $0x14] sm:$0x1]
    %v82 = vld [vmem:[%s75 + $0x18] sm:$0xf]
    %v83 = vld [vmem:[%s75 + $0x1c] sm:$0x1]
    %v84 = vld [vmem:[%s75 + $0x20] sm:$0xf]
    %v85 = vld [vmem:[%s75 + $0x24] sm:$0x1]
    %v86 = vld [vmem:[%s75 + $0x28] sm:$0xf]
    %v87 = vld [vmem:[%s75 + $0x2c] sm:$0x1]
    %v88 = vld [vmem:[%s75 + $0x30] sm:$0xf]
    %v89 = vld [vmem:[%s75 + $0x34] sm:$0x1]
    %v90 = vld [vmem:[%s75 + $0x38] sm:$0xf]
    %v91 = vld [vmem:[%s75 + $0x3c] sm:$0x1]
    %v92 = vld [vmem:[%s75 + $0x48] sm:$0xf]
    %v93 = vld [vmem:[%s75 + $0x4c] sm:$0x1]
    %v94 = vld [vmem:[%s75 + $0x50] sm:$0xf]
    %v95 = vld [vmem:[%s75 + $0x54] sm:$0x1]
    %v96 = vld [vmem:[%s75 + $0x58] sm:$0xf]
    %v97 = vld [vmem:[%s75 + $0x5c] sm:$0x1]
    %v98 = vld [vmem:[%s75 + $0x60] sm:$0xf]
    %v99 = vld [vmem:[%s75 + $0x64] sm:$0x1]
    %v100 = vld [vmem:[%s75 + $0x68] sm:$0xf]
    %v101 = vld [vmem:[%s75 + $0x6c] sm:$0x1]
    %v102 = vld [vmem:[%s75 + $0x70] sm:$0xf]
    %v103 = vld [vmem:[%s75 + $0x74] sm:$0x1]
    %v104 = vld [vmem:[%s75 + $0x78] sm:$0xf]
    %v105 = vld [vmem:[%s75 + $0x7c] sm:$0x1]
    %v106 = vld [vmem:[%s75 + $0x80] sm:$0xf]
    %v107 = vld [vmem:[%s75 + $0x84] sm:$0x1]
    %vm108 = vsmask.f32 3328
    %vm109 = vsmask.f32 7440
    %vm110 = vmor %vm108, %vm109
    %v112 = vshrl.u32 %v76, 16
    %v114 = vrot.slane %v112, 4
    %v115 = vshll.u32 %v76, 16
    %v117 = vrot.slane %v115, 5
    %v118 = vor.u32 %v114, %v117
    %v119 = vrot.slane %v118, 4
    %v121 = vshll.u32 %v77, 16
    %v123 = vrot.slane %v121, 5
    %v124 = vsel %vm110, %v119, %v123
    %v126 = vshrl.u32 %v78, 16
    %v128 = vrot.slane %v126, 4
    %v129 = vshll.u32 %v78, 16
    %v131 = vrot.slane %v129, 5
    %v132 = vor.u32 %v128, %v131
    %v133 = vrot.slane %v132, 4
    %v135 = vshll.u32 %v79, 16
    %v137 = vrot.slane %v135, 5
    %v138 = vsel %vm110, %v133, %v137
    %v140 = vshrl.u32 %v80, 16
    %v142 = vrot.slane %v140, 4
    %v143 = vshll.u32 %v80, 16
    %v145 = vrot.slane %v143, 5
    %v146 = vor.u32 %v142, %v145
    %v147 = vrot.slane %v146, 4
    %v149 = vshll.u32 %v81, 16
    %v151 = vrot.slane %v149, 5
    %v152 = vsel %vm110, %v147, %v151
    %v154 = vshrl.u32 %v82, 16
    %v156 = vrot.slane %v154, 4
    %v157 = vshll.u32 %v82, 16
    %v159 = vrot.slane %v157, 5
    %v160 = vor.u32 %v156, %v159
    %v161 = vrot.slane %v160, 4
    %v163 = vshll.u32 %v83, 16
    %v165 = vrot.slane %v163, 5
    %v166 = vsel %vm110, %v161, %v165
    %v168 = vshrl.u32 %v84, 16
    %v170 = vrot.slane %v168, 4
    %v171 = vshll.u32 %v84, 16
    %v173 = vrot.slane %v171, 5
    %v174 = vor.u32 %v170, %v173
    %v175 = vrot.slane %v174, 4
    %v177 = vshll.u32 %v85, 16
    %v179 = vrot.slane %v177, 5
    %v180 = vsel %vm110, %v175, %v179
    %v182 = vshrl.u32 %v86, 16
    %v184 = vrot.slane %v182, 4
    %v185 = vshll.u32 %v86, 16
    %v187 = vrot.slane %v185, 5
    %v188 = vor.u32 %v184, %v187
    %v189 = vrot.slane %v188, 4
    %v191 = vshll.u32 %v87, 16
    %v193 = vrot.slane %v191, 5
    %v194 = vsel %vm110, %v189, %v193
    %v196 = vshrl.u32 %v88, 16
    %v198 = vrot.slane %v196, 4
    %v199 = vshll.u32 %v88, 16
    %v201 = vrot.slane %v199, 5
    %v202 = vor.u32 %v198, %v201
    %v203 = vrot.slane %v202, 4
    %v205 = vshll.u32 %v89, 16
    %v207 = vrot.slane %v205, 5
    %v208 = vsel %vm110, %v203, %v207
    %v210 = vshrl.u32 %v90, 16
    %v212 = vrot.slane %v210, 4
    %v213 = vshll.u32 %v90, 16
    %v215 = vrot.slane %v213, 5
    %v216 = vor.u32 %v212, %v215
    %v217 = vrot.slane %v216, 4
    %v219 = vshll.u32 %v91, 16
    %v221 = vrot.slane %v219, 5
    %v222 = vsel %vm110, %v217, %v221
    %v224 = vshrl.u32 %v92, 16
    %v226 = vrot.slane %v224, 4
    %v227 = vshll.u32 %v92, 16
    %v229 = vrot.slane %v227, 5
    %v230 = vor.u32 %v226, %v229
    %v231 = vrot.slane %v230, 4
    %v233 = vshll.u32 %v93, 16
    %v235 = vrot.slane %v233, 5
    %v236 = vsel %vm110, %v231, %v235
    %v238 = vshrl.u32 %v94, 16
    %v240 = vrot.slane %v238, 4
    %v241 = vshll.u32 %v94, 16
    %v243 = vrot.slane %v241, 5
    %v244 = vor.u32 %v240, %v243
    %v245 = vrot.slane %v244, 4
    %v247 = vshll.u32 %v95, 16
    %v249 = vrot.slane %v247, 5
    %v250 = vsel %vm110, %v245, %v249
    %v252 = vshrl.u32 %v96, 16
    %v254 = vrot.slane %v252, 4
    %v255 = vshll.u32 %v96, 16
    %v257 = vrot.slane %v255, 5
    %v258 = vor.u32 %v254, %v257
    %v259 = vrot.slane %v258, 4
    %v261 = vshll.u32 %v97, 16
    %v263 = vrot.slane %v261, 5
    %v264 = vsel %vm110, %v259, %v263
    %v266 = vshrl.u32 %v98, 16
    %v268 = vrot.slane %v266, 4
    %v269 = vshll.u32 %v98, 16
    %v271 = vrot.slane %v269, 5
    %v272 = vor.u32 %v268, %v271
    %v273 = vrot.slane %v272, 4
    %v275 = vshll.u32 %v99, 16
    %v277 = vrot.slane %v275, 5
    %v278 = vsel %vm110, %v273, %v277
    %v280 = vshrl.u32 %v100, 16
    %v282 = vrot.slane %v280, 4
    %v283 = vshll.u32 %v100, 16
    %v285 = vrot.slane %v283, 5
    %v286 = vor.u32 %v282, %v285
    %v287 = vrot.slane %v286, 4
    %v289 = vshll.u32 %v101, 16
    %v291 = vrot.slane %v289, 5
    %v292 = vsel %vm110, %v287, %v291
    %v294 = vshrl.u32 %v102, 16
    %v296 = vrot.slane %v294, 4
    %v297 = vshll.u32 %v102, 16
    %v299 = vrot.slane %v297, 5
    %v300 = vor.u32 %v296, %v299
    %v301 = vrot.slane %v300, 4
    %v303 = vshll.u32 %v103, 16
    %v305 = vrot.slane %v303, 5
    %v306 = vsel %vm110, %v301, %v305
    %v308 = vshrl.u32 %v104, 16
    %v310 = vrot.slane %v308, 4
    %v311 = vshll.u32 %v104, 16
    %v313 = vrot.slane %v311, 5
    %v314 = vor.u32 %v310, %v313
    %v315 = vrot.slane %v314, 4
    %v317 = vshll.u32 %v105, 16
    %v319 = vrot.slane %v317, 5
    %v320 = vsel %vm110, %v315, %v319
    %v322 = vshrl.u32 %v106, 16
    %v324 = vrot.slane %v322, 4
    %v325 = vshll.u32 %v106, 16
    %v327 = vrot.slane %v325, 5
    %v328 = vor.u32 %v324, %v327
    %v329 = vrot.slane %v328, 4
    %v331 = vshll.u32 %v107, 16
    %v333 = vrot.slane %v331, 5
    %v334 = vsel %vm110, %v329, %v333
    %v335 = vunpack.c.l.b16 %v124
    %v336 = vunpack.c.l.b16 %v138
    %v337 = vunpack.c.l.b16 %v152
    %v338 = vunpack.c.l.b16 %v166
    %v339 = vunpack.c.l.b16 %v180
    %v340 = vunpack.c.l.b16 %v194
    %v341 = vunpack.c.l.b16 %v208
    %v342 = vunpack.c.l.b16 %v222
    %v343 = vunpack.c.l.b16 %v236
    %v344 = vunpack.c.l.b16 %v250
    %v345 = vunpack.c.l.b16 %v264
    %v346 = vunpack.c.l.b16 %v278
    %v347 = vunpack.c.l.b16 %v292
    %v348 = vunpack.c.l.b16 %v306
    %v349 = vunpack.c.l.b16 %v320
    %v350 = vunpack.c.l.b16 %v334
    %v351 = vpack.c.b16 %v336, %v335
    %v352 = vpack.c.b16 %v338, %v337
    %v353 = vpack.c.b16 %v340, %v339
    %v354 = vpack.c.b16 %v342, %v341
    %v355 = vpack.c.b16 %v344, %v343
    %v356 = vpack.c.b16 %v346, %v345
    %v357 = vpack.c.b16 %v348, %v347
    %v358 = vpack.c.b16 %v350, %v349
    %v383 = vunpack.c.l.b16 %v23
    %v384 = vunpack.c.l.b16 %v24
    %v385 = vunpack.c.l.b16 %v25
    %v386 = vunpack.c.l.b16 %v26
    %v387 = vunpack.c.l.b16 %v27
    %v388 = vunpack.c.l.b16 %v28
    %v389 = vunpack.c.l.b16 %v29
    %v390 = vunpack.c.l.b16 %v30
    %v391 = vunpack.c.l.b16 %v31
    %v392 = vunpack.c.l.b16 %v32
    %v393 = vunpack.c.l.b16 %v33
    %v394 = vunpack.c.l.b16 %v34
    %v395 = vunpack.c.l.b16 %v35
    %v396 = vunpack.c.l.b16 %v36
    %v397 = vunpack.c.l.b16 %v37
    %v398 = vunpack.c.l.b16 %v38
    %v399 = vpack.c.b16 %v384, %v383
    %v400 = vpack.c.b16 %v386, %v385
    %v401 = vpack.c.b16 %v388, %v387
    %v402 = vpack.c.b16 %v390, %v389
    %v403 = vpack.c.b16 %v392, %v391
    %v404 = vpack.c.b16 %v394, %v393
    %v405 = vpack.c.b16 %v396, %v395
    %v406 = vpack.c.b16 %v398, %v397
    %415 = vmatprep.subr.bf16.mxu0 0
    %416 = vmatpush1.bf16.msra.mxu0 %v406
    %417 = vmatprep.subr.bf16.mxu0 0
    %418 = vmatpush1.bf16.msra.mxu0 %v405
    %419 = vmatprep.subr.bf16.mxu0 0
    %420 = vmatpush1.bf16.msra.mxu0 %v404
    %421 = vmatprep.subr.bf16.mxu0 0
    %422 = vmatpush1.bf16.msra.mxu0 %v403
    %423 = vmatprep.subr.bf16.mxu0 0
    %424 = vmatpush1.bf16.msra.mxu0 %v402
    %425 = vmatprep.subr.bf16.mxu0 0
    %426 = vmatpush1.bf16.msra.mxu0 %v401
    %427 = vmatprep.subr.bf16.mxu0 0
    %428 = vmatpush1.bf16.msra.mxu0 %v400
    %429 = vmatprep.subr.bf16.mxu0 0
    %430 = vmatpush1.bf16.msra.mxu0 %v399
    %431 = vmatprep.subr.bf16.mxu0 0
    %432 = vmatpush2.bf16.msra.mxu0 0
    %433 = vmatprep.subr.bf16.mxu0 0
    %434 = vmatpush2.bf16.msra.mxu0 0
    %435 = vmatprep.subr.bf16.mxu0 0
    %436 = vmatpush2.bf16.msra.mxu0 0
    %437 = vmatprep.subr.bf16.mxu0 0
    %438 = vmatpush2.bf16.msra.mxu0 0
    %439 = vmatprep.subr.bf16.mxu0 0
    %440 = vmatpush2.bf16.msra.mxu0 0
    %441 = vmatprep.subr.bf16.mxu0 0
    %442 = vmatpush2.bf16.msra.mxu0 0
    %443 = vmatprep.subr.bf16.mxu0 0
    %444 = vmatpush2.bf16.msra.mxu0 0
    %445 = vmatprep.subr.bf16.mxu0 0
    %446 = vmatpush2.bf16.msra.mxu0 0
    %447 = vmatprep.mubr.bf16.mxu0 0
    %448 = vmatmul.mubr.bf16.gmra.mxu0 %v351
    %v449 = vpop.f32.mrf.mxu0
    %v450 = vadd.f32 0.0, %v449
    %v451 = vpop.f32.mrf.mxu0
    %v452 = vpop.f32.mrf.mxu0
    %v453 = vadd.f32 0.0, %v452
    %v454 = vpop.f32.mrf.mxu0
    %455 = vmatprep.mubr.bf16.mxu0 0
    %456 = vmatmul.mubr.bf16.gmra.mxu0 %v352
    %v457 = vpop.f32.mrf.mxu0
    %v458 = vadd.f32 0.0, %v457
    %v459 = vpop.f32.mrf.mxu0
    %v460 = vpop.f32.mrf.mxu0
    %v461 = vadd.f32 0.0, %v460
    %v462 = vpop.f32.mrf.mxu0
    %463 = vmatprep.mubr.bf16.mxu0 0
    %464 = vmatmul.mubr.bf16.gmra.mxu0 %v353
    %v465 = vpop.f32.mrf.mxu0
    %v466 = vadd.f32 0.0, %v465
    %v467 = vpop.f32.mrf.mxu0
    %v468 = vpop.f32.mrf.mxu0
    %v469 = vadd.f32 0.0, %v468
    %v470 = vpop.f32.mrf.mxu0
    %471 = vmatprep.mubr.bf16.mxu0 0
    %472 = vmatmul.mubr.bf16.gmra.mxu0 %v354
    %v473 = vpop.f32.mrf.mxu0
    %v474 = vadd.f32 0.0, %v473
    %v475 = vpop.f32.mrf.mxu0
    %v476 = vpop.f32.mrf.mxu0
    %v477 = vadd.f32 0.0, %v476
    %v478 = vpop.f32.mrf.mxu0
    %479 = vmatprep.mubr.bf16.mxu0 0
    %480 = vmatmul.mubr.bf16.gmra.mxu0 %v355
    %v481 = vpop.f32.mrf.mxu0
    %v482 = vadd.f32 0.0, %v481
    %v483 = vpop.f32.mrf.mxu0
    %v484 = vpop.f32.mrf.mxu0
    %v485 = vadd.f32 0.0, %v484
    %v486 = vpop.f32.mrf.mxu0
    %487 = vmatprep.mubr.bf16.mxu0 0
    %488 = vmatmul.mubr.bf16.gmra.mxu0 %v356
    %v489 = vpop.f32.mrf.mxu0
    %v490 = vadd.f32 0.0, %v489
    %v491 = vpop.f32.mrf.mxu0
    %v492 = vpop.f32.mrf.mxu0
    %v493 = vadd.f32 0.0, %v492
    %v494 = vpop.f32.mrf.mxu0
    %495 = vmatprep.mubr.bf16.mxu0 0
    %496 = vmatmul.mubr.bf16.gmra.mxu0 %v357
    %v497 = vpop.f32.mrf.mxu0
    %v498 = vadd.f32 0.0, %v497
    %v499 = vpop.f32.mrf.mxu0
    %v500 = vpop.f32.mrf.mxu0
    %v501 = vadd.f32 0.0, %v500
    %v502 = vpop.f32.mrf.mxu0
    %503 = vmatprep.mubr.bf16.mxu0 0
    %504 = vmatmul.mubr.bf16.gmra.mxu0 %v358
    %v505 = vpop.f32.mrf.mxu0
    %v506 = vadd.f32 0.0, %v505
    %v507 = vpop.f32.mrf.mxu0
    %v508 = vpop.f32.mrf.mxu0
    %v509 = vadd.f32 0.0, %v508
    %v510 = vpop.f32.mrf.mxu0
    %511 = vdwg.mxu0
    %v512 = vadd.f32 %v450, %v453
    %v513 = vadd.f32 %v512, %v458
    %v514 = vadd.f32 %v513, %v461
    %v515 = vadd.f32 %v514, %v466
    %v516 = vadd.f32 %v515, %v469
    %v517 = vadd.f32 %v516, %v474
    %v518 = vadd.f32 %v517, %v477
    %v519 = vadd.f32 %v518, %v482
    %v520 = vadd.f32 %v519, %v485
    %v521 = vadd.f32 %v520, %v490
    %v522 = vadd.f32 %v521, %v493
    %v523 = vadd.f32 %v522, %v498
    %v524 = vadd.f32 %v523, %v501
    %v525 = vadd.f32 %v524, %v506
    %v526 = vadd.f32 %v525, %v509
    %v527 = vrot.slane %v526, 4
    %v528 = vadd.f32 %v526, %v527
    %v529 = vrot.slane %v528, 2
    %v530 = vadd.f32 %v528, %v529
    %v531 = vrot.slane %v530, 1
    %v532 = vadd.f32 %v530, %v531
    %v533 = vadd.f32 %v532, 0.0
    %v534 = vmul.f32 %v450, %v450
    %v535 = vmul.f32 %v453, %v453
    %v536 = vmul.f32 %v458, %v458
    %v537 = vmul.f32 %v461, %v461
    %v538 = vmul.f32 %v466, %v466
    %v539 = vmul.f32 %v469, %v469
    %v540 = vmul.f32 %v474, %v474
    %v541 = vmul.f32 %v477, %v477
    %v542 = vmul.f32 %v482, %v482
    %v543 = vmul.f32 %v485, %v485
    %v544 = vmul.f32 %v490, %v490
    %v545 = vmul.f32 %v493, %v493
    %v546 = vmul.f32 %v498, %v498
    %v547 = vmul.f32 %v501, %v501
    %v548 = vmul.f32 %v506, %v506
    %v549 = vmul.f32 %v509, %v509
    %v550 = vadd.f32 %v534, %v535
    %v551 = vadd.f32 %v550, %v536
    %v552 = vadd.f32 %v551, %v537
    %v553 = vadd.f32 %v552, %v538
    %v554 = vadd.f32 %v553, %v539
    %v555 = vadd.f32 %v554, %v540
    %v556 = vadd.f32 %v555, %v541
    %v557 = vadd.f32 %v556, %v542
    %v558 = vadd.f32 %v557, %v543
    %v559 = vadd.f32 %v558, %v544
    %v560 = vadd.f32 %v559, %v545
    %v561 = vadd.f32 %v560, %v546
    %v562 = vadd.f32 %v561, %v547
    %v563 = vadd.f32 %v562, %v548
    %v564 = vadd.f32 %v563, %v549
    %v565 = vrot.slane %v564, 4
    %v566 = vadd.f32 %v564, %v565
    %v567 = vrot.slane %v566, 2
    %v568 = vadd.f32 %v566, %v567
    %v569 = vrot.slane %v568, 1
    %v570 = vadd.f32 %v568, %v569
    %v571 = vadd.f32 %v570, 0.0
    %s572 = scalar_lea.vmem [#allocation2], 16
    %573 = vst [vmem:[%s572 + $0x1] sm:$0xff] %v450
    %574 = vst [vmem:[%s572 + $0x11] sm:$0xff] %v453
    %575 = vst [vmem:[%s572 + $0x21] sm:$0xff] %v458
    %576 = vst [vmem:[%s572 + $0x31] sm:$0xff] %v461
    %577 = vst [vmem:[%s572 + $0x41] sm:$0xff] %v466
    %578 = vst [vmem:[%s572 + $0x51] sm:$0xff] %v469
    %579 = vst [vmem:[%s572 + $0x61] sm:$0xff] %v474
    %580 = vst [vmem:[%s572 + $0x71] sm:$0xff] %v477
    %581 = vst [vmem:[%s572 + $0x91] sm:$0xff] %v482
    %582 = vst [vmem:[%s572 + $0xa1] sm:$0xff] %v485
    %583 = vst [vmem:[%s572 + $0xb1] sm:$0xff] %v490
    %584 = vst [vmem:[%s572 + $0xc1] sm:$0xff] %v493
    %585 = vst [vmem:[%s572 + $0xd1] sm:$0xff] %v498
    %586 = vst [vmem:[%s572 + $0xe1] sm:$0xff] %v501
    %587 = vst [vmem:[%s572 + $0xf1] sm:$0xff] %v506
    %588 = vst [vmem:[%s572 + $0x101] sm:$0xff] %v509
    %s589 = scalar_lea.vmem [#allocation2], 288
    %590 = vst [vmem:[%s589] sm:$0xff] 0.0
    %591 = vst [vmem:[%s589 + $0x8] sm:$0x1] 0.0
    %592 = vst [vmem:[%s589 + $0x10] sm:$0xff] 0.0
    %593 = vst [vmem:[%s589 + $0x18] sm:$0x1] 0.0
    %594 = vst [vmem:[%s589 + $0x20] sm:$0xff] 0.0
    %595 = vst [vmem:[%s589 + $0x28] sm:$0x1] 0.0
    %596 = vst [vmem:[%s589 + $0x30] sm:$0xff] 0.0
    %597 = vst [vmem:[%s589 + $0x38] sm:$0x1] 0.0
    %598 = vst [vmem:[%s589 + $0x40] sm:$0xff] 0.0
    %599 = vst [vmem:[%s589 + $0x48] sm:$0x1] 0.0
    %600 = vst [vmem:[%s589 + $0x50] sm:$0xff] 0.0
    %601 = vst [vmem:[%s589 + $0x58] sm:$0x1] 0.0
    %602 = vst [vmem:[%s589 + $0x60] sm:$0xff] 0.0
    %603 = vst [vmem:[%s589 + $0x68] sm:$0x1] 0.0
    %604 = vst [vmem:[%s589 + $0x70] sm:$0xff] 0.0
    %605 = vst [vmem:[%s589 + $0x78] sm:$0x1] 0.0
    %606 = vst [vmem:[%s589 + $0x80] sm:$0xff] 0.0
    %607 = vst [vmem:[%s589 + $0x88] sm:$0x1] 0.0
    %608 = vst [vmem:[%s589 + $0x90] sm:$0xff] 0.0
    %609 = vst [vmem:[%s589 + $0x98] sm:$0x1] 0.0
    %610 = vst [vmem:[%s589 + $0xa0] sm:$0xff] 0.0
    %611 = vst [vmem:[%s589 + $0xa8] sm:$0x1] 0.0
    %612 = vst [vmem:[%s589 + $0xb0] sm:$0xff] 0.0
    %613 = vst [vmem:[%s589 + $0xb8] sm:$0x1] 0.0
    %614 = vst [vmem:[%s589 + $0xc0] sm:$0xff] 0.0
    %615 = vst [vmem:[%s589 + $0xc8] sm:$0x1] 0.0
    %616 = vst [vmem:[%s589 + $0xd0] sm:$0xff] 0.0
    %617 = vst [vmem:[%s589 + $0xd8] sm:$0x1] 0.0
    %618 = vst [vmem:[%s589 + $0xe0] sm:$0xff] 0.0
    %619 = vst [vmem:[%s589 + $0xe8] sm:$0x1] 0.0
    %620 = vst [vmem:[%s589 + $0xf0] sm:$0xff] 0.0
    %621 = vst [vmem:[%s589 + $0xf8] sm:$0x1] 0.0
    %622 = vst [vmem:[%s589 + $0x100] sm:$0xff] 0.0
    %623 = vst [vmem:[%s589 + $0x108] sm:$0x1] 0.0
    %624 = vst [vmem:[%s589 + $0x110] sm:$0xff] 0.0
    %625 = vst [vmem:[%s589 + $0x118] sm:$0x1] 0.0
    %s626 = scalar_lea.vmem %s0, 152
    %v627 = vld [vmem:[%s626] sm:$0xf]
    %v628 = vld [vmem:[%s626 + $0x8] sm:$0xf]
    %v629 = vld [vmem:[%s626 + $0x10] sm:$0xf]
    %v630 = vld [vmem:[%s626 + $0x18] sm:$0xf]
    %v631 = vld [vmem:[%s626 + $0x20] sm:$0xf]
    %v632 = vld [vmem:[%s626 + $0x28] sm:$0xf]
    %v633 = vld [vmem:[%s626 + $0x30] sm:$0xf]
    %v634 = vld [vmem:[%s626 + $0x38] sm:$0xf]
    %v635 = vld [vmem:[%s626 + $0x48] sm:$0xf]
    %v636 = vld [vmem:[%s626 + $0x50] sm:$0xf]
    %v637 = vld [vmem:[%s626 + $0x58] sm:$0xf]
    %v638 = vld [vmem:[%s626 + $0x60] sm:$0xf]
    %v639 = vld [vmem:[%s626 + $0x68] sm:$0xf]
    %v640 = vld [vmem:[%s626 + $0x70] sm:$0xf]
    %v641 = vld [vmem:[%s626 + $0x78] sm:$0xf]
    %v642 = vld [vmem:[%s626 + $0x80] sm:$0xf]
    %v659 = vunpack.c.l.b16 %v627
    %v660 = vunpack.c.l.b16 %v628
    %v661 = vunpack.c.l.b16 %v629
    %v662 = vunpack.c.l.b16 %v630
    %v663 = vunpack.c.l.b16 %v631
    %v664 = vunpack.c.l.b16 %v632
    %v665 = vunpack.c.l.b16 %v633
    %v666 = vunpack.c.l.b16 %v634
    %v667 = vunpack.c.l.b16 %v635
    %v668 = vunpack.c.l.b16 %v636
    %v669 = vunpack.c.l.b16 %v637
    %v670 = vunpack.c.l.b16 %v638
    %v671 = vunpack.c.l.b16 %v639
    %v672 = vunpack.c.l.b16 %v640
    %v673 = vunpack.c.l.b16 %v641
    %v674 = vunpack.c.l.b16 %v642
    %v675 = vpack.c.b16 %v660, %v659
    %v676 = vpack.c.b16 %v662, %v661
    %v677 = vpack.c.b16 %v664, %v663
    %v678 = vpack.c.b16 %v666, %v665
    %v679 = vpack.c.b16 %v668, %v667
    %v680 = vpack.c.b16 %v670, %v669
    %v681 = vpack.c.b16 %v672, %v671
    %v682 = vpack.c.b16 %v674, %v673
    %691 = vmatprep.subr.bf16.mxu0 0
    %692 = vmatpush1.bf16.msra.mxu0 %v406
    %693 = vmatprep.subr.bf16.mxu0 0
    %694 = vmatpush1.bf16.msra.mxu0 %v405
    %695 = vmatprep.subr.bf16.mxu0 0
    %696 = vmatpush1.bf16.msra.mxu0 %v404
    %697 = vmatprep.subr.bf16.mxu0 0
    %698 = vmatpush1.bf16.msra.mxu0 %v403
    %699 = vmatprep.subr.bf16.mxu0 0
    %700 = vmatpush1.bf16.msra.mxu0 %v402
    %701 = vmatprep.subr.bf16.mxu0 0
    %702 = vmatpush1.bf16.msra.mxu0 %v401
    %703 = vmatprep.subr.bf16.mxu0 0
    %704 = vmatpush1.bf16.msra.mxu0 %v400
    %705 = vmatprep.subr.bf16.mxu0 0
    %706 = vmatpush1.bf16.msra.mxu0 %v399
    %707 = vmatprep.subr.bf16.mxu0 0
    %708 = vmatpush2.bf16.msra.mxu0 0
    %709 = vmatprep.subr.bf16.mxu0 0
    %710 = vmatpush2.bf16.msra.mxu0 0
    %711 = vmatprep.subr.bf16.mxu0 0
    %712 = vmatpush2.bf16.msra.mxu0 0
    %713 = vmatprep.subr.bf16.mxu0 0
    %714 = vmatpush2.bf16.msra.mxu0 0
    %715 = vmatprep.subr.bf16.mxu0 0
    %716 = vmatpush2.bf16.msra.mxu0 0
    %717 = vmatprep.subr.bf16.mxu0 0
    %718 = vmatpush2.bf16.msra.mxu0 0
    %719 = vmatprep.subr.bf16.mxu0 0
    %720 = vmatpush2.bf16.msra.mxu0 0
    %721 = vmatprep.subr.bf16.mxu0 0
    %722 = vmatpush2.bf16.msra.mxu0 0
    %723 = vmatprep.mubr.bf16.mxu0 0
    %724 = vmatmul.mubr.bf16.gmra.mxu0 %v675
    %v725 = vpop.f32.mrf.mxu0
    %v726 = vadd.f32 0.0, %v725
    %v727 = vpop.f32.mrf.mxu0
    %v728 = vpop.f32.mrf.mxu0
    %v729 = vadd.f32 0.0, %v728
    %v730 = vpop.f32.mrf.mxu0
    %731 = vmatprep.mubr.bf16.mxu0 0
    %732 = vmatmul.mubr.bf16.gmra.mxu0 %v676
    %v733 = vpop.f32.mrf.mxu0
    %v734 = vadd.f32 0.0, %v733
    %v735 = vpop.f32.mrf.mxu0
    %v736 = vpop.f32.mrf.mxu0
    %v737 = vadd.f32 0.0, %v736
    %v738 = vpop.f32.mrf.mxu0
    %739 = vmatprep.mubr.bf16.mxu0 0
    %740 = vmatmul.mubr.bf16.gmra.mxu0 %v677
    %v741 = vpop.f32.mrf.mxu0
    %v742 = vadd.f32 0.0, %v741
    %v743 = vpop.f32.mrf.mxu0
    %v744 = vpop.f32.mrf.mxu0
    %v745 = vadd.f32 0.0, %v744
    %v746 = vpop.f32.mrf.mxu0
    %747 = vmatprep.mubr.bf16.mxu0 0
    %748 = vmatmul.mubr.bf16.gmra.mxu0 %v678
    %v749 = vpop.f32.mrf.mxu0
    %v750 = vadd.f32 0.0, %v749
    %v751 = vpop.f32.mrf.mxu0
    %v752 = vpop.f32.mrf.mxu0
    %v753 = vadd.f32 0.0, %v752
    %v754 = vpop.f32.mrf.mxu0
    %755 = vmatprep.mubr.bf16.mxu0 0
    %756 = vmatmul.mubr.bf16.gmra.mxu0 %v679
    %v757 = vpop.f32.mrf.mxu0
    %v758 = vadd.f32 0.0, %v757
    %v759 = vpop.f32.mrf.mxu0
    %v760 = vpop.f32.mrf.mxu0
    %v761 = vadd.f32 0.0, %v760
    %v762 = vpop.f32.mrf.mxu0
    %763 = vmatprep.mubr.bf16.mxu0 0
    %764 = vmatmul.mubr.bf16.gmra.mxu0 %v680
    %v765 = vpop.f32.mrf.mxu0
    %v766 = vadd.f32 0.0, %v765
    %v767 = vpop.f32.mrf.mxu0
    %v768 = vpop.f32.mrf.mxu0
    %v769 = vadd.f32 0.0, %v768
    %v770 = vpop.f32.mrf.mxu0
    %771 = vmatprep.mubr.bf16.mxu0 0
    %772 = vmatmul.mubr.bf16.gmra.mxu0 %v681
    %v773 = vpop.f32.mrf.mxu0
    %v774 = vadd.f32 0.0, %v773
    %v775 = vpop.f32.mrf.mxu0
    %v776 = vpop.f32.mrf.mxu0
    %v777 = vadd.f32 0.0, %v776
    %v778 = vpop.f32.mrf.mxu0
    %779 = vmatprep.mubr.bf16.mxu0 0
    %780 = vmatmul.mubr.bf16.gmra.mxu0 %v682
    %v781 = vpop.f32.mrf.mxu0
    %v782 = vadd.f32 0.0, %v781
    %v783 = vpop.f32.mrf.mxu0
    %v784 = vpop.f32.mrf.mxu0
    %v785 = vadd.f32 0.0, %v784
    %v786 = vpop.f32.mrf.mxu0
    %787 = vdwg.mxu0
    %v788 = vadd.f32 %v726, %v729
    %v789 = vadd.f32 %v788, %v734
    %v790 = vadd.f32 %v789, %v737
    %v791 = vadd.f32 %v790, %v742
    %v792 = vadd.f32 %v791, %v745
    %v793 = vadd.f32 %v792, %v750
    %v794 = vadd.f32 %v793, %v753
    %v795 = vadd.f32 %v794, %v758
    %v796 = vadd.f32 %v795, %v761
    %v797 = vadd.f32 %v796, %v766
    %v798 = vadd.f32 %v797, %v769
    %v799 = vadd.f32 %v798, %v774
    %v800 = vadd.f32 %v799, %v777
    %v801 = vadd.f32 %v800, %v782
    %v802 = vadd.f32 %v801, %v785
    %v803 = vrot.slane %v802, 4
    %v804 = vadd.f32 %v802, %v803
    %v805 = vrot.slane %v804, 2
    %v806 = vadd.f32 %v804, %v805
    %v807 = vrot.slane %v806, 1
    %v808 = vadd.f32 %v806, %v807
    %v809 = vadd.f32 %v533, %v808
    %v810 = vmul.f32 %v726, %v726
    %v811 = vmul.f32 %v729, %v729
    %v812 = vmul.f32 %v734, %v734
    %v813 = vmul.f32 %v737, %v737
    %v814 = vmul.f32 %v742, %v742
    %v815 = vmul.f32 %v745, %v745
    %v816 = vmul.f32 %v750, %v750
    %v817 = vmul.f32 %v753, %v753
    %v818 = vmul.f32 %v758, %v758
    %v819 = vmul.f32 %v761, %v761
    %v820 = vmul.f32 %v766, %v766
    %v821 = vmul.f32 %v769, %v769
    %v822 = vmul.f32 %v774, %v774
    %v823 = vmul.f32 %v777, %v777
    %v824 = vmul.f32 %v782, %v782
    %v825 = vmul.f32 %v785, %v785
    %v826 = vadd.f32 %v810, %v811
    %v827 = vadd.f32 %v826, %v812
    %v828 = vadd.f32 %v827, %v813
    %v829 = vadd.f32 %v828, %v814
    %v830 = vadd.f32 %v829, %v815
    %v831 = vadd.f32 %v830, %v816
    %v832 = vadd.f32 %v831, %v817
    %v833 = vadd.f32 %v832, %v818
    %v834 = vadd.f32 %v833, %v819
    %v835 = vadd.f32 %v834, %v820
    %v836 = vadd.f32 %v835, %v821
    %v837 = vadd.f32 %v836, %v822
    %v838 = vadd.f32 %v837, %v823
    %v839 = vadd.f32 %v838, %v824
    %v840 = vadd.f32 %v839, %v825
    %v841 = vrot.slane %v840, 4
    %v842 = vadd.f32 %v840, %v841
    %v843 = vrot.slane %v842, 2
    %v844 = vadd.f32 %v842, %v843
    %v845 = vrot.slane %v844, 1
    %v846 = vadd.f32 %v844, %v845
    %v847 = vadd.f32 %v571, %v846
    %s848 = scalar_lea.vmem [#allocation2], 304
    %849 = vst [vmem:[%s848] sm:$0xff] %v726
    %850 = vst [vmem:[%s848 + $0x10] sm:$0xff] %v729
    %851 = vst [vmem:[%s848 + $0x20] sm:$0xff] %v734
    %852 = vst [vmem:[%s848 + $0x30] sm:$0xff] %v737
    %853 = vst [vmem:[%s848 + $0x40] sm:$0xff] %v742
    %854 = vst [vmem:[%s848 + $0x50] sm:$0xff] %v745
    %855 = vst [vmem:[%s848 + $0x60] sm:$0xff] %v750
    %856 = vst [vmem:[%s848 + $0x70] sm:$0xff] %v753
    %857 = vst [vmem:[%s848 + $0x90] sm:$0xff] %v758
    %858 = vst [vmem:[%s848 + $0xa0] sm:$0xff] %v761
    %859 = vst [vmem:[%s848 + $0xb0] sm:$0xff] %v766
    %860 = vst [vmem:[%s848 + $0xc0] sm:$0xff] %v769
    %861 = vst [vmem:[%s848 + $0xd0] sm:$0xff] %v774
    %862 = vst [vmem:[%s848 + $0xe0] sm:$0xff] %v777
    %863 = vst [vmem:[%s848 + $0xf0] sm:$0xff] %v782
    %864 = vst [vmem:[%s848 + $0x100] sm:$0xff] %v785
    %s865 = scalar_lea.vmem [#allocation2], 576
    %866 = vst [vmem:[%s865] sm:$0xff] 0.0
    %867 = vst [vmem:[%s865 + $0x8] sm:$0x1] 0.0
    %868 = vst [vmem:[%s865 + $0x10] sm:$0xff] 0.0
    %869 = vst [vmem:[%s865 + $0x18] sm:$0x1] 0.0
    %870 = vst [vmem:[%s865 + $0x20] sm:$0xff] 0.0
    %871 = vst [vmem:[%s865 + $0x28] sm:$0x1] 0.0
    %872 = vst [vmem:[%s865 + $0x30] sm:$0xff] 0.0
    %873 = vst [vmem:[%s865 + $0x38] sm:$0x1] 0.0
    %874 = vst [vmem:[%s865 + $0x40] sm:$0xff] 0.0
    %875 = vst [vmem:[%s865 + $0x48] sm:$0x1] 0.0
    %876 = vst [vmem:[%s865 + $0x50] sm:$0xff] 0.0
    %877 = vst [vmem:[%s865 + $0x58] sm:$0x1] 0.0
    %878 = vst [vmem:[%s865 + $0x60] sm:$0xff] 0.0
    %879 = vst [vmem:[%s865 + $0x68] sm:$0x1] 0.0
    %880 = vst [vmem:[%s865 + $0x70] sm:$0xff] 0.0
    %881 = vst [vmem:[%s865 + $0x78] sm:$0x1] 0.0
    %882 = vst [vmem:[%s865 + $0x80] sm:$0xff] 0.0
    %883 = vst [vmem:[%s865 + $0x88] sm:$0x1] 0.0
    %884 = vst [vmem:[%s865 + $0x90] sm:$0xff] 0.0
    %885 = vst [vmem:[%s865 + $0x98] sm:$0x1] 0.0
    %886 = vst [vmem:[%s865 + $0xa0] sm:$0xff] 0.0
    %887 = vst [vmem:[%s865 + $0xa8] sm:$0x1] 0.0
    %888 = vst [vmem:[%s865 + $0xb0] sm:$0xff] 0.0
    %889 = vst [vmem:[%s865 + $0xb8] sm:$0x1] 0.0
    %890 = vst [vmem:[%s865 + $0xc0] sm:$0xff] 0.0
    %891 = vst [vmem:[%s865 + $0xc8] sm:$0x1] 0.0
    %892 = vst [vmem:[%s865 + $0xd0] sm:$0xff] 0.0
    %893 = vst [vmem:[%s865 + $0xd8] sm:$0x1] 0.0
    %894 = vst [vmem:[%s865 + $0xe0] sm:$0xff] 0.0
    %895 = vst [vmem:[%s865 + $0xe8] sm:$0x1] 0.0
    %896 = vst [vmem:[%s865 + $0xf0] sm:$0xff] 0.0
    %897 = vst [vmem:[%s865 + $0xf8] sm:$0x1] 0.0
    %898 = vst [vmem:[%s865 + $0x100] sm:$0xff] 0.0
    %899 = vst [vmem:[%s865 + $0x108] sm:$0x1] 0.0
    %900 = vst [vmem:[%s865 + $0x110] sm:$0xff] 0.0
    %901 = vst [vmem:[%s865 + $0x118] sm:$0x1] 0.0
    %s902 = scalar_lea.vmem %s0, 288
    %v903 = vld [vmem:[%s902] sm:$0xf]
    %v904 = vld [vmem:[%s902 + $0x4] sm:$0x1]
    %v905 = vld [vmem:[%s902 + $0x8] sm:$0xf]
    %v906 = vld [vmem:[%s902 + $0xc] sm:$0x1]
    %v907 = vld [vmem:[%s902 + $0x10] sm:$0xf]
    %v908 = vld [vmem:[%s902 + $0x14] sm:$0x1]
    %v909 = vld [vmem:[%s902 + $0x18] sm:$0xf]
    %v910 = vld [vmem:[%s902 + $0x1c] sm:$0x1]
    %v911 = vld [vmem:[%s902 + $0x20] sm:$0xf]
    %v912 = vld [vmem:[%s902 + $0x24] sm:$0x1]
    %v913 = vld [vmem:[%s902 + $0x28] sm:$0xf]
    %v914 = vld [vmem:[%s902 + $0x2c] sm:$0x1]
    %v915 = vld [vmem:[%s902 + $0x30] sm:$0xf]
    %v916 = vld [vmem:[%s902 + $0x34] sm:$0x1]
    %v917 = vld [vmem:[%s902 + $0x38] sm:$0xf]
    %v918 = vld [vmem:[%s902 + $0x3c] sm:$0x1]
    %v919 = vld [vmem:[%s902 + $0x48] sm:$0xf]
    %v920 = vld [vmem:[%s902 + $0x4c] sm:$0x1]
    %v921 = vld [vmem:[%s902 + $0x50] sm:$0xf]
    %v922 = vld [vmem:[%s902 + $0x54] sm:$0x1]
    %v923 = vld [vmem:[%s902 + $0x58] sm:$0xf]
    %v924 = vld [vmem:[%s902 + $0x5c] sm:$0x1]
    %v925 = vld [vmem:[%s902 + $0x60] sm:$0xf]
    %v926 = vld [vmem:[%s902 + $0x64] sm:$0x1]
    %v927 = vld [vmem:[%s902 + $0x68] sm:$0xf]
    %v928 = vld [vmem:[%s902 + $0x6c] sm:$0x1]
    %v929 = vld [vmem:[%s902 + $0x70] sm:$0xf]
    %v930 = vld [vmem:[%s902 + $0x74] sm:$0x1]
    %v931 = vld [vmem:[%s902 + $0x78] sm:$0xf]
    %v932 = vld [vmem:[%s902 + $0x7c] sm:$0x1]
    %v933 = vld [vmem:[%s902 + $0x80] sm:$0xf]
    %v934 = vld [vmem:[%s902 + $0x84] sm:$0x1]
    %v936 = vshrl.u32 %v903, 16
    %v938 = vrot.slane %v936, 4
    %v939 = vshll.u32 %v903, 16
    %v941 = vrot.slane %v939, 5
    %v942 = vor.u32 %v938, %v941
    %v943 = vrot.slane %v942, 4
    %v945 = vshll.u32 %v904, 16
    %v947 = vrot.slane %v945, 5
    %v948 = vsel %vm110, %v943, %v947
    %v950 = vshrl.u32 %v905, 16
    %v952 = vrot.slane %v950, 4
    %v953 = vshll.u32 %v905, 16
    %v955 = vrot.slane %v953, 5
    %v956 = vor.u32 %v952, %v955
    %v957 = vrot.slane %v956, 4
    %v959 = vshll.u32 %v906, 16
    %v961 = vrot.slane %v959, 5
    %v962 = vsel %vm110, %v957, %v961
    %v964 = vshrl.u32 %v907, 16
    %v966 = vrot.slane %v964, 4
    %v967 = vshll.u32 %v907, 16
    %v969 = vrot.slane %v967, 5
    %v970 = vor.u32 %v966, %v969
    %v971 = vrot.slane %v970, 4
    %v973 = vshll.u32 %v908, 16
    %v975 = vrot.slane %v973, 5
    %v976 = vsel %vm110, %v971, %v975
    %v978 = vshrl.u32 %v909, 16
    %v980 = vrot.slane %v978, 4
    %v981 = vshll.u32 %v909, 16
    %v983 = vrot.slane %v981, 5
    %v984 = vor.u32 %v980, %v983
    %v985 = vrot.slane %v984, 4
    %v987 = vshll.u32 %v910, 16
    %v989 = vrot.slane %v987, 5
    %v990 = vsel %vm110, %v985, %v989
    %v992 = vshrl.u32 %v911, 16
    %v994 = vrot.slane %v992, 4
    %v995 = vshll.u32 %v911, 16
    %v997 = vrot.slane %v995, 5
    %v998 = vor.u32 %v994, %v997
    %v999 = vrot.slane %v998, 4
    %v1001 = vshll.u32 %v912, 16
    %v1003 = vrot.slane %v1001, 5
    %v1004 = vsel %vm110, %v999, %v1003
    %v1006 = vshrl.u32 %v913, 16
    %v1008 = vrot.slane %v1006, 4
    %v1009 = vshll.u32 %v913, 16
    %v1011 = vrot.slane %v1009, 5
    %v1012 = vor.u32 %v1008, %v1011
    %v1013 = vrot.slane %v1012, 4
    %v1015 = vshll.u32 %v914, 16
    %v1017 = vrot.slane %v1015, 5
    %v1018 = vsel %vm110, %v1013, %v1017
    %v1020 = vshrl.u32 %v915, 16
    %v1022 = vrot.slane %v1020, 4
    %v1023 = vshll.u32 %v915, 16
    %v1025 = vrot.slane %v1023, 5
    %v1026 = vor.u32 %v1022, %v1025
    %v1027 = vrot.slane %v1026, 4
    %v1029 = vshll.u32 %v916, 16
    %v1031 = vrot.slane %v1029, 5
    %v1032 = vsel %vm110, %v1027, %v1031
    %v1034 = vshrl.u32 %v917, 16
    %v1036 = vrot.slane %v1034, 4
    %v1037 = vshll.u32 %v917, 16
    %v1039 = vrot.slane %v1037, 5
    %v1040 = vor.u32 %v1036, %v1039
    %v1041 = vrot.slane %v1040, 4
    %v1043 = vshll.u32 %v918, 16
    %v1045 = vrot.slane %v1043, 5
    %v1046 = vsel %vm110, %v1041, %v1045
    %v1048 = vshrl.u32 %v919, 16
    %v1050 = vrot.slane %v1048, 4
    %v1051 = vshll.u32 %v919, 16
    %v1053 = vrot.slane %v1051, 5
    %v1054 = vor.u32 %v1050, %v1053
    %v1055 = vrot.slane %v1054, 4
    %v1057 = vshll.u32 %v920, 16
    %v1059 = vrot.slane %v1057, 5
    %v1060 = vsel %vm110, %v1055, %v1059
    %v1062 = vshrl.u32 %v921, 16
    %v1064 = vrot.slane %v1062, 4
    %v1065 = vshll.u32 %v921, 16
    %v1067 = vrot.slane %v1065, 5
    %v1068 = vor.u32 %v1064, %v1067
    %v1069 = vrot.slane %v1068, 4
    %v1071 = vshll.u32 %v922, 16
    %v1073 = vrot.slane %v1071, 5
    %v1074 = vsel %vm110, %v1069, %v1073
    %v1076 = vshrl.u32 %v923, 16
    %v1078 = vrot.slane %v1076, 4
    %v1079 = vshll.u32 %v923, 16
    %v1081 = vrot.slane %v1079, 5
    %v1082 = vor.u32 %v1078, %v1081
    %v1083 = vrot.slane %v1082, 4
    %v1085 = vshll.u32 %v924, 16
    %v1087 = vrot.slane %v1085, 5
    %v1088 = vsel %vm110, %v1083, %v1087
    %v1090 = vshrl.u32 %v925, 16
    %v1092 = vrot.slane %v1090, 4
    %v1093 = vshll.u32 %v925, 16
    %v1095 = vrot.slane %v1093, 5
    %v1096 = vor.u32 %v1092, %v1095
    %v1097 = vrot.slane %v1096, 4
    %v1099 = vshll.u32 %v926, 16
    %v1101 = vrot.slane %v1099, 5
    %v1102 = vsel %vm110, %v1097, %v1101
    %v1104 = vshrl.u32 %v927, 16
    %v1106 = vrot.slane %v1104, 4
    %v1107 = vshll.u32 %v927, 16
    %v1109 = vrot.slane %v1107, 5
    %v1110 = vor.u32 %v1106, %v1109
    %v1111 = vrot.slane %v1110, 4
    %v1113 = vshll.u32 %v928, 16
    %v1115 = vrot.slane %v1113, 5
    %v1116 = vsel %vm110, %v1111, %v1115
    %v1118 = vshrl.u32 %v929, 16
    %v1120 = vrot.slane %v1118, 4
    %v1121 = vshll.u32 %v929, 16
    %v1123 = vrot.slane %v1121, 5
    %v1124 = vor.u32 %v1120, %v1123
    %v1125 = vrot.slane %v1124, 4
    %v1127 = vshll.u32 %v930, 16
    %v1129 = vrot.slane %v1127, 5
    %v1130 = vsel %vm110, %v1125, %v1129
    %v1132 = vshrl.u32 %v931, 16
    %v1134 = vrot.slane %v1132, 4
    %v1135 = vshll.u32 %v931, 16
    %v1137 = vrot.slane %v1135, 5
    %v1138 = vor.u32 %v1134, %v1137
    %v1139 = vrot.slane %v1138, 4
    %v1141 = vshll.u32 %v932, 16
    %v1143 = vrot.slane %v1141, 5
    %v1144 = vsel %vm110, %v1139, %v1143
    %v1146 = vshrl.u32 %v933, 16
    %v1148 = vrot.slane %v1146, 4
    %v1149 = vshll.u32 %v933, 16
    %v1151 = vrot.slane %v1149, 5
    %v1152 = vor.u32 %v1148, %v1151
    %v1153 = vrot.slane %v1152, 4
    %v1155 = vshll.u32 %v934, 16
    %v1157 = vrot.slane %v1155, 5
    %v1158 = vsel %vm110, %v1153, %v1157
    %v1159 = vunpack.c.l.b16 %v948
    %v1160 = vunpack.c.l.b16 %v962
    %v1161 = vunpack.c.l.b16 %v976
    %v1162 = vunpack.c.l.b16 %v990
    %v1163 = vunpack.c.l.b16 %v1004
    %v1164 = vunpack.c.l.b16 %v1018
    %v1165 = vunpack.c.l.b16 %v1032
    %v1166 = vunpack.c.l.b16 %v1046
    %v1167 = vunpack.c.l.b16 %v1060
    %v1168 = vunpack.c.l.b16 %v1074
    %v1169 = vunpack.c.l.b16 %v1088
    %v1170 = vunpack.c.l.b16 %v1102
    %v1171 = vunpack.c.l.b16 %v1116
    %v1172 = vunpack.c.l.b16 %v1130
    %v1173 = vunpack.c.l.b16 %v1144
    %v1174 = vunpack.c.l.b16 %v1158
    %v1175 = vpack.c.b16 %v1160, %v1159
    %v1176 = vpack.c.b16 %v1162, %v1161
    %v1177 = vpack.c.b16 %v1164, %v1163
    %v1178 = vpack.c.b16 %v1166, %v1165
    %v1179 = vpack.c.b16 %v1168, %v1167
    %v1180 = vpack.c.b16 %v1170, %v1169
    %v1181 = vpack.c.b16 %v1172, %v1171
    %v1182 = vpack.c.b16 %v1174, %v1173
    %1191 = vmatprep.subr.bf16.mxu0 0
    %1192 = vmatpush1.bf16.msra.mxu0 %v406
    %1193 = vmatprep.subr.bf16.mxu0 0
    %1194 = vmatpush1.bf16.msra.mxu0 %v405
    %1195 = vmatprep.subr.bf16.mxu0 0
    %1196 = vmatpush1.bf16.msra.mxu0 %v404
    %1197 = vmatprep.subr.bf16.mxu0 0
    %1198 = vmatpush1.bf16.msra.mxu0 %v403
    %1199 = vmatprep.subr.bf16.mxu0 0
    %1200 = vmatpush1.bf16.msra.mxu0 %v402
    %1201 = vmatprep.subr.bf16.mxu0 0
    %1202 = vmatpush1.bf16.msra.mxu0 %v401
    %1203 = vmatprep.subr.bf16.mxu0 0
    %1204 = vmatpush1.bf16.msra.mxu0 %v400
    %1205 = vmatprep.subr.bf16.mxu0 0
    %1206 = vmatpush1.bf16.msra.mxu0 %v399
    %1207 = vmatprep.subr.bf16.mxu0 0
    %1208 = vmatpush2.bf16.msra.mxu0 0
    %1209 = vmatprep.subr.bf16.mxu0 0
    %1210 = vmatpush2.bf16.msra.mxu0 0
    %1211 = vmatprep.subr.bf16.mxu0 0
    %1212 = vmatpush2.bf16.msra.mxu0 0
    %1213 = vmatprep.subr.bf16.mxu0 0
    %1214 = vmatpush2.bf16.msra.mxu0 0
    %1215 = vmatprep.subr.bf16.mxu0 0
    %1216 = vmatpush2.bf16.msra.mxu0 0
    %1217 = vmatprep.subr.bf16.mxu0 0
    %1218 = vmatpush2.bf16.msra.mxu0 0
    %1219 = vmatprep.subr.bf16.mxu0 0
    %1220 = vmatpush2.bf16.msra.mxu0 0
    %1221 = vmatprep.subr.bf16.mxu0 0
    %1222 = vmatpush2.bf16.msra.mxu0 0
    %1223 = vmatprep.mubr.bf16.mxu0 0
    %1224 = vmatmul.mubr.bf16.gmra.mxu0 %v1175
    %v1225 = vpop.f32.mrf.mxu0
    %v1226 = vadd.f32 0.0, %v1225
    %v1227 = vpop.f32.mrf.mxu0
    %v1228 = vpop.f32.mrf.mxu0
    %v1229 = vadd.f32 0.0, %v1228
    %v1230 = vpop.f32.mrf.mxu0
    %1231 = vmatprep.mubr.bf16.mxu0 0
    %1232 = vmatmul.mubr.bf16.gmra.mxu0 %v1176
    %v1233 = vpop.f32.mrf.mxu0
    %v1234 = vadd.f32 0.0, %v1233
    %v1235 = vpop.f32.mrf.mxu0
    %v1236 = vpop.f32.mrf.mxu0
    %v1237 = vadd.f32 0.0, %v1236
    %v1238 = vpop.f32.mrf.mxu0
    %1239 = vmatprep.mubr.bf16.mxu0 0
    %1240 = vmatmul.mubr.bf16.gmra.mxu0 %v1177
    %v1241 = vpop.f32.mrf.mxu0
    %v1242 = vadd.f32 0.0, %v1241
    %v1243 = vpop.f32.mrf.mxu0
    %v1244 = vpop.f32.mrf.mxu0
    %v1245 = vadd.f32 0.0, %v1244
    %v1246 = vpop.f32.mrf.mxu0
    %1247 = vmatprep.mubr.bf16.mxu0 0
    %1248 = vmatmul.mubr.bf16.gmra.mxu0 %v1178
    %v1249 = vpop.f32.mrf.mxu0
    %v1250 = vadd.f32 0.0, %v1249
    %v1251 = vpop.f32.mrf.mxu0
    %v1252 = vpop.f32.mrf.mxu0
    %v1253 = vadd.f32 0.0, %v1252
    %v1254 = vpop.f32.mrf.mxu0
    %1255 = vmatprep.mubr.bf16.mxu0 0
    %1256 = vmatmul.mubr.bf16.gmra.mxu0 %v1179
    %v1257 = vpop.f32.mrf.mxu0
    %v1258 = vadd.f32 0.0, %v1257
    %v1259 = vpop.f32.mrf.mxu0
    %v1260 = vpop.f32.mrf.mxu0
    %v1261 = vadd.f32 0.0, %v1260
    %v1262 = vpop.f32.mrf.mxu0
    %1263 = vmatprep.mubr.bf16.mxu0 0
    %1264 = vmatmul.mubr.bf16.gmra.mxu0 %v1180
    %v1265 = vpop.f32.mrf.mxu0
    %v1266 = vadd.f32 0.0, %v1265
    %v1267 = vpop.f32.mrf.mxu0
    %v1268 = vpop.f32.mrf.mxu0
    %v1269 = vadd.f32 0.0, %v1268
    %v1270 = vpop.f32.mrf.mxu0
    %1271 = vmatprep.mubr.bf16.mxu0 0
    %1272 = vmatmul.mubr.bf16.gmra.mxu0 %v1181
    %v1273 = vpop.f32.mrf.mxu0
    %v1274 = vadd.f32 0.0, %v1273
    %v1275 = vpop.f32.mrf.mxu0
    %v1276 = vpop.f32.mrf.mxu0
    %v1277 = vadd.f32 0.0, %v1276
    %v1278 = vpop.f32.mrf.mxu0
    %1279 = vmatprep.mubr.bf16.mxu0 0
    %1280 = vmatmul.mubr.bf16.gmra.mxu0 %v1182
    %v1281 = vpop.f32.mrf.mxu0
    %v1282 = vadd.f32 0.0, %v1281
    %v1283 = vpop.f32.mrf.mxu0
    %v1284 = vpop.f32.mrf.mxu0
    %v1285 = vadd.f32 0.0, %v1284
    %v1286 = vpop.f32.mrf.mxu0
    %1287 = vdwg.mxu0
    %v1288 = vadd.f32 %v1226, %v1229
    %v1289 = vadd.f32 %v1288, %v1234
    %v1290 = vadd.f32 %v1289, %v1237
    %v1291 = vadd.f32 %v1290, %v1242
    %v1292 = vadd.f32 %v1291, %v1245
    %v1293 = vadd.f32 %v1292, %v1250
    %v1294 = vadd.f32 %v1293, %v1253
    %v1295 = vadd.f32 %v1294, %v1258
    %v1296 = vadd.f32 %v1295, %v1261
    %v1297 = vadd.f32 %v1296, %v1266
    %v1298 = vadd.f32 %v1297, %v1269
    %v1299 = vadd.f32 %v1298, %v1274
    %v1300 = vadd.f32 %v1299, %v1277
    %v1301 = vadd.f32 %v1300, %v1282
    %v1302 = vadd.f32 %v1301, %v1285
    %v1303 = vrot.slane %v1302, 4
    %v1304 = vadd.f32 %v1302, %v1303
    %v1305 = vrot.slane %v1304, 2
    %v1306 = vadd.f32 %v1304, %v1305
    %v1307 = vrot.slane %v1306, 1
    %v1308 = vadd.f32 %v1306, %v1307
    %v1309 = vadd.f32 %v809, %v1308
    %v1310 = vmul.f32 %v1226, %v1226
    %v1311 = vmul.f32 %v1229, %v1229
    %v1312 = vmul.f32 %v1234, %v1234
    %v1313 = vmul.f32 %v1237, %v1237
    %v1314 = vmul.f32 %v1242, %v1242
    %v1315 = vmul.f32 %v1245, %v1245
    %v1316 = vmul.f32 %v1250, %v1250
    %v1317 = vmul.f32 %v1253, %v1253
    %v1318 = vmul.f32 %v1258, %v1258
    %v1319 = vmul.f32 %v1261, %v1261
    %v1320 = vmul.f32 %v1266, %v1266
    %v1321 = vmul.f32 %v1269, %v1269
    %v1322 = vmul.f32 %v1274, %v1274
    %v1323 = vmul.f32 %v1277, %v1277
    %v1324 = vmul.f32 %v1282, %v1282
    %v1325 = vmul.f32 %v1285, %v1285
    %v1326 = vadd.f32 %v1310, %v1311
    %v1327 = vadd.f32 %v1326, %v1312
    %v1328 = vadd.f32 %v1327, %v1313
    %v1329 = vadd.f32 %v1328, %v1314
    %v1330 = vadd.f32 %v1329, %v1315
    %v1331 = vadd.f32 %v1330, %v1316
    %v1332 = vadd.f32 %v1331, %v1317
    %v1333 = vadd.f32 %v1332, %v1318
    %v1334 = vadd.f32 %v1333, %v1319
    %v1335 = vadd.f32 %v1334, %v1320
    %v1336 = vadd.f32 %v1335, %v1321
    %v1337 = vadd.f32 %v1336, %v1322
    %v1338 = vadd.f32 %v1337, %v1323
    %v1339 = vadd.f32 %v1338, %v1324
    %v1340 = vadd.f32 %v1339, %v1325
    %v1341 = vrot.slane %v1340, 4
    %v1342 = vadd.f32 %v1340, %v1341
    %v1343 = vrot.slane %v1342, 2
    %v1344 = vadd.f32 %v1342, %v1343
    %v1345 = vrot.slane %v1344, 1
    %v1346 = vadd.f32 %v1344, %v1345
    %v1347 = vadd.f32 %v847, %v1346
    %1348 = vst [vmem:[%s865 + $0x1] sm:$0xff] %v1226
    %1349 = vst [vmem:[%s865 + $0x11] sm:$0xff] %v1229
    %1350 = vst [vmem:[%s865 + $0x21] sm:$0xff] %v1234
    %1351 = vst [vmem:[%s865 + $0x31] sm:$0xff] %v1237
    %1352 = vst [vmem:[%s865 + $0x41] sm:$0xff] %v1242
    %1353 = vst [vmem:[%s865 + $0x51] sm:$0xff] %v1245
    %1354 = vst [vmem:[%s865 + $0x61] sm:$0xff] %v1250
    %1355 = vst [vmem:[%s865 + $0x71] sm:$0xff] %v1253
    %1356 = vst [vmem:[%s865 + $0x91] sm:$0xff] %v1258
    %1357 = vst [vmem:[%s865 + $0xa1] sm:$0xff] %v1261
    %1358 = vst [vmem:[%s865 + $0xb1] sm:$0xff] %v1266
    %1359 = vst [vmem:[%s865 + $0xc1] sm:$0xff] %v1269
    %1360 = vst [vmem:[%s865 + $0xd1] sm:$0xff] %v1274
    %1361 = vst [vmem:[%s865 + $0xe1] sm:$0xff] %v1277
    %1362 = vst [vmem:[%s865 + $0xf1] sm:$0xff] %v1282
    %1363 = vst [vmem:[%s865 + $0x101] sm:$0xff] %v1285
    %s1364 = scalar_lea.vmem [#allocation2], 864
    %1365 = vst [vmem:[%s1364] sm:$0xff] 0.0
    %1366 = vst [vmem:[%s1364 + $0x8] sm:$0x1] 0.0
    %1367 = vst [vmem:[%s1364 + $0x10] sm:$0xff] 0.0
    %1368 = vst [vmem:[%s1364 + $0x18] sm:$0x1] 0.0
    %1369 = vst [vmem:[%s1364 + $0x20] sm:$0xff] 0.0
    %1370 = vst [vmem:[%s1364 + $0x28] sm:$0x1] 0.0
    %1371 = vst [vmem:[%s1364 + $0x30] sm:$0xff] 0.0
    %1372 = vst [vmem:[%s1364 + $0x38] sm:$0x1] 0.0
    %1373 = vst [vmem:[%s1364 + $0x40] sm:$0xff] 0.0
    %1374 = vst [vmem:[%s1364 + $0x48] sm:$0x1] 0.0
    %1375 = vst [vmem:[%s1364 + $0x50] sm:$0xff] 0.0
    %1376 = vst [vmem:[%s1364 + $0x58] sm:$0x1] 0.0
    %1377 = vst [vmem:[%s1364 + $0x60] sm:$0xff] 0.0
    %1378 = vst [vmem:[%s1364 + $0x68] sm:$0x1] 0.0
    %1379 = vst [vmem:[%s1364 + $0x70] sm:$0xff] 0.0
    %1380 = vst [vmem:[%s1364 + $0x78] sm:$0x1] 0.0
    %1381 = vst [vmem:[%s1364 + $0x80] sm:$0xff] 0.0
    %1382 = vst [vmem:[%s1364 + $0x88] sm:$0x1] 0.0
    %1383 = vst [vmem:[%s1364 + $0x90] sm:$0xff] 0.0
    %1384 = vst [vmem:[%s1364 + $0x98] sm:$0x1] 0.0
    %1385 = vst [vmem:[%s1364 + $0xa0] sm:$0xff] 0.0
    %1386 = vst [vmem:[%s1364 + $0xa8] sm:$0x1] 0.0
    %1387 = vst [vmem:[%s1364 + $0xb0] sm:$0xff] 0.0
    %1388 = vst [vmem:[%s1364 + $0xb8] sm:$0x1] 0.0
    %1389 = vst [vmem:[%s1364 + $0xc0] sm:$0xff] 0.0
    %1390 = vst [vmem:[%s1364 + $0xc8] sm:$0x1] 0.0
    %1391 = vst [vmem:[%s1364 + $0xd0] sm:$0xff] 0.0
    %1392 = vst [vmem:[%s1364 + $0xd8] sm:$0x1] 0.0
    %1393 = vst [vmem:[%s1364 + $0xe0] sm:$0xff] 0.0
    %1394 = vst [vmem:[%s1364 + $0xe8] sm:$0x1] 0.0
    %1395 = vst [vmem:[%s1364 + $0xf0] sm:$0xff] 0.0
    %1396 = vst [vmem:[%s1364 + $0xf8] sm:$0x1] 0.0
    %1397 = vst [vmem:[%s1364 + $0x100] sm:$0xff] 0.0
    %1398 = vst [vmem:[%s1364 + $0x108] sm:$0x1] 0.0
    %1399 = vst [vmem:[%s1364 + $0x110] sm:$0xff] 0.0
    %1400 = vst [vmem:[%s1364 + $0x118] sm:$0x1] 0.0
    %s1401 = scalar_lea.vmem %s0, 432
    %v1402 = vld [vmem:[%s1401] sm:$0xf]
    %v1403 = vld [vmem:[%s1401 + $0x8] sm:$0xf]
    %v1404 = vld [vmem:[%s1401 + $0x10] sm:$0xf]
    %v1405 = vld [vmem:[%s1401 + $0x18] sm:$0xf]
    %v1406 = vld [vmem:[%s1401 + $0x20] sm:$0xf]
    %v1407 = vld [vmem:[%s1401 + $0x28] sm:$0xf]
    %v1408 = vld [vmem:[%s1401 + $0x30] sm:$0xf]
    %v1409 = vld [vmem:[%s1401 + $0x38] sm:$0xf]
    %v1410 = vld [vmem:[%s1401 + $0x48] sm:$0xf]
    %v1411 = vld [vmem:[%s1401 + $0x50] sm:$0xf]
    %v1412 = vld [vmem:[%s1401 + $0x58] sm:$0xf]
    %v1413 = vld [vmem:[%s1401 + $0x60] sm:$0xf]
    %v1414 = vld [vmem:[%s1401 + $0x68] sm:$0xf]
    %v1415 = vld [vmem:[%s1401 + $0x70] sm:$0xf]
    %v1416 = vld [vmem:[%s1401 + $0x78] sm:$0xf]
    %v1417 = vld [vmem:[%s1401 + $0x80] sm:$0xf]
    %v1434 = vunpack.c.l.b16 %v1402
    %v1435 = vunpack.c.l.b16 %v1403
    %v1436 = vunpack.c.l.b16 %v1404
    %v1437 = vunpack.c.l.b16 %v1405
    %v1438 = vunpack.c.l.b16 %v1406
    %v1439 = vunpack.c.l.b16 %v1407
    %v1440 = vunpack.c.l.b16 %v1408
    %v1441 = vunpack.c.l.b16 %v1409
    %v1442 = vunpack.c.l.b16 %v1410
    %v1443 = vunpack.c.l.b16 %v1411
    %v1444 = vunpack.c.l.b16 %v1412
    %v1445 = vunpack.c.l.b16 %v1413
    %v1446 = vunpack.c.l.b16 %v1414
    %v1447 = vunpack.c.l.b16 %v1415
    %v1448 = vunpack.c.l.b16 %v1416
    %v1449 = vunpack.c.l.b16 %v1417
    %v1450 = vpack.c.b16 %v1435, %v1434
    %v1451 = vpack.c.b16 %v1437, %v1436
    %v1452 = vpack.c.b16 %v1439, %v1438
    %v1453 = vpack.c.b16 %v1441, %v1440
    %v1454 = vpack.c.b16 %v1443, %v1442
    %v1455 = vpack.c.b16 %v1445, %v1444
    %v1456 = vpack.c.b16 %v1447, %v1446
    %v1457 = vpack.c.b16 %v1449, %v1448
    %1466 = vmatprep.subr.bf16.mxu0 0
    %1467 = vmatpush1.bf16.msra.mxu0 %v406
    %1468 = vmatprep.subr.bf16.mxu0 0
    %1469 = vmatpush1.bf16.msra.mxu0 %v405
    %1470 = vmatprep.subr.bf16.mxu0 0
    %1471 = vmatpush1.bf16.msra.mxu0 %v404
    %1472 = vmatprep.subr.bf16.mxu0 0
    %1473 = vmatpush1.bf16.msra.mxu0 %v403
    %1474 = vmatprep.subr.bf16.mxu0 0
    %1475 = vmatpush1.bf16.msra.mxu0 %v402
    %1476 = vmatprep.subr.bf16.mxu0 0
    %1477 = vmatpush1.bf16.msra.mxu0 %v401
    %1478 = vmatprep.subr.bf16.mxu0 0
    %1479 = vmatpush1.bf16.msra.mxu0 %v400
    %1480 = vmatprep.subr.bf16.mxu0 0
    %1481 = vmatpush1.bf16.msra.mxu0 %v399
    %1482 = vmatprep.subr.bf16.mxu0 0
    %1483 = vmatpush2.bf16.msra.mxu0 0
    %1484 = vmatprep.subr.bf16.mxu0 0
    %1485 = vmatpush2.bf16.msra.mxu0 0
    %1486 = vmatprep.subr.bf16.mxu0 0
    %1487 = vmatpush2.bf16.msra.mxu0 0
    %1488 = vmatprep.subr.bf16.mxu0 0
    %1489 = vmatpush2.bf16.msra.mxu0 0
    %1490 = vmatprep.subr.bf16.mxu0 0
    %1491 = vmatpush2.bf16.msra.mxu0 0
    %1492 = vmatprep.subr.bf16.mxu0 0
    %1493 = vmatpush2.bf16.msra.mxu0 0
    %1494 = vmatprep.subr.bf16.mxu0 0
    %1495 = vmatpush2.bf16.msra.mxu0 0
    %1496 = vmatprep.subr.bf16.mxu0 0
    %1497 = vmatpush2.bf16.msra.mxu0 0
    %1498 = vmatprep.mubr.bf16.mxu0 0
    %1499 = vmatmul.mubr.bf16.gmra.mxu0 %v1450
    %v1500 = vpop.f32.mrf.mxu0
    %v1501 = vadd.f32 0.0, %v1500
    %v1502 = vpop.f32.mrf.mxu0
    %v1503 = vpop.f32.mrf.mxu0
    %v1504 = vadd.f32 0.0, %v1503
    %v1505 = vpop.f32.mrf.mxu0
    %1506 = vmatprep.mubr.bf16.mxu0 0
    %1507 = vmatmul.mubr.bf16.gmra.mxu0 %v1451
    %v1508 = vpop.f32.mrf.mxu0
    %v1509 = vadd.f32 0.0, %v1508
    %v1510 = vpop.f32.mrf.mxu0
    %v1511 = vpop.f32.mrf.mxu0
    %v1512 = vadd.f32 0.0, %v1511
    %v1513 = vpop.f32.mrf.mxu0
    %1514 = vmatprep.mubr.bf16.mxu0 0
    %1515 = vmatmul.mubr.bf16.gmra.mxu0 %v1452
    %v1516 = vpop.f32.mrf.mxu0
    %v1517 = vadd.f32 0.0, %v1516
    %v1518 = vpop.f32.mrf.mxu0
    %v1519 = vpop.f32.mrf.mxu0
    %v1520 = vadd.f32 0.0, %v1519
    %v1521 = vpop.f32.mrf.mxu0
    %1522 = vmatprep.mubr.bf16.mxu0 0
    %1523 = vmatmul.mubr.bf16.gmra.mxu0 %v1453
    %v1524 = vpop.f32.mrf.mxu0
    %v1525 = vadd.f32 0.0, %v1524
    %v1526 = vpop.f32.mrf.mxu0
    %v1527 = vpop.f32.mrf.mxu0
    %v1528 = vadd.f32 0.0, %v1527
    %v1529 = vpop.f32.mrf.mxu0
    %1530 = vmatprep.mubr.bf16.mxu0 0
    %1531 = vmatmul.mubr.bf16.gmra.mxu0 %v1454
    %v1532 = vpop.f32.mrf.mxu0
    %v1533 = vadd.f32 0.0, %v1532
    %v1534 = vpop.f32.mrf.mxu0
    %v1535 = vpop.f32.mrf.mxu0
    %v1536 = vadd.f32 0.0, %v1535
    %v1537 = vpop.f32.mrf.mxu0
    %1538 = vmatprep.mubr.bf16.mxu0 0
    %1539 = vmatmul.mubr.bf16.gmra.mxu0 %v1455
    %v1540 = vpop.f32.mrf.mxu0
    %v1541 = vadd.f32 0.0, %v1540
    %v1542 = vpop.f32.mrf.mxu0
    %v1543 = vpop.f32.mrf.mxu0
    %v1544 = vadd.f32 0.0, %v1543
    %v1545 = vpop.f32.mrf.mxu0
    %1546 = vmatprep.mubr.bf16.mxu0 0
    %1547 = vmatmul.mubr.bf16.gmra.mxu0 %v1456
    %v1548 = vpop.f32.mrf.mxu0
    %v1549 = vadd.f32 0.0, %v1548
    %v1550 = vpop.f32.mrf.mxu0
    %v1551 = vpop.f32.mrf.mxu0
    %v1552 = vadd.f32 0.0, %v1551
    %v1553 = vpop.f32.mrf.mxu0
    %1554 = vmatprep.mubr.bf16.mxu0 0
    %1555 = vmatmul.mubr.bf16.gmra.mxu0 %v1457
    %v1556 = vpop.f32.mrf.mxu0
    %v1557 = vadd.f32 0.0, %v1556
    %v1558 = vpop.f32.mrf.mxu0
    %v1559 = vpop.f32.mrf.mxu0
    %v1560 = vadd.f32 0.0, %v1559
    %v1561 = vpop.f32.mrf.mxu0
    %1562 = vdwg.mxu0
    %v1563 = vadd.f32 %v1501, %v1504
    %v1564 = vadd.f32 %v1563, %v1509
    %v1565 = vadd.f32 %v1564, %v1512
    %v1566 = vadd.f32 %v1565, %v1517
    %v1567 = vadd.f32 %v1566, %v1520
    %v1568 = vadd.f32 %v1567, %v1525
    %v1569 = vadd.f32 %v1568, %v1528
    %v1570 = vadd.f32 %v1569, %v1533
    %v1571 = vadd.f32 %v1570, %v1536
    %v1572 = vadd.f32 %v1571, %v1541
    %v1573 = vadd.f32 %v1572, %v1544
    %v1574 = vadd.f32 %v1573, %v1549
    %v1575 = vadd.f32 %v1574, %v1552
    %v1576 = vadd.f32 %v1575, %v1557
    %v1577 = vadd.f32 %v1576, %v1560
    %v1578 = vrot.slane %v1577, 4
    %v1579 = vadd.f32 %v1577, %v1578
    %v1580 = vrot.slane %v1579, 2
    %v1581 = vadd.f32 %v1579, %v1580
    %v1582 = vrot.slane %v1581, 1
    %v1583 = vadd.f32 %v1581, %v1582
    %v1584 = vadd.f32 %v1309, %v1583
    %v1585 = vmul.f32 %v1501, %v1501
    %v1586 = vmul.f32 %v1504, %v1504
    %v1587 = vmul.f32 %v1509, %v1509
    %v1588 = vmul.f32 %v1512, %v1512
    %v1589 = vmul.f32 %v1517, %v1517
    %v1590 = vmul.f32 %v1520, %v1520
    %v1591 = vmul.f32 %v1525, %v1525
    %v1592 = vmul.f32 %v1528, %v1528
    %v1593 = vmul.f32 %v1533, %v1533
    %v1594 = vmul.f32 %v1536, %v1536
    %v1595 = vmul.f32 %v1541, %v1541
    %v1596 = vmul.f32 %v1544, %v1544
    %v1597 = vmul.f32 %v1549, %v1549
    %v1598 = vmul.f32 %v1552, %v1552
    %v1599 = vmul.f32 %v1557, %v1557
    %v1600 = vmul.f32 %v1560, %v1560
    %v1601 = vadd.f32 %v1585, %v1586
    %v1602 = vadd.f32 %v1601, %v1587
    %v1603 = vadd.f32 %v1602, %v1588
    %v1604 = vadd.f32 %v1603, %v1589
    %v1605 = vadd.f32 %v1604, %v1590
    %v1606 = vadd.f32 %v1605, %v1591
    %v1607 = vadd.f32 %v1606, %v1592
    %v1608 = vadd.f32 %v1607, %v1593
    %v1609 = vadd.f32 %v1608, %v1594
    %v1610 = vadd.f32 %v1609, %v1595
    %v1611 = vadd.f32 %v1610, %v1596
    %v1612 = vadd.f32 %v1611, %v1597
    %v1613 = vadd.f32 %v1612, %v1598
    %v1614 = vadd.f32 %v1613, %v1599
    %v1615 = vadd.f32 %v1614, %v1600
    %v1616 = vrot.slane %v1615, 4
    %v1617 = vadd.f32 %v1615, %v1616
    %v1618 = vrot.slane %v1617, 2
    %v1619 = vadd.f32 %v1617, %v1618
    %v1620 = vrot.slane %v1619, 1
    %v1621 = vadd.f32 %v1619, %v1620
    %v1622 = vadd.f32 %v1347, %v1621
    %1623 = vst [vmem:[%s1364] sm:$0xff] %v1501
    %1624 = vst [vmem:[%s1364 + $0x10] sm:$0xff] %v1504
    %1625 = vst [vmem:[%s1364 + $0x20] sm:$0xff] %v1509
    %1626 = vst [vmem:[%s1364 + $0x30] sm:$0xff] %v1512
    %1627 = vst [vmem:[%s1364 + $0x40] sm:$0xff] %v1517
    %1628 = vst [vmem:[%s1364 + $0x50] sm:$0xff] %v1520
    %1629 = vst [vmem:[%s1364 + $0x60] sm:$0xff] %v1525
    %1630 = vst [vmem:[%s1364 + $0x70] sm:$0xff] %v1528
    %1631 = vst [vmem:[%s1364 + $0x90] sm:$0xff] %v1533
    %1632 = vst [vmem:[%s1364 + $0xa0] sm:$0xff] %v1536
    %1633 = vst [vmem:[%s1364 + $0xb0] sm:$0xff] %v1541
    %1634 = vst [vmem:[%s1364 + $0xc0] sm:$0xff] %v1544
    %1635 = vst [vmem:[%s1364 + $0xd0] sm:$0xff] %v1549
    %1636 = vst [vmem:[%s1364 + $0xe0] sm:$0xff] %v1552
    %1637 = vst [vmem:[%s1364 + $0xf0] sm:$0xff] %v1557
    %1638 = vst [vmem:[%s1364 + $0x100] sm:$0xff] %v1560
    %v1639 = vrcp.pop 512.0
    %v1640 = vmul.f32 %v1584, %v1639
    %v1641 = vmul.f32 %v1622, %v1639
    %v1642 = vmul.f32 %v1640, %v1640
    %v1643 = vsub.f32 %v1641, %v1642
    %v1644 = vadd.f32 %v1643, 1e-05
    %v1645 = vrsqrt.pop %v1644
    %v1646 = vmul.f32 %v22, %v1645
    %v1647 = vmul.f32 %v1640, %v1646
    %v1649 = vrot.slane %v1647, 7
    %v1651 = vsub.f32 %v22, %v1649
    %v1652 = vld [vmem:[%s572 + $0x1] sm:$0xff]
    %v1653 = vld [vmem:[%s572 + $0x11] sm:$0xff]
    %v1654 = vld [vmem:[%s572 + $0x21] sm:$0xff]
    %v1655 = vld [vmem:[%s572 + $0x31] sm:$0xff]
    %v1656 = vld [vmem:[%s572 + $0x41] sm:$0xff]
    %v1657 = vld [vmem:[%s572 + $0x51] sm:$0xff]
    %v1658 = vld [vmem:[%s572 + $0x61] sm:$0xff]
    %v1659 = vld [vmem:[%s572 + $0x71] sm:$0xff]
    %v1660 = vld [vmem:[%s572 + $0x91] sm:$0xff]
    %v1661 = vld [vmem:[%s572 + $0xa1] sm:$0xff]
    %v1662 = vld [vmem:[%s572 + $0xb1] sm:$0xff]
    %v1663 = vld [vmem:[%s572 + $0xc1] sm:$0xff]
    %v1664 = vld [vmem:[%s572 + $0xd1] sm:$0xff]
    %v1665 = vld [vmem:[%s572 + $0xe1] sm:$0xff]
    %v1666 = vld [vmem:[%s572 + $0xf1] sm:$0xff]
    %v1667 = vld [vmem:[%s572 + $0x101] sm:$0xff]
    %v1668 = vlaneseq
    %v1669 = vshrl.u32 %v1668, 7
    %v1670 = vsub.s32 0, %v1669
    %v1671 = vrot.slane %v1646, %v1670
    %v1672 = vmul.f32 %v1652, %v1671
    %v1673 = vmul.f32 %v1653, %v1671
    %v1674 = vmul.f32 %v1654, %v1671
    %v1675 = vmul.f32 %v1655, %v1671
    %v1676 = vmul.f32 %v1656, %v1671
    %v1677 = vmul.f32 %v1657, %v1671
    %v1678 = vmul.f32 %v1658, %v1671
    %v1679 = vmul.f32 %v1659, %v1671
    %v1680 = vmul.f32 %v1660, %v1671
    %v1681 = vmul.f32 %v1661, %v1671
    %v1682 = vmul.f32 %v1662, %v1671
    %v1683 = vmul.f32 %v1663, %v1671
    %v1684 = vmul.f32 %v1664, %v1671
    %v1685 = vmul.f32 %v1665, %v1671
    %v1686 = vmul.f32 %v1666, %v1671
    %v1687 = vmul.f32 %v1667, %v1671
    %v1688 = vlaneseq
    %v1689 = vshrl.u32 %v1688, 7
    %v1690 = vsub.s32 1, %v1689
    %v1691 = vrot.slane %v1651, %v1690
    %v1692 = vadd.f32 %v1672, %v1691
    %v1693 = vadd.f32 %v1673, %v1691
    %v1694 = vadd.f32 %v1674, %v1691
    %v1695 = vadd.f32 %v1675, %v1691
    %v1696 = vadd.f32 %v1676, %v1691
    %v1697 = vadd.f32 %v1677, %v1691
    %v1698 = vadd.f32 %v1678, %v1691
    %v1699 = vadd.f32 %v1679, %v1691
    %v1700 = vadd.f32 %v1680, %v1691
    %v1701 = vadd.f32 %v1681, %v1691
    %v1702 = vadd.f32 %v1682, %v1691
    %v1703 = vadd.f32 %v1683, %v1691
    %v1704 = vadd.f32 %v1684, %v1691
    %v1705 = vadd.f32 %v1685, %v1691
    %v1706 = vadd.f32 %v1686, %v1691
    %v1707 = vadd.f32 %v1687, %v1691
    %v1708 = vmax.f32 %v1692, 0.0
    %v1709 = vmax.f32 %v1693, 0.0
    %v1710 = vmax.f32 %v1694, 0.0
    %v1711 = vmax.f32 %v1695, 0.0
    %v1712 = vmax.f32 %v1696, 0.0
    %v1713 = vmax.f32 %v1697, 0.0
    %v1714 = vmax.f32 %v1698, 0.0
    %v1715 = vmax.f32 %v1699, 0.0
    %v1716 = vmax.f32 %v1700, 0.0
    %v1717 = vmax.f32 %v1701, 0.0
    %v1718 = vmax.f32 %v1702, 0.0
    %v1719 = vmax.f32 %v1703, 0.0
    %v1720 = vmax.f32 %v1704, 0.0
    %v1721 = vmax.f32 %v1705, 0.0
    %v1722 = vmax.f32 %v1706, 0.0
    %v1723 = vmax.f32 %v1707, 0.0
    %1724 = vst [vmem:[%s572 + $0x1] sm:$0xff] %v1708
    %1725 = vst [vmem:[%s572 + $0x11] sm:$0xff] %v1709
    %1726 = vst [vmem:[%s572 + $0x21] sm:$0xff] %v1710
    %1727 = vst [vmem:[%s572 + $0x31] sm:$0xff] %v1711
    %1728 = vst [vmem:[%s572 + $0x41] sm:$0xff] %v1712
    %1729 = vst [vmem:[%s572 + $0x51] sm:$0xff] %v1713
    %1730 = vst [vmem:[%s572 + $0x61] sm:$0xff] %v1714
    %1731 = vst [vmem:[%s572 + $0x71] sm:$0xff] %v1715
    %1732 = vst [vmem:[%s572 + $0x91] sm:$0xff] %v1716
    %1733 = vst [vmem:[%s572 + $0xa1] sm:$0xff] %v1717
    %1734 = vst [vmem:[%s572 + $0xb1] sm:$0xff] %v1718
    %1735 = vst [vmem:[%s572 + $0xc1] sm:$0xff] %v1719
    %1736 = vst [vmem:[%s572 + $0xd1] sm:$0xff] %v1720
    %1737 = vst [vmem:[%s572 + $0xe1] sm:$0xff] %v1721
    %1738 = vst [vmem:[%s572 + $0xf1] sm:$0xff] %v1722
    %1739 = vst [vmem:[%s572 + $0x101] sm:$0xff] %v1723
    %v1740 = vld [vmem:[%s848] sm:$0xff]
    %v1741 = vld [vmem:[%s848 + $0x10] sm:$0xff]
    %v1742 = vld [vmem:[%s848 + $0x20] sm:$0xff]
    %v1743 = vld [vmem:[%s848 + $0x30] sm:$0xff]
    %v1744 = vld [vmem:[%s848 + $0x40] sm:$0xff]
    %v1745 = vld [vmem:[%s848 + $0x50] sm:$0xff]
    %v1746 = vld [vmem:[%s848 + $0x60] sm:$0xff]
    %v1747 = vld [vmem:[%s848 + $0x70] sm:$0xff]
    %v1748 = vld [vmem:[%s848 + $0x90] sm:$0xff]
    %v1749 = vld [vmem:[%s848 + $0xa0] sm:$0xff]
    %v1750 = vld [vmem:[%s848 + $0xb0] sm:$0xff]
    %v1751 = vld [vmem:[%s848 + $0xc0] sm:$0xff]
    %v1752 = vld [vmem:[%s848 + $0xd0] sm:$0xff]
    %v1753 = vld [vmem:[%s848 + $0xe0] sm:$0xff]
    %v1754 = vld [vmem:[%s848 + $0xf0] sm:$0xff]
    %v1755 = vld [vmem:[%s848 + $0x100] sm:$0xff]
    %v1756 = vmul.f32 %v1740, %v1671
    %v1757 = vmul.f32 %v1741, %v1671
    %v1758 = vmul.f32 %v1742, %v1671
    %v1759 = vmul.f32 %v1743, %v1671
    %v1760 = vmul.f32 %v1744, %v1671
    %v1761 = vmul.f32 %v1745, %v1671
    %v1762 = vmul.f32 %v1746, %v1671
    %v1763 = vmul.f32 %v1747, %v1671
    %v1764 = vmul.f32 %v1748, %v1671
    %v1765 = vmul.f32 %v1749, %v1671
    %v1766 = vmul.f32 %v1750, %v1671
    %v1767 = vmul.f32 %v1751, %v1671
    %v1768 = vmul.f32 %v1752, %v1671
    %v1769 = vmul.f32 %v1753, %v1671
    %v1770 = vmul.f32 %v1754, %v1671
    %v1771 = vmul.f32 %v1755, %v1671
    %v1772 = vadd.f32 %v1756, %v1691
    %v1773 = vadd.f32 %v1757, %v1691
    %v1774 = vadd.f32 %v1758, %v1691
    %v1775 = vadd.f32 %v1759, %v1691
    %v1776 = vadd.f32 %v1760, %v1691
    %v1777 = vadd.f32 %v1761, %v1691
    %v1778 = vadd.f32 %v1762, %v1691
    %v1779 = vadd.f32 %v1763, %v1691
    %v1780 = vadd.f32 %v1764, %v1691
    %v1781 = vadd.f32 %v1765, %v1691
    %v1782 = vadd.f32 %v1766, %v1691
    %v1783 = vadd.f32 %v1767, %v1691
    %v1784 = vadd.f32 %v1768, %v1691
    %v1785 = vadd.f32 %v1769, %v1691
    %v1786 = vadd.f32 %v1770, %v1691
    %v1787 = vadd.f32 %v1771, %v1691
    %v1788 = vmax.f32 %v1772, 0.0
    %v1789 = vmax.f32 %v1773, 0.0
    %v1790 = vmax.f32 %v1774, 0.0
    %v1791 = vmax.f32 %v1775, 0.0
    %v1792 = vmax.f32 %v1776, 0.0
    %v1793 = vmax.f32 %v1777, 0.0
    %v1794 = vmax.f32 %v1778, 0.0
    %v1795 = vmax.f32 %v1779, 0.0
    %v1796 = vmax.f32 %v1780, 0.0
    %v1797 = vmax.f32 %v1781, 0.0
    %v1798 = vmax.f32 %v1782, 0.0
    %v1799 = vmax.f32 %v1783, 0.0
    %v1800 = vmax.f32 %v1784, 0.0
    %v1801 = vmax.f32 %v1785, 0.0
    %v1802 = vmax.f32 %v1786, 0.0
    %v1803 = vmax.f32 %v1787, 0.0
    %1804 = vst [vmem:[%s848] sm:$0xff] %v1788
    %1805 = vst [vmem:[%s848 + $0x10] sm:$0xff] %v1789
    %1806 = vst [vmem:[%s848 + $0x20] sm:$0xff] %v1790
    %1807 = vst [vmem:[%s848 + $0x30] sm:$0xff] %v1791
    %1808 = vst [vmem:[%s848 + $0x40] sm:$0xff] %v1792
    %1809 = vst [vmem:[%s848 + $0x50] sm:$0xff] %v1793
    %1810 = vst [vmem:[%s848 + $0x60] sm:$0xff] %v1794
    %1811 = vst [vmem:[%s848 + $0x70] sm:$0xff] %v1795
    %1812 = vst [vmem:[%s848 + $0x90] sm:$0xff] %v1796
    %1813 = vst [vmem:[%s848 + $0xa0] sm:$0xff] %v1797
    %1814 = vst [vmem:[%s848 + $0xb0] sm:$0xff] %v1798
    %1815 = vst [vmem:[%s848 + $0xc0] sm:$0xff] %v1799
    %1816 = vst [vmem:[%s848 + $0xd0] sm:$0xff] %v1800
    %1817 = vst [vmem:[%s848 + $0xe0] sm:$0xff] %v1801
    %1818 = vst [vmem:[%s848 + $0xf0] sm:$0xff] %v1802
    %1819 = vst [vmem:[%s848 + $0x100] sm:$0xff] %v1803
    %v1820 = vld [vmem:[%s865 + $0x1] sm:$0xff]
    %v1821 = vld [vmem:[%s865 + $0x11] sm:$0xff]
    %v1822 = vld [vmem:[%s865 + $0x21] sm:$0xff]
    %v1823 = vld [vmem:[%s865 + $0x31] sm:$0xff]
    %v1824 = vld [vmem:[%s865 + $0x41] sm:$0xff]
    %v1825 = vld [vmem:[%s865 + $0x51] sm:$0xff]
    %v1826 = vld [vmem:[%s865 + $0x61] sm:$0xff]
    %v1827 = vld [vmem:[%s865 + $0x71] sm:$0xff]
    %v1828 = vld [vmem:[%s865 + $0x91] sm:$0xff]
    %v1829 = vld [vmem:[%s865 + $0xa1] sm:$0xff]
    %v1830 = vld [vmem:[%s865 + $0xb1] sm:$0xff]
    %v1831 = vld [vmem:[%s865 + $0xc1] sm:$0xff]
    %v1832 = vld [vmem:[%s865 + $0xd1] sm:$0xff]
    %v1833 = vld [vmem:[%s865 + $0xe1] sm:$0xff]
    %v1834 = vld [vmem:[%s865 + $0xf1] sm:$0xff]
    %v1835 = vld [vmem:[%s865 + $0x101] sm:$0xff]
    %v1836 = vmul.f32 %v1820, %v1671
    %v1837 = vmul.f32 %v1821, %v1671
    %v1838 = vmul.f32 %v1822, %v1671
    %v1839 = vmul.f32 %v1823, %v1671
    %v1840 = vmul.f32 %v1824, %v1671
    %v1841 = vmul.f32 %v1825, %v1671
    %v1842 = vmul.f32 %v1826, %v1671
    %v1843 = vmul.f32 %v1827, %v1671
    %v1844 = vmul.f32 %v1828, %v1671
    %v1845 = vmul.f32 %v1829, %v1671
    %v1846 = vmul.f32 %v1830, %v1671
    %v1847 = vmul.f32 %v1831, %v1671
    %v1848 = vmul.f32 %v1832, %v1671
    %v1849 = vmul.f32 %v1833, %v1671
    %v1850 = vmul.f32 %v1834, %v1671
    %v1851 = vmul.f32 %v1835, %v1671
    %v1852 = vadd.f32 %v1836, %v1691
    %v1853 = vadd.f32 %v1837, %v1691
    %v1854 = vadd.f32 %v1838, %v1691
    %v1855 = vadd.f32 %v1839, %v1691
    %v1856 = vadd.f32 %v1840, %v1691
    %v1857 = vadd.f32 %v1841, %v1691
    %v1858 = vadd.f32 %v1842, %v1691
    %v1859 = vadd.f32 %v1843, %v1691
    %v1860 = vadd.f32 %v1844, %v1691
    %v1861 = vadd.f32 %v1845, %v1691
    %v1862 = vadd.f32 %v1846, %v1691
    %v1863 = vadd.f32 %v1847, %v1691
    %v1864 = vadd.f32 %v1848, %v1691
    %v1865 = vadd.f32 %v1849, %v1691
    %v1866 = vadd.f32 %v1850, %v1691
    %v1867 = vadd.f32 %v1851, %v1691
    %v1868 = vmax.f32 %v1852, 0.0
    %v1869 = vmax.f32 %v1853, 0.0
    %v1870 = vmax.f32 %v1854, 0.0
    %v1871 = vmax.f32 %v1855, 0.0
    %v1872 = vmax.f32 %v1856, 0.0
    %v1873 = vmax.f32 %v1857, 0.0
    %v1874 = vmax.f32 %v1858, 0.0
    %v1875 = vmax.f32 %v1859, 0.0
    %v1876 = vmax.f32 %v1860, 0.0
    %v1877 = vmax.f32 %v1861, 0.0
    %v1878 = vmax.f32 %v1862, 0.0
    %v1879 = vmax.f32 %v1863, 0.0
    %v1880 = vmax.f32 %v1864, 0.0
    %v1881 = vmax.f32 %v1865, 0.0
    %v1882 = vmax.f32 %v1866, 0.0
    %v1883 = vmax.f32 %v1867, 0.0
    %1884 = vst [vmem:[%s865 + $0x1] sm:$0xff] %v1868
    %1885 = vst [vmem:[%s865 + $0x11] sm:$0xff] %v1869
    %1886 = vst [vmem:[%s865 + $0x21] sm:$0xff] %v1870
    %1887 = vst [vmem:[%s865 + $0x31] sm:$0xff] %v1871
    %1888 = vst [vmem:[%s865 + $0x41] sm:$0xff] %v1872
    %1889 = vst [vmem:[%s865 + $0x51] sm:$0xff] %v1873
    %1890 = vst [vmem:[%s865 + $0x61] sm:$0xff] %v1874
    %1891 = vst [vmem:[%s865 + $0x71] sm:$0xff] %v1875
    %1892 = vst [vmem:[%s865 + $0x91] sm:$0xff] %v1876
    %1893 = vst [vmem:[%s865 + $0xa1] sm:$0xff] %v1877
    %1894 = vst [vmem:[%s865 + $0xb1] sm:$0xff] %v1878
    %1895 = vst [vmem:[%s865 + $0xc1] sm:$0xff] %v1879
    %1896 = vst [vmem:[%s865 + $0xd1] sm:$0xff] %v1880
    %1897 = vst [vmem:[%s865 + $0xe1] sm:$0xff] %v1881
    %1898 = vst [vmem:[%s865 + $0xf1] sm:$0xff] %v1882
    %1899 = vst [vmem:[%s865 + $0x101] sm:$0xff] %v1883
    %v1900 = vld [vmem:[%s1364] sm:$0xff]
    %v1901 = vld [vmem:[%s1364 + $0x10] sm:$0xff]
    %v1902 = vld [vmem:[%s1364 + $0x20] sm:$0xff]
    %v1903 = vld [vmem:[%s1364 + $0x30] sm:$0xff]
    %v1904 = vld [vmem:[%s1364 + $0x40] sm:$0xff]
    %v1905 = vld [vmem:[%s1364 + $0x50] sm:$0xff]
    %v1906 = vld [vmem:[%s1364 + $0x60] sm:$0xff]
    %v1907 = vld [vmem:[%s1364 + $0x70] sm:$0xff]
    %v1908 = vld [vmem:[%s1364 + $0x90] sm:$0xff]
    %v1909 = vld [vmem:[%s1364 + $0xa0] sm:$0xff]
    %v1910 = vld [vmem:[%s1364 + $0xb0] sm:$0xff]
    %v1911 = vld [vmem:[%s1364 + $0xc0] sm:$0xff]
    %v1912 = vld [vmem:[%s1364 + $0xd0] sm:$0xff]
    %v1913 = vld [vmem:[%s1364 + $0xe0] sm:$0xff]
    %v1914 = vld [vmem:[%s1364 + $0xf0] sm:$0xff]
    %v1915 = vld [vmem:[%s1364 + $0x100] sm:$0xff]
    %v1916 = vmul.f32 %v1900, %v1671
    %v1917 = vmul.f32 %v1901, %v1671
    %v1918 = vmul.f32 %v1902, %v1671
    %v1919 = vmul.f32 %v1903, %v1671
    %v1920 = vmul.f32 %v1904, %v1671
    %v1921 = vmul.f32 %v1905, %v1671
    %v1922 = vmul.f32 %v1906, %v1671
    %v1923 = vmul.f32 %v1907, %v1671
    %v1924 = vmul.f32 %v1908, %v1671
    %v1925 = vmul.f32 %v1909, %v1671
    %v1926 = vmul.f32 %v1910, %v1671
    %v1927 = vmul.f32 %v1911, %v1671
    %v1928 = vmul.f32 %v1912, %v1671
    %v1929 = vmul.f32 %v1913, %v1671
    %v1930 = vmul.f32 %v1914, %v1671
    %v1931 = vmul.f32 %v1915, %v1671
    %v1932 = vadd.f32 %v1916, %v1691
    %v1933 = vadd.f32 %v1917, %v1691
    %v1934 = vadd.f32 %v1918, %v1691
    %v1935 = vadd.f32 %v1919, %v1691
    %v1936 = vadd.f32 %v1920, %v1691
    %v1937 = vadd.f32 %v1921, %v1691
    %v1938 = vadd.f32 %v1922, %v1691
    %v1939 = vadd.f32 %v1923, %v1691
    %v1940 = vadd.f32 %v1924, %v1691
    %v1941 = vadd.f32 %v1925, %v1691
    %v1942 = vadd.f32 %v1926, %v1691
    %v1943 = vadd.f32 %v1927, %v1691
    %v1944 = vadd.f32 %v1928, %v1691
    %v1945 = vadd.f32 %v1929, %v1691
    %v1946 = vadd.f32 %v1930, %v1691
    %v1947 = vadd.f32 %v1931, %v1691
    %v1948 = vmax.f32 %v1932, 0.0
    %v1949 = vmax.f32 %v1933, 0.0
    %v1950 = vmax.f32 %v1934, 0.0
    %v1951 = vmax.f32 %v1935, 0.0
    %v1952 = vmax.f32 %v1936, 0.0
    %v1953 = vmax.f32 %v1937, 0.0
    %v1954 = vmax.f32 %v1938, 0.0
    %v1955 = vmax.f32 %v1939, 0.0
    %v1956 = vmax.f32 %v1940, 0.0
    %v1957 = vmax.f32 %v1941, 0.0
    %v1958 = vmax.f32 %v1942, 0.0
    %v1959 = vmax.f32 %v1943, 0.0
    %v1960 = vmax.f32 %v1944, 0.0
    %v1961 = vmax.f32 %v1945, 0.0
    %v1962 = vmax.f32 %v1946, 0.0
    %v1963 = vmax.f32 %v1947, 0.0
    %1964 = vst [vmem:[%s1364] sm:$0xff] %v1948
    %1965 = vst [vmem:[%s1364 + $0x10] sm:$0xff] %v1949
    %1966 = vst [vmem:[%s1364 + $0x20] sm:$0xff] %v1950
    %1967 = vst [vmem:[%s1364 + $0x30] sm:$0xff] %v1951
    %1968 = vst [vmem:[%s1364 + $0x40] sm:$0xff] %v1952
    %1969 = vst [vmem:[%s1364 + $0x50] sm:$0xff] %v1953
    %1970 = vst [vmem:[%s1364 + $0x60] sm:$0xff] %v1954
    %1971 = vst [vmem:[%s1364 + $0x70] sm:$0xff] %v1955
    %1972 = vst [vmem:[%s1364 + $0x90] sm:$0xff] %v1956
    %1973 = vst [vmem:[%s1364 + $0xa0] sm:$0xff] %v1957
    %1974 = vst [vmem:[%s1364 + $0xb0] sm:$0xff] %v1958
    %1975 = vst [vmem:[%s1364 + $0xc0] sm:$0xff] %v1959
    %1976 = vst [vmem:[%s1364 + $0xd0] sm:$0xff] %v1960
    %1977 = vst [vmem:[%s1364 + $0xe0] sm:$0xff] %v1961
    %1978 = vst [vmem:[%s1364 + $0xf0] sm:$0xff] %v1962
    %1979 = vst [vmem:[%s1364 + $0x100] sm:$0xff] %v1963
    %v1980 = vld [vmem:[#allocation2] sm:$0xff]
    %v1981 = vld [vmem:[#allocation2 + $0x10] sm:$0xff]
    %v1982 = vld [vmem:[#allocation2 + $0x20] sm:$0xff]
    %v1983 = vld [vmem:[#allocation2 + $0x30] sm:$0xff]
    %v1984 = vld [vmem:[#allocation2 + $0x40] sm:$0xff]
    %v1985 = vld [vmem:[#allocation2 + $0x50] sm:$0xff]
    %v1986 = vld [vmem:[#allocation2 + $0x60] sm:$0xff]
    %v1987 = vld [vmem:[#allocation2 + $0x70] sm:$0xff]
    %v1988 = vld [vmem:[#allocation2 + $0x90] sm:$0xff]
    %v1989 = vld [vmem:[#allocation2 + $0xa0] sm:$0xff]
    %v1990 = vld [vmem:[#allocation2 + $0xb0] sm:$0xff]
    %v1991 = vld [vmem:[#allocation2 + $0xc0] sm:$0xff]
    %v1992 = vld [vmem:[#allocation2 + $0xd0] sm:$0xff]
    %v1993 = vld [vmem:[#allocation2 + $0xe0] sm:$0xff]
    %v1994 = vld [vmem:[#allocation2 + $0xf0] sm:$0xff]
    %v1995 = vld [vmem:[#allocation2 + $0x100] sm:$0xff]
    %v1996 = vpack.c.bf16 %v1981, %v1980
    %v1997 = vpack.c.bf16 %v1983, %v1982
    %v1998 = vpack.c.bf16 %v1985, %v1984
    %v1999 = vpack.c.bf16 %v1987, %v1986
    %v2000 = vpack.c.bf16 %v1989, %v1988
    %v2001 = vpack.c.bf16 %v1991, %v1990
    %v2002 = vpack.c.bf16 %v1993, %v1992
    %v2003 = vpack.c.bf16 %v1995, %v1994
    %v2004 = vld [vmem:[%s2] sm:$0xf]
    %v2005 = vld [vmem:[%s2 + $0x4] sm:$0xf]
    %v2006 = vld [vmem:[%s2 + $0x8] sm:$0xf]
    %v2007 = vld [vmem:[%s2 + $0xc] sm:$0xf]
    %v2008 = vld [vmem:[%s2 + $0x10] sm:$0xf]
    %v2009 = vld [vmem:[%s2 + $0x14] sm:$0xf]
    %v2010 = vld [vmem:[%s2 + $0x18] sm:$0xf]
    %v2011 = vld [vmem:[%s2 + $0x1c] sm:$0xf]
    %v2012 = vld [vmem:[%s2 + $0x20] sm:$0xf]
    %v2013 = vld [vmem:[%s2 + $0x24] sm:$0xf]
    %v2014 = vld [vmem:[%s2 + $0x28] sm:$0xf]
    %v2015 = vld [vmem:[%s2 + $0x2c] sm:$0xf]
    %v2016 = vld [vmem:[%s2 + $0x30] sm:$0xf]
    %v2017 = vld [vmem:[%s2 + $0x34] sm:$0xf]
    %v2018 = vld [vmem:[%s2 + $0x38] sm:$0xf]
    %v2019 = vld [vmem:[%s2 + $0x3c] sm:$0xf]
    %v2020 = vld [vmem:[%s589] sm:$0xff]
    %v2021 = vld [vmem:[%s589 + $0x10] sm:$0xff]
    %v2022 = vld [vmem:[%s589 + $0x20] sm:$0xff]
    %v2023 = vld [vmem:[%s589 + $0x30] sm:$0xff]
    %v2024 = vld [vmem:[%s589 + $0x40] sm:$0xff]
    %v2025 = vld [vmem:[%s589 + $0x50] sm:$0xff]
    %v2026 = vld [vmem:[%s589 + $0x60] sm:$0xff]
    %v2027 = vld [vmem:[%s589 + $0x70] sm:$0xff]
    %v2028 = vld [vmem:[%s589 + $0x90] sm:$0xff]
    %v2029 = vld [vmem:[%s589 + $0xa0] sm:$0xff]
    %v2030 = vld [vmem:[%s589 + $0xb0] sm:$0xff]
    %v2031 = vld [vmem:[%s589 + $0xc0] sm:$0xff]
    %v2032 = vld [vmem:[%s589 + $0xd0] sm:$0xff]
    %v2033 = vld [vmem:[%s589 + $0xe0] sm:$0xff]
    %v2034 = vld [vmem:[%s589 + $0xf0] sm:$0xff]
    %v2035 = vld [vmem:[%s589 + $0x100] sm:$0xff]
    %v2036 = vpack.c.bf16 %v2021, %v2020
    %v2037 = vpack.c.bf16 %v2023, %v2022
    %v2038 = vpack.c.bf16 %v2025, %v2024
    %v2039 = vpack.c.bf16 %v2027, %v2026
    %v2040 = vpack.c.bf16 %v2029, %v2028
    %v2041 = vpack.c.bf16 %v2031, %v2030
    %v2042 = vpack.c.bf16 %v2033, %v2032
    %v2043 = vpack.c.bf16 %v2035, %v2034
    %s2044 = scalar_lea.vmem %s2, 64
    %v2045 = vld [vmem:[%s2044] sm:$0xf]
    %v2046 = vld [vmem:[%s2044 + $0x4] sm:$0xf]
    %v2047 = vld [vmem:[%s2044 + $0x8] sm:$0xf]
    %v2048 = vld [vmem:[%s2044 + $0xc] sm:$0xf]
    %v2049 = vld [vmem:[%s2044 + $0x10] sm:$0xf]
    %v2050 = vld [vmem:[%s2044 + $0x14] sm:$0xf]
    %v2051 = vld [vmem:[%s2044 + $0x18] sm:$0xf]
    %v2052 = vld [vmem:[%s2044 + $0x1c] sm:$0xf]
    %v2053 = vld [vmem:[%s2044 + $0x20] sm:$0xf]
    %v2054 = vld [vmem:[%s2044 + $0x24] sm:$0xf]
    %v2055 = vld [vmem:[%s2044 + $0x28] sm:$0xf]
    %v2056 = vld [vmem:[%s2044 + $0x2c] sm:$0xf]
    %v2057 = vld [vmem:[%s2044 + $0x30] sm:$0xf]
    %v2058 = vld [vmem:[%s2044 + $0x34] sm:$0xf]
    %v2059 = vld [vmem:[%s2044 + $0x38] sm:$0xf]
    %v2060 = vld [vmem:[%s2044 + $0x3c] sm:$0xf]
    %v2077 = vunpack.c.l.b16 %v2045
    %v2078 = vunpack.c.l.b16 %v2046
    %v2079 = vunpack.c.l.b16 %v2047
    %v2080 = vunpack.c.l.b16 %v2048
    %v2081 = vunpack.c.l.b16 %v2049
    %v2082 = vunpack.c.l.b16 %v2050
    %v2083 = vunpack.c.l.b16 %v2051
    %v2084 = vunpack.c.l.b16 %v2052
    %v2085 = vunpack.c.l.b16 %v2053
    %v2086 = vunpack.c.l.b16 %v2054
    %v2087 = vunpack.c.l.b16 %v2055
    %v2088 = vunpack.c.l.b16 %v2056
    %v2089 = vunpack.c.l.b16 %v2057
    %v2090 = vunpack.c.l.b16 %v2058
    %v2091 = vunpack.c.l.b16 %v2059
    %v2092 = vunpack.c.l.b16 %v2060
    %v2093 = vpack.c.b16 %v2078, %v2077
    %v2094 = vpack.c.b16 %v2080, %v2079
    %v2095 = vpack.c.b16 %v2082, %v2081
    %v2096 = vpack.c.b16 %v2084, %v2083
    %v2097 = vpack.c.b16 %v2086, %v2085
    %v2098 = vpack.c.b16 %v2088, %v2087
    %v2099 = vpack.c.b16 %v2090, %v2089
    %v2100 = vpack.c.b16 %v2092, %v2091
    %2109 = vmatprep.subr.bf16.mxu0 0
    %2110 = vmatpush1.bf16.msra.mxu0 %v2100
    %2111 = vmatprep.subr.bf16.mxu0 0
    %2112 = vmatpush1.bf16.msra.mxu0 %v2099
    %2113 = vmatprep.subr.bf16.mxu0 0
    %2114 = vmatpush1.bf16.msra.mxu0 %v2098
    %2115 = vmatprep.subr.bf16.mxu0 0
    %2116 = vmatpush1.bf16.msra.mxu0 %v2097
    %2117 = vmatprep.subr.bf16.mxu0 0
    %2118 = vmatpush1.bf16.msra.mxu0 %v2096
    %2119 = vmatprep.subr.bf16.mxu0 0
    %2120 = vmatpush1.bf16.msra.mxu0 %v2095
    %2121 = vmatprep.subr.bf16.mxu0 0
    %2122 = vmatpush1.bf16.msra.mxu0 %v2094
    %2123 = vmatprep.subr.bf16.mxu0 0
    %2124 = vmatpush1.bf16.msra.mxu0 %v2093
    %2125 = vmatprep.subr.bf16.mxu0 0
    %2126 = vmatpush2.bf16.msra.mxu0 0
    %2127 = vmatprep.subr.bf16.mxu0 0
    %2128 = vmatpush2.bf16.msra.mxu0 0
    %2129 = vmatprep.subr.bf16.mxu0 0
    %2130 = vmatpush2.bf16.msra.mxu0 0
    %2131 = vmatprep.subr.bf16.mxu0 0
    %2132 = vmatpush2.bf16.msra.mxu0 0
    %2133 = vmatprep.subr.bf16.mxu0 0
    %2134 = vmatpush2.bf16.msra.mxu0 0
    %2135 = vmatprep.subr.bf16.mxu0 0
    %2136 = vmatpush2.bf16.msra.mxu0 0
    %2137 = vmatprep.subr.bf16.mxu0 0
    %2138 = vmatpush2.bf16.msra.mxu0 0
    %2139 = vmatprep.subr.bf16.mxu0 0
    %2140 = vmatpush2.bf16.msra.mxu0 0
    %2141 = vmatprep.mubr.bf16.mxu0 0
    %2142 = vmatmul.mubr.bf16.gmra.mxu0 %v2036
    %v2143 = vpop.f32.mrf.mxu0
    %v2144 = vadd.f32 0.0, %v2143
    %v2145 = vpop.f32.mrf.mxu0
    %v2146 = vpop.f32.mrf.mxu0
    %v2147 = vadd.f32 0.0, %v2146
    %v2148 = vpop.f32.mrf.mxu0
    %2149 = vmatprep.mubr.bf16.mxu0 0
    %2150 = vmatmul.mubr.bf16.gmra.mxu0 %v2037
    %v2151 = vpop.f32.mrf.mxu0
    %v2152 = vadd.f32 0.0, %v2151
    %v2153 = vpop.f32.mrf.mxu0
    %v2154 = vpop.f32.mrf.mxu0
    %v2155 = vadd.f32 0.0, %v2154
    %v2156 = vpop.f32.mrf.mxu0
    %2157 = vmatprep.mubr.bf16.mxu0 0
    %2158 = vmatmul.mubr.bf16.gmra.mxu0 %v2038
    %v2159 = vpop.f32.mrf.mxu0
    %v2160 = vadd.f32 0.0, %v2159
    %v2161 = vpop.f32.mrf.mxu0
    %v2162 = vpop.f32.mrf.mxu0
    %v2163 = vadd.f32 0.0, %v2162
    %v2164 = vpop.f32.mrf.mxu0
    %2165 = vmatprep.mubr.bf16.mxu0 0
    %2166 = vmatmul.mubr.bf16.gmra.mxu0 %v2039
    %v2167 = vpop.f32.mrf.mxu0
    %v2168 = vadd.f32 0.0, %v2167
    %v2169 = vpop.f32.mrf.mxu0
    %v2170 = vpop.f32.mrf.mxu0
    %v2171 = vadd.f32 0.0, %v2170
    %v2172 = vpop.f32.mrf.mxu0
    %2173 = vmatprep.mubr.bf16.mxu0 0
    %2174 = vmatmul.mubr.bf16.gmra.mxu0 %v2040
    %v2175 = vpop.f32.mrf.mxu0
    %v2176 = vadd.f32 0.0, %v2175
    %v2177 = vpop.f32.mrf.mxu0
    %v2178 = vpop.f32.mrf.mxu0
    %v2179 = vadd.f32 0.0, %v2178
    %v2180 = vpop.f32.mrf.mxu0
    %2181 = vmatprep.mubr.bf16.mxu0 0
    %2182 = vmatmul.mubr.bf16.gmra.mxu0 %v2041
    %v2183 = vpop.f32.mrf.mxu0
    %v2184 = vadd.f32 0.0, %v2183
    %v2185 = vpop.f32.mrf.mxu0
    %v2186 = vpop.f32.mrf.mxu0
    %v2187 = vadd.f32 0.0, %v2186
    %v2188 = vpop.f32.mrf.mxu0
    %2189 = vmatprep.mubr.bf16.mxu0 0
    %2190 = vmatmul.mubr.bf16.gmra.mxu0 %v2042
    %v2191 = vpop.f32.mrf.mxu0
    %v2192 = vadd.f32 0.0, %v2191
    %v2193 = vpop.f32.mrf.mxu0
    %v2194 = vpop.f32.mrf.mxu0
    %v2195 = vadd.f32 0.0, %v2194
    %v2196 = vpop.f32.mrf.mxu0
    %2197 = vmatprep.mubr.bf16.mxu0 0
    %2198 = vmatmul.mubr.bf16.gmra.mxu0 %v2043
    %v2199 = vpop.f32.mrf.mxu0
    %v2200 = vadd.f32 0.0, %v2199
    %v2201 = vpop.f32.mrf.mxu0
    %v2202 = vpop.f32.mrf.mxu0
    %v2203 = vadd.f32 0.0, %v2202
    %v2204 = vpop.f32.mrf.mxu0
    %2205 = vdwg.mxu0
    %v2222 = vunpack.c.l.b16 %v2004
    %v2223 = vunpack.c.l.b16 %v2005
    %v2224 = vunpack.c.l.b16 %v2006
    %v2225 = vunpack.c.l.b16 %v2007
    %v2226 = vunpack.c.l.b16 %v2008
    %v2227 = vunpack.c.l.b16 %v2009
    %v2228 = vunpack.c.l.b16 %v2010
    %v2229 = vunpack.c.l.b16 %v2011
    %v2230 = vunpack.c.l.b16 %v2012
    %v2231 = vunpack.c.l.b16 %v2013
    %v2232 = vunpack.c.l.b16 %v2014
    %v2233 = vunpack.c.l.b16 %v2015
    %v2234 = vunpack.c.l.b16 %v2016
    %v2235 = vunpack.c.l.b16 %v2017
    %v2236 = vunpack.c.l.b16 %v2018
    %v2237 = vunpack.c.l.b16 %v2019
    %v2238 = vpack.c.b16 %v2223, %v2222
    %v2239 = vpack.c.b16 %v2225, %v2224
    %v2240 = vpack.c.b16 %v2227, %v2226
    %v2241 = vpack.c.b16 %v2229, %v2228
    %v2242 = vpack.c.b16 %v2231, %v2230
    %v2243 = vpack.c.b16 %v2233, %v2232
    %v2244 = vpack.c.b16 %v2235, %v2234
    %v2245 = vpack.c.b16 %v2237, %v2236
    %2254 = vmatprep.subr.bf16.mxu0 0
    %2255 = vmatpush1.bf16.msra.mxu0 %v2245
    %2256 = vmatprep.subr.bf16.mxu0 0
    %2257 = vmatpush1.bf16.msra.mxu0 %v2244
    %2258 = vmatprep.subr.bf16.mxu0 0
    %2259 = vmatpush1.bf16.msra.mxu0 %v2243
    %2260 = vmatprep.subr.bf16.mxu0 0
    %2261 = vmatpush1.bf16.msra.mxu0 %v2242
    %2262 = vmatprep.subr.bf16.mxu0 0
    %2263 = vmatpush1.bf16.msra.mxu0 %v2241
    %2264 = vmatprep.subr.bf16.mxu0 0
    %2265 = vmatpush1.bf16.msra.mxu0 %v2240
    %2266 = vmatprep.subr.bf16.mxu0 0
    %2267 = vmatpush1.bf16.msra.mxu0 %v2239
    %2268 = vmatprep.subr.bf16.mxu0 0
    %2269 = vmatpush1.bf16.msra.mxu0 %v2238
    %2270 = vmatprep.subr.bf16.mxu0 0
    %2271 = vmatpush2.bf16.msra.mxu0 0
    %2272 = vmatprep.subr.bf16.mxu0 0
    %2273 = vmatpush2.bf16.msra.mxu0 0
    %2274 = vmatprep.subr.bf16.mxu0 0
    %2275 = vmatpush2.bf16.msra.mxu0 0
    %2276 = vmatprep.subr.bf16.mxu0 0
    %2277 = vmatpush2.bf16.msra.mxu0 0
    %2278 = vmatprep.subr.bf16.mxu0 0
    %2279 = vmatpush2.bf16.msra.mxu0 0
    %2280 = vmatprep.subr.bf16.mxu0 0
    %2281 = vmatpush2.bf16.msra.mxu0 0
    %2282 = vmatprep.subr.bf16.mxu0 0
    %2283 = vmatpush2.bf16.msra.mxu0 0
    %2284 = vmatprep.subr.bf16.mxu0 0
    %2285 = vmatpush2.bf16.msra.mxu0 0
    %2286 = vmatprep.mubr.bf16.mxu0 0
    %2287 = vmatmul.mubr.bf16.gmra.mxu0 %v1996
    %v2288 = vpop.f32.mrf.mxu0
    %v2289 = vadd.f32 %v2144, %v2288
    %v2290 = vpop.f32.mrf.mxu0
    %v2291 = vpop.f32.mrf.mxu0
    %v2292 = vadd.f32 %v2147, %v2291
    %v2293 = vpop.f32.mrf.mxu0
    %2294 = vmatprep.mubr.bf16.mxu0 0
    %2295 = vmatmul.mubr.bf16.gmra.mxu0 %v1997
    %v2296 = vpop.f32.mrf.mxu0
    %v2297 = vadd.f32 %v2152, %v2296
    %v2298 = vpop.f32.mrf.mxu0
    %v2299 = vpop.f32.mrf.mxu0
    %v2300 = vadd.f32 %v2155, %v2299
    %v2301 = vpop.f32.mrf.mxu0
    %2302 = vmatprep.mubr.bf16.mxu0 0
    %2303 = vmatmul.mubr.bf16.gmra.mxu0 %v1998
    %v2304 = vpop.f32.mrf.mxu0
    %v2305 = vadd.f32 %v2160, %v2304
    %v2306 = vpop.f32.mrf.mxu0
    %v2307 = vpop.f32.mrf.mxu0
    %v2308 = vadd.f32 %v2163, %v2307
    %v2309 = vpop.f32.mrf.mxu0
    %2310 = vmatprep.mubr.bf16.mxu0 0
    %2311 = vmatmul.mubr.bf16.gmra.mxu0 %v1999
    %v2312 = vpop.f32.mrf.mxu0
    %v2313 = vadd.f32 %v2168, %v2312
    %v2314 = vpop.f32.mrf.mxu0
    %v2315 = vpop.f32.mrf.mxu0
    %v2316 = vadd.f32 %v2171, %v2315
    %v2317 = vpop.f32.mrf.mxu0
    %2318 = vmatprep.mubr.bf16.mxu0 0
    %2319 = vmatmul.mubr.bf16.gmra.mxu0 %v2000
    %v2320 = vpop.f32.mrf.mxu0
    %v2321 = vadd.f32 %v2176, %v2320
    %v2322 = vpop.f32.mrf.mxu0
    %v2323 = vpop.f32.mrf.mxu0
    %v2324 = vadd.f32 %v2179, %v2323
    %v2325 = vpop.f32.mrf.mxu0
    %2326 = vmatprep.mubr.bf16.mxu0 0
    %2327 = vmatmul.mubr.bf16.gmra.mxu0 %v2001
    %v2328 = vpop.f32.mrf.mxu0
    %v2329 = vadd.f32 %v2184, %v2328
    %v2330 = vpop.f32.mrf.mxu0
    %v2331 = vpop.f32.mrf.mxu0
    %v2332 = vadd.f32 %v2187, %v2331
    %v2333 = vpop.f32.mrf.mxu0
    %2334 = vmatprep.mubr.bf16.mxu0 0
    %2335 = vmatmul.mubr.bf16.gmra.mxu0 %v2002
    %v2336 = vpop.f32.mrf.mxu0
    %v2337 = vadd.f32 %v2192, %v2336
    %v2338 = vpop.f32.mrf.mxu0
    %v2339 = vpop.f32.mrf.mxu0
    %v2340 = vadd.f32 %v2195, %v2339
    %v2341 = vpop.f32.mrf.mxu0
    %2342 = vmatprep.mubr.bf16.mxu0 0
    %2343 = vmatmul.mubr.bf16.gmra.mxu0 %v2003
    %v2344 = vpop.f32.mrf.mxu0
    %v2345 = vadd.f32 %v2200, %v2344
    %v2346 = vpop.f32.mrf.mxu0
    %v2347 = vpop.f32.mrf.mxu0
    %v2348 = vadd.f32 %v2203, %v2347
    %v2349 = vpop.f32.mrf.mxu0
    %2350 = vdwg.mxu0
    %v2351 = vld [vmem:[#allocation2 + $0x1] sm:$0xff]
    %v2352 = vld [vmem:[#allocation2 + $0x11] sm:$0xff]
    %v2353 = vld [vmem:[#allocation2 + $0x21] sm:$0xff]
    %v2354 = vld [vmem:[#allocation2 + $0x31] sm:$0xff]
    %v2355 = vld [vmem:[#allocation2 + $0x41] sm:$0xff]
    %v2356 = vld [vmem:[#allocation2 + $0x51] sm:$0xff]
    %v2357 = vld [vmem:[#allocation2 + $0x61] sm:$0xff]
    %v2358 = vld [vmem:[#allocation2 + $0x71] sm:$0xff]
    %v2359 = vld [vmem:[#allocation2 + $0x91] sm:$0xff]
    %v2360 = vld [vmem:[#allocation2 + $0xa1] sm:$0xff]
    %v2361 = vld [vmem:[#allocation2 + $0xb1] sm:$0xff]
    %v2362 = vld [vmem:[#allocation2 + $0xc1] sm:$0xff]
    %v2363 = vld [vmem:[#allocation2 + $0xd1] sm:$0xff]
    %v2364 = vld [vmem:[#allocation2 + $0xe1] sm:$0xff]
    %v2365 = vld [vmem:[#allocation2 + $0xf1] sm:$0xff]
    %v2366 = vld [vmem:[#allocation2 + $0x101] sm:$0xff]
    %v2367 = vpack.c.bf16 %v2352, %v2351
    %v2368 = vpack.c.bf16 %v2354, %v2353
    %v2369 = vpack.c.bf16 %v2356, %v2355
    %v2370 = vpack.c.bf16 %v2358, %v2357
    %v2371 = vpack.c.bf16 %v2360, %v2359
    %v2372 = vpack.c.bf16 %v2362, %v2361
    %v2373 = vpack.c.bf16 %v2364, %v2363
    %v2374 = vpack.c.bf16 %v2366, %v2365
    %s2375 = scalar_lea.vmem %s2, 128
    %v2376 = vld [vmem:[%s2375] sm:$0xf]
    %v2377 = vld [vmem:[%s2375 + $0x4] sm:$0xf]
    %v2378 = vld [vmem:[%s2375 + $0x8] sm:$0xf]
    %v2379 = vld [vmem:[%s2375 + $0xc] sm:$0xf]
    %v2380 = vld [vmem:[%s2375 + $0x10] sm:$0xf]
    %v2381 = vld [vmem:[%s2375 + $0x14] sm:$0xf]
    %v2382 = vld [vmem:[%s2375 + $0x18] sm:$0xf]
    %v2383 = vld [vmem:[%s2375 + $0x1c] sm:$0xf]
    %v2384 = vld [vmem:[%s2375 + $0x20] sm:$0xf]
    %v2385 = vld [vmem:[%s2375 + $0x24] sm:$0xf]
    %v2386 = vld [vmem:[%s2375 + $0x28] sm:$0xf]
    %v2387 = vld [vmem:[%s2375 + $0x2c] sm:$0xf]
    %v2388 = vld [vmem:[%s2375 + $0x30] sm:$0xf]
    %v2389 = vld [vmem:[%s2375 + $0x34] sm:$0xf]
    %v2390 = vld [vmem:[%s2375 + $0x38] sm:$0xf]
    %v2391 = vld [vmem:[%s2375 + $0x3c] sm:$0xf]
    %v2408 = vunpack.c.l.b16 %v2376
    %v2409 = vunpack.c.l.b16 %v2377
    %v2410 = vunpack.c.l.b16 %v2378
    %v2411 = vunpack.c.l.b16 %v2379
    %v2412 = vunpack.c.l.b16 %v2380
    %v2413 = vunpack.c.l.b16 %v2381
    %v2414 = vunpack.c.l.b16 %v2382
    %v2415 = vunpack.c.l.b16 %v2383
    %v2416 = vunpack.c.l.b16 %v2384
    %v2417 = vunpack.c.l.b16 %v2385
    %v2418 = vunpack.c.l.b16 %v2386
    %v2419 = vunpack.c.l.b16 %v2387
    %v2420 = vunpack.c.l.b16 %v2388
    %v2421 = vunpack.c.l.b16 %v2389
    %v2422 = vunpack.c.l.b16 %v2390
    %v2423 = vunpack.c.l.b16 %v2391
    %v2424 = vpack.c.b16 %v2409, %v2408
    %v2425 = vpack.c.b16 %v2411, %v2410
    %v2426 = vpack.c.b16 %v2413, %v2412
    %v2427 = vpack.c.b16 %v2415, %v2414
    %v2428 = vpack.c.b16 %v2417, %v2416
    %v2429 = vpack.c.b16 %v2419, %v2418
    %v2430 = vpack.c.b16 %v2421, %v2420
    %v2431 = vpack.c.b16 %v2423, %v2422
    %2440 = vmatprep.subr.bf16.mxu0 0
    %2441 = vmatpush1.bf16.msra.mxu0 %v2431
    %2442 = vmatprep.subr.bf16.mxu0 0
    %2443 = vmatpush1.bf16.msra.mxu0 %v2430
    %2444 = vmatprep.subr.bf16.mxu0 0
    %2445 = vmatpush1.bf16.msra.mxu0 %v2429
    %2446 = vmatprep.subr.bf16.mxu0 0
    %2447 = vmatpush1.bf16.msra.mxu0 %v2428
    %2448 = vmatprep.subr.bf16.mxu0 0
    %2449 = vmatpush1.bf16.msra.mxu0 %v2427
    %2450 = vmatprep.subr.bf16.mxu0 0
    %2451 = vmatpush1.bf16.msra.mxu0 %v2426
    %2452 = vmatprep.subr.bf16.mxu0 0
    %2453 = vmatpush1.bf16.msra.mxu0 %v2425
    %2454 = vmatprep.subr.bf16.mxu0 0
    %2455 = vmatpush1.bf16.msra.mxu0 %v2424
    %2456 = vmatprep.subr.bf16.mxu0 0
    %2457 = vmatpush2.bf16.msra.mxu0 0
    %2458 = vmatprep.subr.bf16.mxu0 0
    %2459 = vmatpush2.bf16.msra.mxu0 0
    %2460 = vmatprep.subr.bf16.mxu0 0
    %2461 = vmatpush2.bf16.msra.mxu0 0
    %2462 = vmatprep.subr.bf16.mxu0 0
    %2463 = vmatpush2.bf16.msra.mxu0 0
    %2464 = vmatprep.subr.bf16.mxu0 0
    %2465 = vmatpush2.bf16.msra.mxu0 0
    %2466 = vmatprep.subr.bf16.mxu0 0
    %2467 = vmatpush2.bf16.msra.mxu0 0
    %2468 = vmatprep.subr.bf16.mxu0 0
    %2469 = vmatpush2.bf16.msra.mxu0 0
    %2470 = vmatprep.subr.bf16.mxu0 0
    %2471 = vmatpush2.bf16.msra.mxu0 0
    %2472 = vmatprep.mubr.bf16.mxu0 0
    %2473 = vmatmul.mubr.bf16.gmra.mxu0 %v2367
    %v2474 = vpop.f32.mrf.mxu0
    %v2475 = vadd.f32 0.0, %v2474
    %v2476 = vpop.f32.mrf.mxu0
    %v2477 = vpop.f32.mrf.mxu0
    %v2478 = vadd.f32 0.0, %v2477
    %v2479 = vpop.f32.mrf.mxu0
    %2480 = vmatprep.mubr.bf16.mxu0 0
    %2481 = vmatmul.mubr.bf16.gmra.mxu0 %v2368
    %v2482 = vpop.f32.mrf.mxu0
    %v2483 = vadd.f32 0.0, %v2482
    %v2484 = vpop.f32.mrf.mxu0
    %v2485 = vpop.f32.mrf.mxu0
    %v2486 = vadd.f32 0.0, %v2485
    %v2487 = vpop.f32.mrf.mxu0
    %2488 = vmatprep.mubr.bf16.mxu0 0
    %2489 = vmatmul.mubr.bf16.gmra.mxu0 %v2369
    %v2490 = vpop.f32.mrf.mxu0
    %v2491 = vadd.f32 0.0, %v2490
    %v2492 = vpop.f32.mrf.mxu0
    %v2493 = vpop.f32.mrf.mxu0
    %v2494 = vadd.f32 0.0, %v2493
    %v2495 = vpop.f32.mrf.mxu0
    %2496 = vmatprep.mubr.bf16.mxu0 0
    %2497 = vmatmul.mubr.bf16.gmra.mxu0 %v2370
    %v2498 = vpop.f32.mrf.mxu0
    %v2499 = vadd.f32 0.0, %v2498
    %v2500 = vpop.f32.mrf.mxu0
    %v2501 = vpop.f32.mrf.mxu0
    %v2502 = vadd.f32 0.0, %v2501
    %v2503 = vpop.f32.mrf.mxu0
    %2504 = vmatprep.mubr.bf16.mxu0 0
    %2505 = vmatmul.mubr.bf16.gmra.mxu0 %v2371
    %v2506 = vpop.f32.mrf.mxu0
    %v2507 = vadd.f32 0.0, %v2506
    %v2508 = vpop.f32.mrf.mxu0
    %v2509 = vpop.f32.mrf.mxu0
    %v2510 = vadd.f32 0.0, %v2509
    %v2511 = vpop.f32.mrf.mxu0
    %2512 = vmatprep.mubr.bf16.mxu0 0
    %2513 = vmatmul.mubr.bf16.gmra.mxu0 %v2372
    %v2514 = vpop.f32.mrf.mxu0
    %v2515 = vadd.f32 0.0, %v2514
    %v2516 = vpop.f32.mrf.mxu0
    %v2517 = vpop.f32.mrf.mxu0
    %v2518 = vadd.f32 0.0, %v2517
    %v2519 = vpop.f32.mrf.mxu0
    %2520 = vmatprep.mubr.bf16.mxu0 0
    %2521 = vmatmul.mubr.bf16.gmra.mxu0 %v2373
    %v2522 = vpop.f32.mrf.mxu0
    %v2523 = vadd.f32 0.0, %v2522
    %v2524 = vpop.f32.mrf.mxu0
    %v2525 = vpop.f32.mrf.mxu0
    %v2526 = vadd.f32 0.0, %v2525
    %v2527 = vpop.f32.mrf.mxu0
    %2528 = vmatprep.mubr.bf16.mxu0 0
    %2529 = vmatmul.mubr.bf16.gmra.mxu0 %v2374
    %v2530 = vpop.f32.mrf.mxu0
    %v2531 = vadd.f32 0.0, %v2530
    %v2532 = vpop.f32.mrf.mxu0
    %v2533 = vpop.f32.mrf.mxu0
    %v2534 = vadd.f32 0.0, %v2533
    %v2535 = vpop.f32.mrf.mxu0
    %2536 = vdwg.mxu0
    %v2537 = vadd.f32 %v2289, %v2475
    %v2538 = vadd.f32 %v2292, %v2478
    %v2539 = vadd.f32 %v2297, %v2483
    %v2540 = vadd.f32 %v2300, %v2486
    %v2541 = vadd.f32 %v2305, %v2491
    %v2542 = vadd.f32 %v2308, %v2494
    %v2543 = vadd.f32 %v2313, %v2499
    %v2544 = vadd.f32 %v2316, %v2502
    %v2545 = vadd.f32 %v2321, %v2507
    %v2546 = vadd.f32 %v2324, %v2510
    %v2547 = vadd.f32 %v2329, %v2515
    %v2548 = vadd.f32 %v2332, %v2518
    %v2549 = vadd.f32 %v2337, %v2523
    %v2550 = vadd.f32 %v2340, %v2526
    %v2551 = vadd.f32 %v2345, %v2531
    %v2552 = vadd.f32 %v2348, %v2534
    %v2553 = vld [vmem:[%s865] sm:$0xff]
    %v2554 = vld [vmem:[%s865 + $0x10] sm:$0xff]
    %v2555 = vld [vmem:[%s865 + $0x20] sm:$0xff]
    %v2556 = vld [vmem:[%s865 + $0x30] sm:$0xff]
    %v2557 = vld [vmem:[%s865 + $0x40] sm:$0xff]
    %v2558 = vld [vmem:[%s865 + $0x50] sm:$0xff]
    %v2559 = vld [vmem:[%s865 + $0x60] sm:$0xff]
    %v2560 = vld [vmem:[%s865 + $0x70] sm:$0xff]
    %v2561 = vld [vmem:[%s865 + $0x90] sm:$0xff]
    %v2562 = vld [vmem:[%s865 + $0xa0] sm:$0xff]
    %v2563 = vld [vmem:[%s865 + $0xb0] sm:$0xff]
    %v2564 = vld [vmem:[%s865 + $0xc0] sm:$0xff]
    %v2565 = vld [vmem:[%s865 + $0xd0] sm:$0xff]
    %v2566 = vld [vmem:[%s865 + $0xe0] sm:$0xff]
    %v2567 = vld [vmem:[%s865 + $0xf0] sm:$0xff]
    %v2568 = vld [vmem:[%s865 + $0x100] sm:$0xff]
    %v2569 = vpack.c.bf16 %v2554, %v2553
    %v2570 = vpack.c.bf16 %v2556, %v2555
    %v2571 = vpack.c.bf16 %v2558, %v2557
    %v2572 = vpack.c.bf16 %v2560, %v2559
    %v2573 = vpack.c.bf16 %v2562, %v2561
    %v2574 = vpack.c.bf16 %v2564, %v2563
    %v2575 = vpack.c.bf16 %v2566, %v2565
    %v2576 = vpack.c.bf16 %v2568, %v2567
    %s2577 = scalar_lea.vmem %s2, 192
    %v2578 = vld [vmem:[%s2577] sm:$0xf]
    %v2579 = vld [vmem:[%s2577 + $0x4] sm:$0xf]
    %v2580 = vld [vmem:[%s2577 + $0x8] sm:$0xf]
    %v2581 = vld [vmem:[%s2577 + $0xc] sm:$0xf]
    %v2582 = vld [vmem:[%s2577 + $0x10] sm:$0xf]
    %v2583 = vld [vmem:[%s2577 + $0x14] sm:$0xf]
    %v2584 = vld [vmem:[%s2577 + $0x18] sm:$0xf]
    %v2585 = vld [vmem:[%s2577 + $0x1c] sm:$0xf]
    %v2586 = vld [vmem:[%s2577 + $0x20] sm:$0xf]
    %v2587 = vld [vmem:[%s2577 + $0x24] sm:$0xf]
    %v2588 = vld [vmem:[%s2577 + $0x28] sm:$0xf]
    %v2589 = vld [vmem:[%s2577 + $0x2c] sm:$0xf]
    %v2590 = vld [vmem:[%s2577 + $0x30] sm:$0xf]
    %v2591 = vld [vmem:[%s2577 + $0x34] sm:$0xf]
    %v2592 = vld [vmem:[%s2577 + $0x38] sm:$0xf]
    %v2593 = vld [vmem:[%s2577 + $0x3c] sm:$0xf]
    %v2610 = vunpack.c.l.b16 %v2578
    %v2611 = vunpack.c.l.b16 %v2579
    %v2612 = vunpack.c.l.b16 %v2580
    %v2613 = vunpack.c.l.b16 %v2581
    %v2614 = vunpack.c.l.b16 %v2582
    %v2615 = vunpack.c.l.b16 %v2583
    %v2616 = vunpack.c.l.b16 %v2584
    %v2617 = vunpack.c.l.b16 %v2585
    %v2618 = vunpack.c.l.b16 %v2586
    %v2619 = vunpack.c.l.b16 %v2587
    %v2620 = vunpack.c.l.b16 %v2588
    %v2621 = vunpack.c.l.b16 %v2589
    %v2622 = vunpack.c.l.b16 %v2590
    %v2623 = vunpack.c.l.b16 %v2591
    %v2624 = vunpack.c.l.b16 %v2592
    %v2625 = vunpack.c.l.b16 %v2593
    %v2626 = vpack.c.b16 %v2611, %v2610
    %v2627 = vpack.c.b16 %v2613, %v2612
    %v2628 = vpack.c.b16 %v2615, %v2614
    %v2629 = vpack.c.b16 %v2617, %v2616
    %v2630 = vpack.c.b16 %v2619, %v2618
    %v2631 = vpack.c.b16 %v2621, %v2620
    %v2632 = vpack.c.b16 %v2623, %v2622
    %v2633 = vpack.c.b16 %v2625, %v2624
    %2642 = vmatprep.subr.bf16.mxu0 0
    %2643 = vmatpush1.bf16.msra.mxu0 %v2633
    %2644 = vmatprep.subr.bf16.mxu0 0
    %2645 = vmatpush1.bf16.msra.mxu0 %v2632
    %2646 = vmatprep.subr.bf16.mxu0 0
    %2647 = vmatpush1.bf16.msra.mxu0 %v2631
    %2648 = vmatprep.subr.bf16.mxu0 0
    %2649 = vmatpush1.bf16.msra.mxu0 %v2630
    %2650 = vmatprep.subr.bf16.mxu0 0
    %2651 = vmatpush1.bf16.msra.mxu0 %v2629
    %2652 = vmatprep.subr.bf16.mxu0 0
    %2653 = vmatpush1.bf16.msra.mxu0 %v2628
    %2654 = vmatprep.subr.bf16.mxu0 0
    %2655 = vmatpush1.bf16.msra.mxu0 %v2627
    %2656 = vmatprep.subr.bf16.mxu0 0
    %2657 = vmatpush1.bf16.msra.mxu0 %v2626
    %2658 = vmatprep.subr.bf16.mxu0 0
    %2659 = vmatpush2.bf16.msra.mxu0 0
    %2660 = vmatprep.subr.bf16.mxu0 0
    %2661 = vmatpush2.bf16.msra.mxu0 0
    %2662 = vmatprep.subr.bf16.mxu0 0
    %2663 = vmatpush2.bf16.msra.mxu0 0
    %2664 = vmatprep.subr.bf16.mxu0 0
    %2665 = vmatpush2.bf16.msra.mxu0 0
    %2666 = vmatprep.subr.bf16.mxu0 0
    %2667 = vmatpush2.bf16.msra.mxu0 0
    %2668 = vmatprep.subr.bf16.mxu0 0
    %2669 = vmatpush2.bf16.msra.mxu0 0
    %2670 = vmatprep.subr.bf16.mxu0 0
    %2671 = vmatpush2.bf16.msra.mxu0 0
    %2672 = vmatprep.subr.bf16.mxu0 0
    %2673 = vmatpush2.bf16.msra.mxu0 0
    %2674 = vmatprep.mubr.bf16.mxu0 0
    %2675 = vmatmul.mubr.bf16.gmra.mxu0 %v2569
    %v2676 = vpop.f32.mrf.mxu0
    %v2677 = vadd.f32 0.0, %v2676
    %v2678 = vpop.f32.mrf.mxu0
    %v2679 = vpop.f32.mrf.mxu0
    %v2680 = vadd.f32 0.0, %v2679
    %v2681 = vpop.f32.mrf.mxu0
    %2682 = vmatprep.mubr.bf16.mxu0 0
    %2683 = vmatmul.mubr.bf16.gmra.mxu0 %v2570
    %v2684 = vpop.f32.mrf.mxu0
    %v2685 = vadd.f32 0.0, %v2684
    %v2686 = vpop.f32.mrf.mxu0
    %v2687 = vpop.f32.mrf.mxu0
    %v2688 = vadd.f32 0.0, %v2687
    %v2689 = vpop.f32.mrf.mxu0
    %2690 = vmatprep.mubr.bf16.mxu0 0
    %2691 = vmatmul.mubr.bf16.gmra.mxu0 %v2571
    %v2692 = vpop.f32.mrf.mxu0
    %v2693 = vadd.f32 0.0, %v2692
    %v2694 = vpop.f32.mrf.mxu0
    %v2695 = vpop.f32.mrf.mxu0
    %v2696 = vadd.f32 0.0, %v2695
    %v2697 = vpop.f32.mrf.mxu0
    %2698 = vmatprep.mubr.bf16.mxu0 0
    %2699 = vmatmul.mubr.bf16.gmra.mxu0 %v2572
    %v2700 = vpop.f32.mrf.mxu0
    %v2701 = vadd.f32 0.0, %v2700
    %v2702 = vpop.f32.mrf.mxu0
    %v2703 = vpop.f32.mrf.mxu0
    %v2704 = vadd.f32 0.0, %v2703
    %v2705 = vpop.f32.mrf.mxu0
    %2706 = vmatprep.mubr.bf16.mxu0 0
    %2707 = vmatmul.mubr.bf16.gmra.mxu0 %v2573
    %v2708 = vpop.f32.mrf.mxu0
    %v2709 = vadd.f32 0.0, %v2708
    %v2710 = vpop.f32.mrf.mxu0
    %v2711 = vpop.f32.mrf.mxu0
    %v2712 = vadd.f32 0.0, %v2711
    %v2713 = vpop.f32.mrf.mxu0
    %2714 = vmatprep.mubr.bf16.mxu0 0
    %2715 = vmatmul.mubr.bf16.gmra.mxu0 %v2574
    %v2716 = vpop.f32.mrf.mxu0
    %v2717 = vadd.f32 0.0, %v2716
    %v2718 = vpop.f32.mrf.mxu0
    %v2719 = vpop.f32.mrf.mxu0
    %v2720 = vadd.f32 0.0, %v2719
    %v2721 = vpop.f32.mrf.mxu0
    %2722 = vmatprep.mubr.bf16.mxu0 0
    %2723 = vmatmul.mubr.bf16.gmra.mxu0 %v2575
    %v2724 = vpop.f32.mrf.mxu0
    %v2725 = vadd.f32 0.0, %v2724
    %v2726 = vpop.f32.mrf.mxu0
    %v2727 = vpop.f32.mrf.mxu0
    %v2728 = vadd.f32 0.0, %v2727
    %v2729 = vpop.f32.mrf.mxu0
    %2730 = vmatprep.mubr.bf16.mxu0 0
    %2731 = vmatmul.mubr.bf16.gmra.mxu0 %v2576
    %v2732 = vpop.f32.mrf.mxu0
    %v2733 = vadd.f32 0.0, %v2732
    %v2734 = vpop.f32.mrf.mxu0
    %v2735 = vpop.f32.mrf.mxu0
    %v2736 = vadd.f32 0.0, %v2735
    %v2737 = vpop.f32.mrf.mxu0
    %2738 = vdwg.mxu0
    %v2739 = vadd.f32 %v2537, %v2677
    %v2740 = vadd.f32 %v2538, %v2680
    %v2741 = vadd.f32 %v2539, %v2685
    %v2742 = vadd.f32 %v2540, %v2688
    %v2743 = vadd.f32 %v2541, %v2693
    %v2744 = vadd.f32 %v2542, %v2696
    %v2745 = vadd.f32 %v2543, %v2701
    %v2746 = vadd.f32 %v2544, %v2704
    %v2747 = vadd.f32 %v2545, %v2709
    %v2748 = vadd.f32 %v2546, %v2712
    %v2749 = vadd.f32 %v2547, %v2717
    %v2750 = vadd.f32 %v2548, %v2720
    %v2751 = vadd.f32 %v2549, %v2725
    %v2752 = vadd.f32 %v2550, %v2728
    %v2753 = vadd.f32 %v2551, %v2733
    %v2754 = vadd.f32 %v2552, %v2736
    %v2755 = vld [vmem:[%s1364] sm:$0xff]
    %v2756 = vld [vmem:[%s1364 + $0x10] sm:$0xff]
    %v2757 = vld [vmem:[%s1364 + $0x20] sm:$0xff]
    %v2758 = vld [vmem:[%s1364 + $0x30] sm:$0xff]
    %v2759 = vld [vmem:[%s1364 + $0x40] sm:$0xff]
    %v2760 = vld [vmem:[%s1364 + $0x50] sm:$0xff]
    %v2761 = vld [vmem:[%s1364 + $0x60] sm:$0xff]
    %v2762 = vld [vmem:[%s1364 + $0x70] sm:$0xff]
    %v2763 = vld [vmem:[%s1364 + $0x90] sm:$0xff]
    %v2764 = vld [vmem:[%s1364 + $0xa0] sm:$0xff]
    %v2765 = vld [vmem:[%s1364 + $0xb0] sm:$0xff]
    %v2766 = vld [vmem:[%s1364 + $0xc0] sm:$0xff]
    %v2767 = vld [vmem:[%s1364 + $0xd0] sm:$0xff]
    %v2768 = vld [vmem:[%s1364 + $0xe0] sm:$0xff]
    %v2769 = vld [vmem:[%s1364 + $0xf0] sm:$0xff]
    %v2770 = vld [vmem:[%s1364 + $0x100] sm:$0xff]
    %v2771 = vpack.c.bf16 %v2756, %v2755
    %v2772 = vpack.c.bf16 %v2758, %v2757
    %v2773 = vpack.c.bf16 %v2760, %v2759
    %v2774 = vpack.c.bf16 %v2762, %v2761
    %v2775 = vpack.c.bf16 %v2764, %v2763
    %v2776 = vpack.c.bf16 %v2766, %v2765
    %v2777 = vpack.c.bf16 %v2768, %v2767
    %v2778 = vpack.c.bf16 %v2770, %v2769
    %s2779 = scalar_lea.vmem %s2, 256
    %v2780 = vld [vmem:[%s2779] sm:$0xf]
    %v2781 = vld [vmem:[%s2779 + $0x4] sm:$0xf]
    %v2782 = vld [vmem:[%s2779 + $0x8] sm:$0xf]
    %v2783 = vld [vmem:[%s2779 + $0xc] sm:$0xf]
    %v2784 = vld [vmem:[%s2779 + $0x10] sm:$0xf]
    %v2785 = vld [vmem:[%s2779 + $0x14] sm:$0xf]
    %v2786 = vld [vmem:[%s2779 + $0x18] sm:$0xf]
    %v2787 = vld [vmem:[%s2779 + $0x1c] sm:$0xf]
    %v2788 = vld [vmem:[%s2779 + $0x20] sm:$0xf]
    %v2789 = vld [vmem:[%s2779 + $0x24] sm:$0xf]
    %v2790 = vld [vmem:[%s2779 + $0x28] sm:$0xf]
    %v2791 = vld [vmem:[%s2779 + $0x2c] sm:$0xf]
    %v2792 = vld [vmem:[%s2779 + $0x30] sm:$0xf]
    %v2793 = vld [vmem:[%s2779 + $0x34] sm:$0xf]
    %v2794 = vld [vmem:[%s2779 + $0x38] sm:$0xf]
    %v2795 = vld [vmem:[%s2779 + $0x3c] sm:$0xf]
    %v2812 = vunpack.c.l.b16 %v2780
    %v2813 = vunpack.c.l.b16 %v2781
    %v2814 = vunpack.c.l.b16 %v2782
    %v2815 = vunpack.c.l.b16 %v2783
    %v2816 = vunpack.c.l.b16 %v2784
    %v2817 = vunpack.c.l.b16 %v2785
    %v2818 = vunpack.c.l.b16 %v2786
    %v2819 = vunpack.c.l.b16 %v2787
    %v2820 = vunpack.c.l.b16 %v2788
    %v2821 = vunpack.c.l.b16 %v2789
    %v2822 = vunpack.c.l.b16 %v2790
    %v2823 = vunpack.c.l.b16 %v2791
    %v2824 = vunpack.c.l.b16 %v2792
    %v2825 = vunpack.c.l.b16 %v2793
    %v2826 = vunpack.c.l.b16 %v2794
    %v2827 = vunpack.c.l.b16 %v2795
    %v2828 = vpack.c.b16 %v2813, %v2812
    %v2829 = vpack.c.b16 %v2815, %v2814
    %v2830 = vpack.c.b16 %v2817, %v2816
    %v2831 = vpack.c.b16 %v2819, %v2818
    %v2832 = vpack.c.b16 %v2821, %v2820
    %v2833 = vpack.c.b16 %v2823, %v2822
    %v2834 = vpack.c.b16 %v2825, %v2824
    %v2835 = vpack.c.b16 %v2827, %v2826
    %2844 = vmatprep.subr.bf16.mxu0 0
    %2845 = vmatpush1.bf16.msra.mxu0 %v2835
    %2846 = vmatprep.subr.bf16.mxu0 0
    %2847 = vmatpush1.bf16.msra.mxu0 %v2834
    %2848 = vmatprep.subr.bf16.mxu0 0
    %2849 = vmatpush1.bf16.msra.mxu0 %v2833
    %2850 = vmatprep.subr.bf16.mxu0 0
    %2851 = vmatpush1.bf16.msra.mxu0 %v2832
    %2852 = vmatprep.subr.bf16.mxu0 0
    %2853 = vmatpush1.bf16.msra.mxu0 %v2831
    %2854 = vmatprep.subr.bf16.mxu0 0
    %2855 = vmatpush1.bf16.msra.mxu0 %v2830
    %2856 = vmatprep.subr.bf16.mxu0 0
    %2857 = vmatpush1.bf16.msra.mxu0 %v2829
    %2858 = vmatprep.subr.bf16.mxu0 0
    %2859 = vmatpush1.bf16.msra.mxu0 %v2828
    %2860 = vmatprep.subr.bf16.mxu0 0
    %2861 = vmatpush2.bf16.msra.mxu0 0
    %2862 = vmatprep.subr.bf16.mxu0 0
    %2863 = vmatpush2.bf16.msra.mxu0 0
    %2864 = vmatprep.subr.bf16.mxu0 0
    %2865 = vmatpush2.bf16.msra.mxu0 0
    %2866 = vmatprep.subr.bf16.mxu0 0
    %2867 = vmatpush2.bf16.msra.mxu0 0
    %2868 = vmatprep.subr.bf16.mxu0 0
    %2869 = vmatpush2.bf16.msra.mxu0 0
    %2870 = vmatprep.subr.bf16.mxu0 0
    %2871 = vmatpush2.bf16.msra.mxu0 0
    %2872 = vmatprep.subr.bf16.mxu0 0
    %2873 = vmatpush2.bf16.msra.mxu0 0
    %2874 = vmatprep.subr.bf16.mxu0 0
    %2875 = vmatpush2.bf16.msra.mxu0 0
    %2876 = vmatprep.mubr.bf16.mxu0 0
    %2877 = vmatmul.mubr.bf16.gmra.mxu0 %v2771
    %v2878 = vpop.f32.mrf.mxu0
    %v2879 = vadd.f32 0.0, %v2878
    %v2880 = vpop.f32.mrf.mxu0
    %v2881 = vpop.f32.mrf.mxu0
    %v2882 = vadd.f32 0.0, %v2881
    %v2883 = vpop.f32.mrf.mxu0
    %2884 = vmatprep.mubr.bf16.mxu0 0
    %2885 = vmatmul.mubr.bf16.gmra.mxu0 %v2772
    %v2886 = vpop.f32.mrf.mxu0
    %v2887 = vadd.f32 0.0, %v2886
    %v2888 = vpop.f32.mrf.mxu0
    %v2889 = vpop.f32.mrf.mxu0
    %v2890 = vadd.f32 0.0, %v2889
    %v2891 = vpop.f32.mrf.mxu0
    %2892 = vmatprep.mubr.bf16.mxu0 0
    %2893 = vmatmul.mubr.bf16.gmra.mxu0 %v2773
    %v2894 = vpop.f32.mrf.mxu0
    %v2895 = vadd.f32 0.0, %v2894
    %v2896 = vpop.f32.mrf.mxu0
    %v2897 = vpop.f32.mrf.mxu0
    %v2898 = vadd.f32 0.0, %v2897
    %v2899 = vpop.f32.mrf.mxu0
    %2900 = vmatprep.mubr.bf16.mxu0 0
    %2901 = vmatmul.mubr.bf16.gmra.mxu0 %v2774
    %v2902 = vpop.f32.mrf.mxu0
    %v2903 = vadd.f32 0.0, %v2902
    %v2904 = vpop.f32.mrf.mxu0
    %v2905 = vpop.f32.mrf.mxu0
    %v2906 = vadd.f32 0.0, %v2905
    %v2907 = vpop.f32.mrf.mxu0
    %2908 = vmatprep.mubr.bf16.mxu0 0
    %2909 = vmatmul.mubr.bf16.gmra.mxu0 %v2775
    %v2910 = vpop.f32.mrf.mxu0
    %v2911 = vadd.f32 0.0, %v2910
    %v2912 = vpop.f32.mrf.mxu0
    %v2913 = vpop.f32.mrf.mxu0
    %v2914 = vadd.f32 0.0, %v2913
    %v2915 = vpop.f32.mrf.mxu0
    %2916 = vmatprep.mubr.bf16.mxu0 0
    %2917 = vmatmul.mubr.bf16.gmra.mxu0 %v2776
    %v2918 = vpop.f32.mrf.mxu0
    %v2919 = vadd.f32 0.0, %v2918
    %v2920 = vpop.f32.mrf.mxu0
    %v2921 = vpop.f32.mrf.mxu0
    %v2922 = vadd.f32 0.0, %v2921
    %v2923 = vpop.f32.mrf.mxu0
    %2924 = vmatprep.mubr.bf16.mxu0 0
    %2925 = vmatmul.mubr.bf16.gmra.mxu0 %v2777
    %v2926 = vpop.f32.mrf.mxu0
    %v2927 = vadd.f32 0.0, %v2926
    %v2928 = vpop.f32.mrf.mxu0
    %v2929 = vpop.f32.mrf.mxu0
    %v2930 = vadd.f32 0.0, %v2929
    %v2931 = vpop.f32.mrf.mxu0
    %2932 = vmatprep.mubr.bf16.mxu0 0
    %2933 = vmatmul.mubr.bf16.gmra.mxu0 %v2778
    %v2934 = vpop.f32.mrf.mxu0
    %v2935 = vadd.f32 0.0, %v2934
    %v2936 = vpop.f32.mrf.mxu0
    %v2937 = vpop.f32.mrf.mxu0
    %v2938 = vadd.f32 0.0, %v2937
    %v2939 = vpop.f32.mrf.mxu0
    %2940 = vdwg.mxu0
    %v2941 = vadd.f32 %v2739, %v2879
    %v2942 = vadd.f32 %v2740, %v2882
    %v2943 = vadd.f32 %v2741, %v2887
    %v2944 = vadd.f32 %v2742, %v2890
    %v2945 = vadd.f32 %v2743, %v2895
    %v2946 = vadd.f32 %v2744, %v2898
    %v2947 = vadd.f32 %v2745, %v2903
    %v2948 = vadd.f32 %v2746, %v2906
    %v2949 = vadd.f32 %v2747, %v2911
    %v2950 = vadd.f32 %v2748, %v2914
    %v2951 = vadd.f32 %v2749, %v2919
    %v2952 = vadd.f32 %v2750, %v2922
    %v2953 = vadd.f32 %v2751, %v2927
    %v2954 = vadd.f32 %v2752, %v2930
    %v2955 = vadd.f32 %v2753, %v2935
    %v2956 = vadd.f32 %v2754, %v2938
    %v2957 = vld [vmem:[%s865 + $0x1] sm:$0xff]
    %v2958 = vld [vmem:[%s865 + $0x11] sm:$0xff]
    %v2959 = vld [vmem:[%s865 + $0x21] sm:$0xff]
    %v2960 = vld [vmem:[%s865 + $0x31] sm:$0xff]
    %v2961 = vld [vmem:[%s865 + $0x41] sm:$0xff]
    %v2962 = vld [vmem:[%s865 + $0x51] sm:$0xff]
    %v2963 = vld [vmem:[%s865 + $0x61] sm:$0xff]
    %v2964 = vld [vmem:[%s865 + $0x71] sm:$0xff]
    %v2965 = vld [vmem:[%s865 + $0x91] sm:$0xff]
    %v2966 = vld [vmem:[%s865 + $0xa1] sm:$0xff]
    %v2967 = vld [vmem:[%s865 + $0xb1] sm:$0xff]
    %v2968 = vld [vmem:[%s865 + $0xc1] sm:$0xff]
    %v2969 = vld [vmem:[%s865 + $0xd1] sm:$0xff]
    %v2970 = vld [vmem:[%s865 + $0xe1] sm:$0xff]
    %v2971 = vld [vmem:[%s865 + $0xf1] sm:$0xff]
    %v2972 = vld [vmem:[%s865 + $0x101] sm:$0xff]
    %v2973 = vpack.c.bf16 %v2958, %v2957
    %v2974 = vpack.c.bf16 %v2960, %v2959
    %v2975 = vpack.c.bf16 %v2962, %v2961
    %v2976 = vpack.c.bf16 %v2964, %v2963
    %v2977 = vpack.c.bf16 %v2966, %v2965
    %v2978 = vpack.c.bf16 %v2968, %v2967
    %v2979 = vpack.c.bf16 %v2970, %v2969
    %v2980 = vpack.c.bf16 %v2972, %v2971
    %s2981 = scalar_lea.vmem %s2, 320
    %v2982 = vld [vmem:[%s2981] sm:$0xf]
    %v2983 = vld [vmem:[%s2981 + $0x4] sm:$0xf]
    %v2984 = vld [vmem:[%s2981 + $0x8] sm:$0xf]
    %v2985 = vld [vmem:[%s2981 + $0xc] sm:$0xf]
    %v2986 = vld [vmem:[%s2981 + $0x10] sm:$0xf]
    %v2987 = vld [vmem:[%s2981 + $0x14] sm:$0xf]
    %v2988 = vld [vmem:[%s2981 + $0x18] sm:$0xf]
    %v2989 = vld [vmem:[%s2981 + $0x1c] sm:$0xf]
    %v2990 = vld [vmem:[%s2981 + $0x20] sm:$0xf]
    %v2991 = vld [vmem:[%s2981 + $0x24] sm:$0xf]
    %v2992 = vld [vmem:[%s2981 + $0x28] sm:$0xf]
    %v2993 = vld [vmem:[%s2981 + $0x2c] sm:$0xf]
    %v2994 = vld [vmem:[%s2981 + $0x30] sm:$0xf]
    %v2995 = vld [vmem:[%s2981 + $0x34] sm:$0xf]
    %v2996 = vld [vmem:[%s2981 + $0x38] sm:$0xf]
    %v2997 = vld [vmem:[%s2981 + $0x3c] sm:$0xf]
    %v3014 = vunpack.c.l.b16 %v2982
    %v3015 = vunpack.c.l.b16 %v2983
    %v3016 = vunpack.c.l.b16 %v2984
    %v3017 = vunpack.c.l.b16 %v2985
    %v3018 = vunpack.c.l.b16 %v2986
    %v3019 = vunpack.c.l.b16 %v2987
    %v3020 = vunpack.c.l.b16 %v2988
    %v3021 = vunpack.c.l.b16 %v2989
    %v3022 = vunpack.c.l.b16 %v2990
    %v3023 = vunpack.c.l.b16 %v2991
    %v3024 = vunpack.c.l.b16 %v2992
    %v3025 = vunpack.c.l.b16 %v2993
    %v3026 = vunpack.c.l.b16 %v2994
    %v3027 = vunpack.c.l.b16 %v2995
    %v3028 = vunpack.c.l.b16 %v2996
    %v3029 = vunpack.c.l.b16 %v2997
    %v3030 = vpack.c.b16 %v3015, %v3014
    %v3031 = vpack.c.b16 %v3017, %v3016
    %v3032 = vpack.c.b16 %v3019, %v3018
    %v3033 = vpack.c.b16 %v3021, %v3020
    %v3034 = vpack.c.b16 %v3023, %v3022
    %v3035 = vpack.c.b16 %v3025, %v3024
    %v3036 = vpack.c.b16 %v3027, %v3026
    %v3037 = vpack.c.b16 %v3029, %v3028
    %3046 = vmatprep.subr.bf16.mxu0 0
    %3047 = vmatpush1.bf16.msra.mxu0 %v3037
    %3048 = vmatprep.subr.bf16.mxu0 0
    %3049 = vmatpush1.bf16.msra.mxu0 %v3036
    %3050 = vmatprep.subr.bf16.mxu0 0
    %3051 = vmatpush1.bf16.msra.mxu0 %v3035
    %3052 = vmatprep.subr.bf16.mxu0 0
    %3053 = vmatpush1.bf16.msra.mxu0 %v3034
    %3054 = vmatprep.subr.bf16.mxu0 0
    %3055 = vmatpush1.bf16.msra.mxu0 %v3033
    %3056 = vmatprep.subr.bf16.mxu0 0
    %3057 = vmatpush1.bf16.msra.mxu0 %v3032
    %3058 = vmatprep.subr.bf16.mxu0 0
    %3059 = vmatpush1.bf16.msra.mxu0 %v3031
    %3060 = vmatprep.subr.bf16.mxu0 0
    %3061 = vmatpush1.bf16.msra.mxu0 %v3030
    %3062 = vmatprep.subr.bf16.mxu0 0
    %3063 = vmatpush2.bf16.msra.mxu0 0
    %3064 = vmatprep.subr.bf16.mxu0 0
    %3065 = vmatpush2.bf16.msra.mxu0 0
    %3066 = vmatprep.subr.bf16.mxu0 0
    %3067 = vmatpush2.bf16.msra.mxu0 0
    %3068 = vmatprep.subr.bf16.mxu0 0
    %3069 = vmatpush2.bf16.msra.mxu0 0
    %3070 = vmatprep.subr.bf16.mxu0 0
    %3071 = vmatpush2.bf16.msra.mxu0 0
    %3072 = vmatprep.subr.bf16.mxu0 0
    %3073 = vmatpush2.bf16.msra.mxu0 0
    %3074 = vmatprep.subr.bf16.mxu0 0
    %3075 = vmatpush2.bf16.msra.mxu0 0
    %3076 = vmatprep.subr.bf16.mxu0 0
    %3077 = vmatpush2.bf16.msra.mxu0 0
    %3078 = vmatprep.mubr.bf16.mxu0 0
    %3079 = vmatmul.mubr.bf16.gmra.mxu0 %v2973
    %v3080 = vpop.f32.mrf.mxu0
    %v3081 = vadd.f32 0.0, %v3080
    %v3082 = vpop.f32.mrf.mxu0
    %v3083 = vpop.f32.mrf.mxu0
    %v3084 = vadd.f32 0.0, %v3083
    %v3085 = vpop.f32.mrf.mxu0
    %3086 = vmatprep.mubr.bf16.mxu0 0
    %3087 = vmatmul.mubr.bf16.gmra.mxu0 %v2974
    %v3088 = vpop.f32.mrf.mxu0
    %v3089 = vadd.f32 0.0, %v3088
    %v3090 = vpop.f32.mrf.mxu0
    %v3091 = vpop.f32.mrf.mxu0
    %v3092 = vadd.f32 0.0, %v3091
    %v3093 = vpop.f32.mrf.mxu0
    %3094 = vmatprep.mubr.bf16.mxu0 0
    %3095 = vmatmul.mubr.bf16.gmra.mxu0 %v2975
    %v3096 = vpop.f32.mrf.mxu0
    %v3097 = vadd.f32 0.0, %v3096
    %v3098 = vpop.f32.mrf.mxu0
    %v3099 = vpop.f32.mrf.mxu0
    %v3100 = vadd.f32 0.0, %v3099
    %v3101 = vpop.f32.mrf.mxu0
    %3102 = vmatprep.mubr.bf16.mxu0 0
    %3103 = vmatmul.mubr.bf16.gmra.mxu0 %v2976
    %v3104 = vpop.f32.mrf.mxu0
    %v3105 = vadd.f32 0.0, %v3104
    %v3106 = vpop.f32.mrf.mxu0
    %v3107 = vpop.f32.mrf.mxu0
    %v3108 = vadd.f32 0.0, %v3107
    %v3109 = vpop.f32.mrf.mxu0
    %3110 = vmatprep.mubr.bf16.mxu0 0
    %3111 = vmatmul.mubr.bf16.gmra.mxu0 %v2977
    %v3112 = vpop.f32.mrf.mxu0
    %v3113 = vadd.f32 0.0, %v3112
    %v3114 = vpop.f32.mrf.mxu0
    %v3115 = vpop.f32.mrf.mxu0
    %v3116 = vadd.f32 0.0, %v3115
    %v3117 = vpop.f32.mrf.mxu0
    %3118 = vmatprep.mubr.bf16.mxu0 0
    %3119 = vmatmul.mubr.bf16.gmra.mxu0 %v2978
    %v3120 = vpop.f32.mrf.mxu0
    %v3121 = vadd.f32 0.0, %v3120
    %v3122 = vpop.f32.mrf.mxu0
    %v3123 = vpop.f32.mrf.mxu0
    %v3124 = vadd.f32 0.0, %v3123
    %v3125 = vpop.f32.mrf.mxu0
    %3126 = vmatprep.mubr.bf16.mxu0 0
    %3127 = vmatmul.mubr.bf16.gmra.mxu0 %v2979
    %v3128 = vpop.f32.mrf.mxu0
    %v3129 = vadd.f32 0.0, %v3128
    %v3130 = vpop.f32.mrf.mxu0
    %v3131 = vpop.f32.mrf.mxu0
    %v3132 = vadd.f32 0.0, %v3131
    %v3133 = vpop.f32.mrf.mxu0
    %3134 = vmatprep.mubr.bf16.mxu0 0
    %3135 = vmatmul.mubr.bf16.gmra.mxu0 %v2980
    %v3136 = vpop.f32.mrf.mxu0
    %v3137 = vadd.f32 0.0, %v3136
    %v3138 = vpop.f32.mrf.mxu0
    %v3139 = vpop.f32.mrf.mxu0
    %v3140 = vadd.f32 0.0, %v3139
    %v3141 = vpop.f32.mrf.mxu0
    %3142 = vdwg.mxu0
    %v3143 = vadd.f32 %v2941, %v3081
    %v3144 = vadd.f32 %v2942, %v3084
    %v3145 = vadd.f32 %v2943, %v3089
    %v3146 = vadd.f32 %v2944, %v3092
    %v3147 = vadd.f32 %v2945, %v3097
    %v3148 = vadd.f32 %v2946, %v3100
    %v3149 = vadd.f32 %v2947, %v3105
    %v3150 = vadd.f32 %v2948, %v3108
    %v3151 = vadd.f32 %v2949, %v3113
    %v3152 = vadd.f32 %v2950, %v3116
    %v3153 = vadd.f32 %v2951, %v3121
    %v3154 = vadd.f32 %v2952, %v3124
    %v3155 = vadd.f32 %v2953, %v3129
    %v3156 = vadd.f32 %v2954, %v3132
    %v3157 = vadd.f32 %v2955, %v3137
    %v3158 = vadd.f32 %v2956, %v3140
    %v3159 = vld [vmem:[%s572] sm:$0xff]
    %v3160 = vld [vmem:[%s572 + $0x10] sm:$0xff]
    %v3161 = vld [vmem:[%s572 + $0x20] sm:$0xff]
    %v3162 = vld [vmem:[%s572 + $0x30] sm:$0xff]
    %v3163 = vld [vmem:[%s572 + $0x40] sm:$0xff]
    %v3164 = vld [vmem:[%s572 + $0x50] sm:$0xff]
    %v3165 = vld [vmem:[%s572 + $0x60] sm:$0xff]
    %v3166 = vld [vmem:[%s572 + $0x70] sm:$0xff]
    %v3167 = vld [vmem:[%s572 + $0x90] sm:$0xff]
    %v3168 = vld [vmem:[%s572 + $0xa0] sm:$0xff]
    %v3169 = vld [vmem:[%s572 + $0xb0] sm:$0xff]
    %v3170 = vld [vmem:[%s572 + $0xc0] sm:$0xff]
    %v3171 = vld [vmem:[%s572 + $0xd0] sm:$0xff]
    %v3172 = vld [vmem:[%s572 + $0xe0] sm:$0xff]
    %v3173 = vld [vmem:[%s572 + $0xf0] sm:$0xff]
    %v3174 = vld [vmem:[%s572 + $0x100] sm:$0xff]
    %v3175 = vpack.c.bf16 %v3160, %v3159
    %v3176 = vpack.c.bf16 %v3162, %v3161
    %v3177 = vpack.c.bf16 %v3164, %v3163
    %v3178 = vpack.c.bf16 %v3166, %v3165
    %v3179 = vpack.c.bf16 %v3168, %v3167
    %v3180 = vpack.c.bf16 %v3170, %v3169
    %v3181 = vpack.c.bf16 %v3172, %v3171
    %v3182 = vpack.c.bf16 %v3174, %v3173
    %s3183 = scalar_lea.vmem %s2, 384
    %v3184 = vld [vmem:[%s3183] sm:$0xf]
    %v3185 = vld [vmem:[%s3183 + $0x4] sm:$0xf]
    %v3186 = vld [vmem:[%s3183 + $0x8] sm:$0xf]
    %v3187 = vld [vmem:[%s3183 + $0xc] sm:$0xf]
    %v3188 = vld [vmem:[%s3183 + $0x10] sm:$0xf]
    %v3189 = vld [vmem:[%s3183 + $0x14] sm:$0xf]
    %v3190 = vld [vmem:[%s3183 + $0x18] sm:$0xf]
    %v3191 = vld [vmem:[%s3183 + $0x1c] sm:$0xf]
    %v3192 = vld [vmem:[%s3183 + $0x20] sm:$0xf]
    %v3193 = vld [vmem:[%s3183 + $0x24] sm:$0xf]
    %v3194 = vld [vmem:[%s3183 + $0x28] sm:$0xf]
    %v3195 = vld [vmem:[%s3183 + $0x2c] sm:$0xf]
    %v3196 = vld [vmem:[%s3183 + $0x30] sm:$0xf]
    %v3197 = vld [vmem:[%s3183 + $0x34] sm:$0xf]
    %v3198 = vld [vmem:[%s3183 + $0x38] sm:$0xf]
    %v3199 = vld [vmem:[%s3183 + $0x3c] sm:$0xf]
    %v3216 = vunpack.c.l.b16 %v3184
    %v3217 = vunpack.c.l.b16 %v3185
    %v3218 = vunpack.c.l.b16 %v3186
    %v3219 = vunpack.c.l.b16 %v3187
    %v3220 = vunpack.c.l.b16 %v3188
    %v3221 = vunpack.c.l.b16 %v3189
    %v3222 = vunpack.c.l.b16 %v3190
    %v3223 = vunpack.c.l.b16 %v3191
    %v3224 = vunpack.c.l.b16 %v3192
    %v3225 = vunpack.c.l.b16 %v3193
    %v3226 = vunpack.c.l.b16 %v3194
    %v3227 = vunpack.c.l.b16 %v3195
    %v3228 = vunpack.c.l.b16 %v3196
    %v3229 = vunpack.c.l.b16 %v3197
    %v3230 = vunpack.c.l.b16 %v3198
    %v3231 = vunpack.c.l.b16 %v3199
    %v3232 = vpack.c.b16 %v3217, %v3216
    %v3233 = vpack.c.b16 %v3219, %v3218
    %v3234 = vpack.c.b16 %v3221, %v3220
    %v3235 = vpack.c.b16 %v3223, %v3222
    %v3236 = vpack.c.b16 %v3225, %v3224
    %v3237 = vpack.c.b16 %v3227, %v3226
    %v3238 = vpack.c.b16 %v3229, %v3228
    %v3239 = vpack.c.b16 %v3231, %v3230
    %3248 = vmatprep.subr.bf16.mxu0 0
    %3249 = vmatpush1.bf16.msra.mxu0 %v3239
    %3250 = vmatprep.subr.bf16.mxu0 0
    %3251 = vmatpush1.bf16.msra.mxu0 %v3238
    %3252 = vmatprep.subr.bf16.mxu0 0
    %3253 = vmatpush1.bf16.msra.mxu0 %v3237
    %3254 = vmatprep.subr.bf16.mxu0 0
    %3255 = vmatpush1.bf16.msra.mxu0 %v3236
    %3256 = vmatprep.subr.bf16.mxu0 0
    %3257 = vmatpush1.bf16.msra.mxu0 %v3235
    %3258 = vmatprep.subr.bf16.mxu0 0
    %3259 = vmatpush1.bf16.msra.mxu0 %v3234
    %3260 = vmatprep.subr.bf16.mxu0 0
    %3261 = vmatpush1.bf16.msra.mxu0 %v3233
    %3262 = vmatprep.subr.bf16.mxu0 0
    %3263 = vmatpush1.bf16.msra.mxu0 %v3232
    %3264 = vmatprep.subr.bf16.mxu0 0
    %3265 = vmatpush2.bf16.msra.mxu0 0
    %3266 = vmatprep.subr.bf16.mxu0 0
    %3267 = vmatpush2.bf16.msra.mxu0 0
    %3268 = vmatprep.subr.bf16.mxu0 0
    %3269 = vmatpush2.bf16.msra.mxu0 0
    %3270 = vmatprep.subr.bf16.mxu0 0
    %3271 = vmatpush2.bf16.msra.mxu0 0
    %3272 = vmatprep.subr.bf16.mxu0 0
    %3273 = vmatpush2.bf16.msra.mxu0 0
    %3274 = vmatprep.subr.bf16.mxu0 0
    %3275 = vmatpush2.bf16.msra.mxu0 0
    %3276 = vmatprep.subr.bf16.mxu0 0
    %3277 = vmatpush2.bf16.msra.mxu0 0
    %3278 = vmatprep.subr.bf16.mxu0 0
    %3279 = vmatpush2.bf16.msra.mxu0 0
    %3280 = vmatprep.mubr.bf16.mxu0 0
    %3281 = vmatmul.mubr.bf16.gmra.mxu0 %v3175
    %v3282 = vpop.f32.mrf.mxu0
    %v3283 = vadd.f32 0.0, %v3282
    %v3284 = vpop.f32.mrf.mxu0
    %v3285 = vpop.f32.mrf.mxu0
    %v3286 = vadd.f32 0.0, %v3285
    %v3287 = vpop.f32.mrf.mxu0
    %3288 = vmatprep.mubr.bf16.mxu0 0
    %3289 = vmatmul.mubr.bf16.gmra.mxu0 %v3176
    %v3290 = vpop.f32.mrf.mxu0
    %v3291 = vadd.f32 0.0, %v3290
    %v3292 = vpop.f32.mrf.mxu0
    %v3293 = vpop.f32.mrf.mxu0
    %v3294 = vadd.f32 0.0, %v3293
    %v3295 = vpop.f32.mrf.mxu0
    %3296 = vmatprep.mubr.bf16.mxu0 0
    %3297 = vmatmul.mubr.bf16.gmra.mxu0 %v3177
    %v3298 = vpop.f32.mrf.mxu0
    %v3299 = vadd.f32 0.0, %v3298
    %v3300 = vpop.f32.mrf.mxu0
    %v3301 = vpop.f32.mrf.mxu0
    %v3302 = vadd.f32 0.0, %v3301
    %v3303 = vpop.f32.mrf.mxu0
    %3304 = vmatprep.mubr.bf16.mxu0 0
    %3305 = vmatmul.mubr.bf16.gmra.mxu0 %v3178
    %v3306 = vpop.f32.mrf.mxu0
    %v3307 = vadd.f32 0.0, %v3306
    %v3308 = vpop.f32.mrf.mxu0
    %v3309 = vpop.f32.mrf.mxu0
    %v3310 = vadd.f32 0.0, %v3309
    %v3311 = vpop.f32.mrf.mxu0
    %3312 = vmatprep.mubr.bf16.mxu0 0
    %3313 = vmatmul.mubr.bf16.gmra.mxu0 %v3179
    %v3314 = vpop.f32.mrf.mxu0
    %v3315 = vadd.f32 0.0, %v3314
    %v3316 = vpop.f32.mrf.mxu0
    %v3317 = vpop.f32.mrf.mxu0
    %v3318 = vadd.f32 0.0, %v3317
    %v3319 = vpop.f32.mrf.mxu0
    %3320 = vmatprep.mubr.bf16.mxu0 0
    %3321 = vmatmul.mubr.bf16.gmra.mxu0 %v3180
    %v3322 = vpop.f32.mrf.mxu0
    %v3323 = vadd.f32 0.0, %v3322
    %v3324 = vpop.f32.mrf.mxu0
    %v3325 = vpop.f32.mrf.mxu0
    %v3326 = vadd.f32 0.0, %v3325
    %v3327 = vpop.f32.mrf.mxu0
    %3328 = vmatprep.mubr.bf16.mxu0 0
    %3329 = vmatmul.mubr.bf16.gmra.mxu0 %v3181
    %v3330 = vpop.f32.mrf.mxu0
    %v3331 = vadd.f32 0.0, %v3330
    %v3332 = vpop.f32.mrf.mxu0
    %v3333 = vpop.f32.mrf.mxu0
    %v3334 = vadd.f32 0.0, %v3333
    %v3335 = vpop.f32.mrf.mxu0
    %3336 = vmatprep.mubr.bf16.mxu0 0
    %3337 = vmatmul.mubr.bf16.gmra.mxu0 %v3182
    %v3338 = vpop.f32.mrf.mxu0
    %v3339 = vadd.f32 0.0, %v3338
    %v3340 = vpop.f32.mrf.mxu0
    %v3341 = vpop.f32.mrf.mxu0
    %v3342 = vadd.f32 0.0, %v3341
    %v3343 = vpop.f32.mrf.mxu0
    %3344 = vdwg.mxu0
    %v3345 = vadd.f32 %v3143, %v3283
    %v3346 = vadd.f32 %v3144, %v3286
    %v3347 = vadd.f32 %v3145, %v3291
    %v3348 = vadd.f32 %v3146, %v3294
    %v3349 = vadd.f32 %v3147, %v3299
    %v3350 = vadd.f32 %v3148, %v3302
    %v3351 = vadd.f32 %v3149, %v3307
    %v3352 = vadd.f32 %v3150, %v3310
    %v3353 = vadd.f32 %v3151, %v3315
    %v3354 = vadd.f32 %v3152, %v3318
    %v3355 = vadd.f32 %v3153, %v3323
    %v3356 = vadd.f32 %v3154, %v3326
    %v3357 = vadd.f32 %v3155, %v3331
    %v3358 = vadd.f32 %v3156, %v3334
    %v3359 = vadd.f32 %v3157, %v3339
    %v3360 = vadd.f32 %v3158, %v3342
    %v3361 = vld [vmem:[%s848] sm:$0xff]
    %v3362 = vld [vmem:[%s848 + $0x10] sm:$0xff]
    %v3363 = vld [vmem:[%s848 + $0x20] sm:$0xff]
    %v3364 = vld [vmem:[%s848 + $0x30] sm:$0xff]
    %v3365 = vld [vmem:[%s848 + $0x40] sm:$0xff]
    %v3366 = vld [vmem:[%s848 + $0x50] sm:$0xff]
    %v3367 = vld [vmem:[%s848 + $0x60] sm:$0xff]
    %v3368 = vld [vmem:[%s848 + $0x70] sm:$0xff]
    %v3369 = vld [vmem:[%s848 + $0x90] sm:$0xff]
    %v3370 = vld [vmem:[%s848 + $0xa0] sm:$0xff]
    %v3371 = vld [vmem:[%s848 + $0xb0] sm:$0xff]
    %v3372 = vld [vmem:[%s848 + $0xc0] sm:$0xff]
    %v3373 = vld [vmem:[%s848 + $0xd0] sm:$0xff]
    %v3374 = vld [vmem:[%s848 + $0xe0] sm:$0xff]
    %v3375 = vld [vmem:[%s848 + $0xf0] sm:$0xff]
    %v3376 = vld [vmem:[%s848 + $0x100] sm:$0xff]
    %v3377 = vpack.c.bf16 %v3362, %v3361
    %v3378 = vpack.c.bf16 %v3364, %v3363
    %v3379 = vpack.c.bf16 %v3366, %v3365
    %v3380 = vpack.c.bf16 %v3368, %v3367
    %v3381 = vpack.c.bf16 %v3370, %v3369
    %v3382 = vpack.c.bf16 %v3372, %v3371
    %v3383 = vpack.c.bf16 %v3374, %v3373
    %v3384 = vpack.c.bf16 %v3376, %v3375
    %s3385 = scalar_lea.vmem %s2, 448
    %v3386 = vld [vmem:[%s3385] sm:$0xf]
    %v3387 = vld [vmem:[%s3385 + $0x4] sm:$0xf]
    %v3388 = vld [vmem:[%s3385 + $0x8] sm:$0xf]
    %v3389 = vld [vmem:[%s3385 + $0xc] sm:$0xf]
    %v3390 = vld [vmem:[%s3385 + $0x10] sm:$0xf]
    %v3391 = vld [vmem:[%s3385 + $0x14] sm:$0xf]
    %v3392 = vld [vmem:[%s3385 + $0x18] sm:$0xf]
    %v3393 = vld [vmem:[%s3385 + $0x1c] sm:$0xf]
    %v3394 = vld [vmem:[%s3385 + $0x20] sm:$0xf]
    %v3395 = vld [vmem:[%s3385 + $0x24] sm:$0xf]
    %v3396 = vld [vmem:[%s3385 + $0x28] sm:$0xf]
    %v3397 = vld [vmem:[%s3385 + $0x2c] sm:$0xf]
    %v3398 = vld [vmem:[%s3385 + $0x30] sm:$0xf]
    %v3399 = vld [vmem:[%s3385 + $0x34] sm:$0xf]
    %v3400 = vld [vmem:[%s3385 + $0x38] sm:$0xf]
    %v3401 = vld [vmem:[%s3385 + $0x3c] sm:$0xf]
    %v3418 = vunpack.c.l.b16 %v3386
    %v3419 = vunpack.c.l.b16 %v3387
    %v3420 = vunpack.c.l.b16 %v3388
    %v3421 = vunpack.c.l.b16 %v3389
    %v3422 = vunpack.c.l.b16 %v3390
    %v3423 = vunpack.c.l.b16 %v3391
    %v3424 = vunpack.c.l.b16 %v3392
    %v3425 = vunpack.c.l.b16 %v3393
    %v3426 = vunpack.c.l.b16 %v3394
    %v3427 = vunpack.c.l.b16 %v3395
    %v3428 = vunpack.c.l.b16 %v3396
    %v3429 = vunpack.c.l.b16 %v3397
    %v3430 = vunpack.c.l.b16 %v3398
    %v3431 = vunpack.c.l.b16 %v3399
    %v3432 = vunpack.c.l.b16 %v3400
    %v3433 = vunpack.c.l.b16 %v3401
    %v3434 = vpack.c.b16 %v3419, %v3418
    %v3435 = vpack.c.b16 %v3421, %v3420
    %v3436 = vpack.c.b16 %v3423, %v3422
    %v3437 = vpack.c.b16 %v3425, %v3424
    %v3438 = vpack.c.b16 %v3427, %v3426
    %v3439 = vpack.c.b16 %v3429, %v3428
    %v3440 = vpack.c.b16 %v3431, %v3430
    %v3441 = vpack.c.b16 %v3433, %v3432
    %3450 = vmatprep.subr.bf16.mxu0 0
    %3451 = vmatpush1.bf16.msra.mxu0 %v3441
    %3452 = vmatprep.subr.bf16.mxu0 0
    %3453 = vmatpush1.bf16.msra.mxu0 %v3440
    %3454 = vmatprep.subr.bf16.mxu0 0
    %3455 = vmatpush1.bf16.msra.mxu0 %v3439
    %3456 = vmatprep.subr.bf16.mxu0 0
    %3457 = vmatpush1.bf16.msra.mxu0 %v3438
    %3458 = vmatprep.subr.bf16.mxu0 0
    %3459 = vmatpush1.bf16.msra.mxu0 %v3437
    %3460 = vmatprep.subr.bf16.mxu0 0
    %3461 = vmatpush1.bf16.msra.mxu0 %v3436
    %3462 = vmatprep.subr.bf16.mxu0 0
    %3463 = vmatpush1.bf16.msra.mxu0 %v3435
    %3464 = vmatprep.subr.bf16.mxu0 0
    %3465 = vmatpush1.bf16.msra.mxu0 %v3434
    %3466 = vmatprep.subr.bf16.mxu0 0
    %3467 = vmatpush2.bf16.msra.mxu0 0
    %3468 = vmatprep.subr.bf16.mxu0 0
    %3469 = vmatpush2.bf16.msra.mxu0 0
    %3470 = vmatprep.subr.bf16.mxu0 0
    %3471 = vmatpush2.bf16.msra.mxu0 0
    %3472 = vmatprep.subr.bf16.mxu0 0
    %3473 = vmatpush2.bf16.msra.mxu0 0
    %3474 = vmatprep.subr.bf16.mxu0 0
    %3475 = vmatpush2.bf16.msra.mxu0 0
    %3476 = vmatprep.subr.bf16.mxu0 0
    %3477 = vmatpush2.bf16.msra.mxu0 0
    %3478 = vmatprep.subr.bf16.mxu0 0
    %3479 = vmatpush2.bf16.msra.mxu0 0
    %3480 = vmatprep.subr.bf16.mxu0 0
    %3481 = vmatpush2.bf16.msra.mxu0 0
    %3482 = vmatprep.mubr.bf16.mxu0 0
    %3483 = vmatmul.mubr.bf16.gmra.mxu0 %v3377
    %v3484 = vpop.f32.mrf.mxu0
    %v3485 = vadd.f32 0.0, %v3484
    %v3486 = vpop.f32.mrf.mxu0
    %v3487 = vpop.f32.mrf.mxu0
    %v3488 = vadd.f32 0.0, %v3487
    %v3489 = vpop.f32.mrf.mxu0
    %3490 = vmatprep.mubr.bf16.mxu0 0
    %3491 = vmatmul.mubr.bf16.gmra.mxu0 %v3378
    %v3492 = vpop.f32.mrf.mxu0
    %v3493 = vadd.f32 0.0, %v3492
    %v3494 = vpop.f32.mrf.mxu0
    %v3495 = vpop.f32.mrf.mxu0
    %v3496 = vadd.f32 0.0, %v3495
    %v3497 = vpop.f32.mrf.mxu0
    %3498 = vmatprep.mubr.bf16.mxu0 0
    %3499 = vmatmul.mubr.bf16.gmra.mxu0 %v3379
    %v3500 = vpop.f32.mrf.mxu0
    %v3501 = vadd.f32 0.0, %v3500
    %v3502 = vpop.f32.mrf.mxu0
    %v3503 = vpop.f32.mrf.mxu0
    %v3504 = vadd.f32 0.0, %v3503
    %v3505 = vpop.f32.mrf.mxu0
    %3506 = vmatprep.mubr.bf16.mxu0 0
    %3507 = vmatmul.mubr.bf16.gmra.mxu0 %v3380
    %v3508 = vpop.f32.mrf.mxu0
    %v3509 = vadd.f32 0.0, %v3508
    %v3510 = vpop.f32.mrf.mxu0
    %v3511 = vpop.f32.mrf.mxu0
    %v3512 = vadd.f32 0.0, %v3511
    %v3513 = vpop.f32.mrf.mxu0
    %3514 = vmatprep.mubr.bf16.mxu0 0
    %3515 = vmatmul.mubr.bf16.gmra.mxu0 %v3381
    %v3516 = vpop.f32.mrf.mxu0
    %v3517 = vadd.f32 0.0, %v3516
    %v3518 = vpop.f32.mrf.mxu0
    %v3519 = vpop.f32.mrf.mxu0
    %v3520 = vadd.f32 0.0, %v3519
    %v3521 = vpop.f32.mrf.mxu0
    %3522 = vmatprep.mubr.bf16.mxu0 0
    %3523 = vmatmul.mubr.bf16.gmra.mxu0 %v3382
    %v3524 = vpop.f32.mrf.mxu0
    %v3525 = vadd.f32 0.0, %v3524
    %v3526 = vpop.f32.mrf.mxu0
    %v3527 = vpop.f32.mrf.mxu0
    %v3528 = vadd.f32 0.0, %v3527
    %v3529 = vpop.f32.mrf.mxu0
    %3530 = vmatprep.mubr.bf16.mxu0 0
    %3531 = vmatmul.mubr.bf16.gmra.mxu0 %v3383
    %v3532 = vpop.f32.mrf.mxu0
    %v3533 = vadd.f32 0.0, %v3532
    %v3534 = vpop.f32.mrf.mxu0
    %v3535 = vpop.f32.mrf.mxu0
    %v3536 = vadd.f32 0.0, %v3535
    %v3537 = vpop.f32.mrf.mxu0
    %3538 = vmatprep.mubr.bf16.mxu0 0
    %3539 = vmatmul.mubr.bf16.gmra.mxu0 %v3384
    %v3540 = vpop.f32.mrf.mxu0
    %v3541 = vadd.f32 0.0, %v3540
    %v3542 = vpop.f32.mrf.mxu0
    %v3543 = vpop.f32.mrf.mxu0
    %v3544 = vadd.f32 0.0, %v3543
    %v3545 = vpop.f32.mrf.mxu0
    %3546 = vdwg.mxu0
    %v3547 = vadd.f32 %v3345, %v3485
    %v3548 = vadd.f32 %v3346, %v3488
    %v3549 = vadd.f32 %v3347, %v3493
    %v3550 = vadd.f32 %v3348, %v3496
    %v3551 = vadd.f32 %v3349, %v3501
    %v3552 = vadd.f32 %v3350, %v3504
    %v3553 = vadd.f32 %v3351, %v3509
    %v3554 = vadd.f32 %v3352, %v3512
    %v3555 = vadd.f32 %v3353, %v3517
    %v3556 = vadd.f32 %v3354, %v3520
    %v3557 = vadd.f32 %v3355, %v3525
    %v3558 = vadd.f32 %v3356, %v3528
    %v3559 = vadd.f32 %v3357, %v3533
    %v3560 = vadd.f32 %v3358, %v3536
    %v3561 = vadd.f32 %v3359, %v3541
    %v3562 = vadd.f32 %v3360, %v3544
    %v3563 = vld [vmem:[%s572 + $0x1] sm:$0xff]
    %v3564 = vld [vmem:[%s572 + $0x11] sm:$0xff]
    %v3565 = vld [vmem:[%s572 + $0x21] sm:$0xff]
    %v3566 = vld [vmem:[%s572 + $0x31] sm:$0xff]
    %v3567 = vld [vmem:[%s572 + $0x41] sm:$0xff]
    %v3568 = vld [vmem:[%s572 + $0x51] sm:$0xff]
    %v3569 = vld [vmem:[%s572 + $0x61] sm:$0xff]
    %v3570 = vld [vmem:[%s572 + $0x71] sm:$0xff]
    %v3571 = vld [vmem:[%s572 + $0x91] sm:$0xff]
    %v3572 = vld [vmem:[%s572 + $0xa1] sm:$0xff]
    %v3573 = vld [vmem:[%s572 + $0xb1] sm:$0xff]
    %v3574 = vld [vmem:[%s572 + $0xc1] sm:$0xff]
    %v3575 = vld [vmem:[%s572 + $0xd1] sm:$0xff]
    %v3576 = vld [vmem:[%s572 + $0xe1] sm:$0xff]
    %v3577 = vld [vmem:[%s572 + $0xf1] sm:$0xff]
    %v3578 = vld [vmem:[%s572 + $0x101] sm:$0xff]
    %v3579 = vpack.c.bf16 %v3564, %v3563
    %v3580 = vpack.c.bf16 %v3566, %v3565
    %v3581 = vpack.c.bf16 %v3568, %v3567
    %v3582 = vpack.c.bf16 %v3570, %v3569
    %v3583 = vpack.c.bf16 %v3572, %v3571
    %v3584 = vpack.c.bf16 %v3574, %v3573
    %v3585 = vpack.c.bf16 %v3576, %v3575
    %v3586 = vpack.c.bf16 %v3578, %v3577
    %s3587 = scalar_lea.vmem %s2, 512
    %v3588 = vld [vmem:[%s3587] sm:$0xf]
    %v3589 = vld [vmem:[%s3587 + $0x4] sm:$0xf]
    %v3590 = vld [vmem:[%s3587 + $0x8] sm:$0xf]
    %v3591 = vld [vmem:[%s3587 + $0xc] sm:$0xf]
    %v3592 = vld [vmem:[%s3587 + $0x10] sm:$0xf]
    %v3593 = vld [vmem:[%s3587 + $0x14] sm:$0xf]
    %v3594 = vld [vmem:[%s3587 + $0x18] sm:$0xf]
    %v3595 = vld [vmem:[%s3587 + $0x1c] sm:$0xf]
    %v3596 = vld [vmem:[%s3587 + $0x20] sm:$0xf]
    %v3597 = vld [vmem:[%s3587 + $0x24] sm:$0xf]
    %v3598 = vld [vmem:[%s3587 + $0x28] sm:$0xf]
    %v3599 = vld [vmem:[%s3587 + $0x2c] sm:$0xf]
    %v3600 = vld [vmem:[%s3587 + $0x30] sm:$0xf]
    %v3601 = vld [vmem:[%s3587 + $0x34] sm:$0xf]
    %v3602 = vld [vmem:[%s3587 + $0x38] sm:$0xf]
    %v3603 = vld [vmem:[%s3587 + $0x3c] sm:$0xf]
    %v3620 = vunpack.c.l.b16 %v3588
    %v3621 = vunpack.c.l.b16 %v3589
    %v3622 = vunpack.c.l.b16 %v3590
    %v3623 = vunpack.c.l.b16 %v3591
    %v3624 = vunpack.c.l.b16 %v3592
    %v3625 = vunpack.c.l.b16 %v3593
    %v3626 = vunpack.c.l.b16 %v3594
    %v3627 = vunpack.c.l.b16 %v3595
    %v3628 = vunpack.c.l.b16 %v3596
    %v3629 = vunpack.c.l.b16 %v3597
    %v3630 = vunpack.c.l.b16 %v3598
    %v3631 = vunpack.c.l.b16 %v3599
    %v3632 = vunpack.c.l.b16 %v3600
    %v3633 = vunpack.c.l.b16 %v3601
    %v3634 = vunpack.c.l.b16 %v3602
    %v3635 = vunpack.c.l.b16 %v3603
    %v3636 = vpack.c.b16 %v3621, %v3620
    %v3637 = vpack.c.b16 %v3623, %v3622
    %v3638 = vpack.c.b16 %v3625, %v3624
    %v3639 = vpack.c.b16 %v3627, %v3626
    %v3640 = vpack.c.b16 %v3629, %v3628
    %v3641 = vpack.c.b16 %v3631, %v3630
    %v3642 = vpack.c.b16 %v3633, %v3632
    %v3643 = vpack.c.b16 %v3635, %v3634
    %3652 = vmatprep.subr.bf16.mxu0 0
    %3653 = vmatpush1.bf16.msra.mxu0 %v3643
    %3654 = vmatprep.subr.bf16.mxu0 0
    %3655 = vmatpush1.bf16.msra.mxu0 %v3642
    %3656 = vmatprep.subr.bf16.mxu0 0
    %3657 = vmatpush1.bf16.msra.mxu0 %v3641
    %3658 = vmatprep.subr.bf16.mxu0 0
    %3659 = vmatpush1.bf16.msra.mxu0 %v3640
    %3660 = vmatprep.subr.bf16.mxu0 0
    %3661 = vmatpush1.bf16.msra.mxu0 %v3639
    %3662 = vmatprep.subr.bf16.mxu0 0
    %3663 = vmatpush1.bf16.msra.mxu0 %v3638
    %3664 = vmatprep.subr.bf16.mxu0 0
    %3665 = vmatpush1.bf16.msra.mxu0 %v3637
    %3666 = vmatprep.subr.bf16.mxu0 0
    %3667 = vmatpush1.bf16.msra.mxu0 %v3636
    %3668 = vmatprep.subr.bf16.mxu0 0
    %3669 = vmatpush2.bf16.msra.mxu0 0
    %3670 = vmatprep.subr.bf16.mxu0 0
    %3671 = vmatpush2.bf16.msra.mxu0 0
    %3672 = vmatprep.subr.bf16.mxu0 0
    %3673 = vmatpush2.bf16.msra.mxu0 0
    %3674 = vmatprep.subr.bf16.mxu0 0
    %3675 = vmatpush2.bf16.msra.mxu0 0
    %3676 = vmatprep.subr.bf16.mxu0 0
    %3677 = vmatpush2.bf16.msra.mxu0 0
    %3678 = vmatprep.subr.bf16.mxu0 0
    %3679 = vmatpush2.bf16.msra.mxu0 0
    %3680 = vmatprep.subr.bf16.mxu0 0
    %3681 = vmatpush2.bf16.msra.mxu0 0
    %3682 = vmatprep.subr.bf16.mxu0 0
    %3683 = vmatpush2.bf16.msra.mxu0 0
    %3684 = vmatprep.mubr.bf16.mxu0 0
    %3685 = vmatmul.mubr.bf16.gmra.mxu0 %v3579
    %v3686 = vpop.f32.mrf.mxu0
    %v3687 = vadd.f32 0.0, %v3686
    %v3688 = vpop.f32.mrf.mxu0
    %v3689 = vpop.f32.mrf.mxu0
    %v3690 = vadd.f32 0.0, %v3689
    %v3691 = vpop.f32.mrf.mxu0
    %3692 = vmatprep.mubr.bf16.mxu0 0
    %3693 = vmatmul.mubr.bf16.gmra.mxu0 %v3580
    %v3694 = vpop.f32.mrf.mxu0
    %v3695 = vadd.f32 0.0, %v3694
    %v3696 = vpop.f32.mrf.mxu0
    %v3697 = vpop.f32.mrf.mxu0
    %v3698 = vadd.f32 0.0, %v3697
    %v3699 = vpop.f32.mrf.mxu0
    %3700 = vmatprep.mubr.bf16.mxu0 0
    %3701 = vmatmul.mubr.bf16.gmra.mxu0 %v3581
    %v3702 = vpop.f32.mrf.mxu0
    %v3703 = vadd.f32 0.0, %v3702
    %v3704 = vpop.f32.mrf.mxu0
    %v3705 = vpop.f32.mrf.mxu0
    %v3706 = vadd.f32 0.0, %v3705
    %v3707 = vpop.f32.mrf.mxu0
    %3708 = vmatprep.mubr.bf16.mxu0 0
    %3709 = vmatmul.mubr.bf16.gmra.mxu0 %v3582
    %v3710 = vpop.f32.mrf.mxu0
    %v3711 = vadd.f32 0.0, %v3710
    %v3712 = vpop.f32.mrf.mxu0
    %v3713 = vpop.f32.mrf.mxu0
    %v3714 = vadd.f32 0.0, %v3713
    %v3715 = vpop.f32.mrf.mxu0
    %3716 = vmatprep.mubr.bf16.mxu0 0
    %3717 = vmatmul.mubr.bf16.gmra.mxu0 %v3583
    %v3718 = vpop.f32.mrf.mxu0
    %v3719 = vadd.f32 0.0, %v3718
    %v3720 = vpop.f32.mrf.mxu0
    %v3721 = vpop.f32.mrf.mxu0
    %v3722 = vadd.f32 0.0, %v3721
    %v3723 = vpop.f32.mrf.mxu0
    %3724 = vmatprep.mubr.bf16.mxu0 0
    %3725 = vmatmul.mubr.bf16.gmra.mxu0 %v3584
    %v3726 = vpop.f32.mrf.mxu0
    %v3727 = vadd.f32 0.0, %v3726
    %v3728 = vpop.f32.mrf.mxu0
    %v3729 = vpop.f32.mrf.mxu0
    %v3730 = vadd.f32 0.0, %v3729
    %v3731 = vpop.f32.mrf.mxu0
    %3732 = vmatprep.mubr.bf16.mxu0 0
    %3733 = vmatmul.mubr.bf16.gmra.mxu0 %v3585
    %v3734 = vpop.f32.mrf.mxu0
    %v3735 = vadd.f32 0.0, %v3734
    %v3736 = vpop.f32.mrf.mxu0
    %v3737 = vpop.f32.mrf.mxu0
    %v3738 = vadd.f32 0.0, %v3737
    %v3739 = vpop.f32.mrf.mxu0
    %3740 = vmatprep.mubr.bf16.mxu0 0
    %3741 = vmatmul.mubr.bf16.gmra.mxu0 %v3586
    %v3742 = vpop.f32.mrf.mxu0
    %v3743 = vadd.f32 0.0, %v3742
    %v3744 = vpop.f32.mrf.mxu0
    %v3745 = vpop.f32.mrf.mxu0
    %v3746 = vadd.f32 0.0, %v3745
    %v3747 = vpop.f32.mrf.mxu0
    %3748 = vdwg.mxu0
    %v3749 = vadd.f32 %v3547, %v3687
    %v3750 = vadd.f32 %v3548, %v3690
    %v3751 = vadd.f32 %v3549, %v3695
    %v3752 = vadd.f32 %v3550, %v3698
    %v3753 = vadd.f32 %v3551, %v3703
    %v3754 = vadd.f32 %v3552, %v3706
    %v3755 = vadd.f32 %v3553, %v3711
    %v3756 = vadd.f32 %v3554, %v3714
    %v3757 = vadd.f32 %v3555, %v3719
    %v3758 = vadd.f32 %v3556, %v3722
    %v3759 = vadd.f32 %v3557, %v3727
    %v3760 = vadd.f32 %v3558, %v3730
    %v3761 = vadd.f32 %v3559, %v3735
    %v3762 = vadd.f32 %v3560, %v3738
    %v3763 = vadd.f32 %v3561, %v3743
    %v3764 = vadd.f32 %v3562, %v3746
    %v3765 = vadd.f32 %v3749, %v3750
    %v3766 = vadd.f32 %v3765, %v3751
    %v3767 = vadd.f32 %v3766, %v3752
    %v3768 = vadd.f32 %v3767, %v3753
    %v3769 = vadd.f32 %v3768, %v3754
    %v3770 = vadd.f32 %v3769, %v3755
    %v3771 = vadd.f32 %v3770, %v3756
    %v3772 = vadd.f32 %v3771, %v3757
    %v3773 = vadd.f32 %v3772, %v3758
    %v3774 = vadd.f32 %v3773, %v3759
    %v3775 = vadd.f32 %v3774, %v3760
    %v3776 = vadd.f32 %v3775, %v3761
    %v3777 = vadd.f32 %v3776, %v3762
    %v3778 = vadd.f32 %v3777, %v3763
    %v3779 = vadd.f32 %v3778, %v3764
    %v3780 = vrot.slane %v3779, 4
    %v3781 = vadd.f32 %v3779, %v3780
    %v3782 = vrot.slane %v3781, 2
    %v3783 = vadd.f32 %v3781, %v3782
    %v3784 = vrot.slane %v3783, 1
    %v3785 = vadd.f32 %v3783, %v3784
    %v3786 = vmul.f32 %v3749, %v3749
    %v3787 = vmul.f32 %v3750, %v3750
    %v3788 = vmul.f32 %v3751, %v3751
    %v3789 = vmul.f32 %v3752, %v3752
    %v3790 = vmul.f32 %v3753, %v3753
    %v3791 = vmul.f32 %v3754, %v3754
    %v3792 = vmul.f32 %v3755, %v3755
    %v3793 = vmul.f32 %v3756, %v3756
    %v3794 = vmul.f32 %v3757, %v3757
    %v3795 = vmul.f32 %v3758, %v3758
    %v3796 = vmul.f32 %v3759, %v3759
    %v3797 = vmul.f32 %v3760, %v3760
    %v3798 = vmul.f32 %v3761, %v3761
    %v3799 = vmul.f32 %v3762, %v3762
    %v3800 = vmul.f32 %v3763, %v3763
    %v3801 = vmul.f32 %v3764, %v3764
    %v3802 = vadd.f32 %v3786, %v3787
    %v3803 = vadd.f32 %v3802, %v3788
    %v3804 = vadd.f32 %v3803, %v3789
    %v3805 = vadd.f32 %v3804, %v3790
    %v3806 = vadd.f32 %v3805, %v3791
    %v3807 = vadd.f32 %v3806, %v3792
    %v3808 = vadd.f32 %v3807, %v3793
    %v3809 = vadd.f32 %v3808, %v3794
    %v3810 = vadd.f32 %v3809, %v3795
    %v3811 = vadd.f32 %v3810, %v3796
    %v3812 = vadd.f32 %v3811, %v3797
    %v3813 = vadd.f32 %v3812, %v3798
    %v3814 = vadd.f32 %v3813, %v3799
    %v3815 = vadd.f32 %v3814, %v3800
    %v3816 = vadd.f32 %v3815, %v3801
    %v3817 = vrot.slane %v3816, 4
    %v3818 = vadd.f32 %v3816, %v3817
    %v3819 = vrot.slane %v3818, 2
    %v3820 = vadd.f32 %v3818, %v3819
    %v3821 = vrot.slane %v3820, 1
    %v3822 = vadd.f32 %v3820, %v3821
    %v3823 = vrcp.pop 128.0
    %v3824 = vmul.f32 %v3785, %v3823
    %v3825 = vmul.f32 %v3822, %v3823
    %v3826 = vmul.f32 %v3824, %v3824
    %v3827 = vsub.f32 %v3825, %v3826
    %v3828 = vadd.f32 %v3827, 1e-05
    %v3829 = vrsqrt.pop %v3828
    %v3830 = vmul.f32 %v22, %v3829
    %v3831 = vmul.f32 %v3824, %v3830
    %v3833 = vrot.slane %v3831, 7
    %v3835 = vsub.f32 %v22, %v3833
    %v3836 = vlaneseq
    %v3837 = vshrl.u32 %v3836, 7
    %v3838 = vsub.s32 2, %v3837
    %v3839 = vrot.slane %v3830, %v3838
    %v3840 = vmul.f32 %v3749, %v3839
    %v3841 = vmul.f32 %v3750, %v3839
    %v3842 = vmul.f32 %v3751, %v3839
    %v3843 = vmul.f32 %v3752, %v3839
    %v3844 = vmul.f32 %v3753, %v3839
    %v3845 = vmul.f32 %v3754, %v3839
    %v3846 = vmul.f32 %v3755, %v3839
    %v3847 = vmul.f32 %v3756, %v3839
    %v3848 = vmul.f32 %v3757, %v3839
    %v3849 = vmul.f32 %v3758, %v3839
    %v3850 = vmul.f32 %v3759, %v3839
    %v3851 = vmul.f32 %v3760, %v3839
    %v3852 = vmul.f32 %v3761, %v3839
    %v3853 = vmul.f32 %v3762, %v3839
    %v3854 = vmul.f32 %v3763, %v3839
    %v3855 = vmul.f32 %v3764, %v3839
    %v3856 = vlaneseq
    %v3857 = vshrl.u32 %v3856, 7
    %v3858 = vsub.s32 3, %v3857
    %v3859 = vrot.slane %v3835, %v3858
    %v3860 = vadd.f32 %v3840, %v3859
    %v3861 = vadd.f32 %v3841, %v3859
    %v3862 = vadd.f32 %v3842, %v3859
    %v3863 = vadd.f32 %v3843, %v3859
    %v3864 = vadd.f32 %v3844, %v3859
    %v3865 = vadd.f32 %v3845, %v3859
    %v3866 = vadd.f32 %v3846, %v3859
    %v3867 = vadd.f32 %v3847, %v3859
    %v3868 = vadd.f32 %v3848, %v3859
    %v3869 = vadd.f32 %v3849, %v3859
    %v3870 = vadd.f32 %v3850, %v3859
    %v3871 = vadd.f32 %v3851, %v3859
    %v3872 = vadd.f32 %v3852, %v3859
    %v3873 = vadd.f32 %v3853, %v3859
    %v3874 = vadd.f32 %v3854, %v3859
    %v3875 = vadd.f32 %v3855, %v3859
    %v3876 = vmax.f32 %v3860, 0.0
    %v3877 = vmax.f32 %v3861, 0.0
    %v3878 = vmax.f32 %v3862, 0.0
    %v3879 = vmax.f32 %v3863, 0.0
    %v3880 = vmax.f32 %v3864, 0.0
    %v3881 = vmax.f32 %v3865, 0.0
    %v3882 = vmax.f32 %v3866, 0.0
    %v3883 = vmax.f32 %v3867, 0.0
    %v3884 = vmax.f32 %v3868, 0.0
    %v3885 = vmax.f32 %v3869, 0.0
    %v3886 = vmax.f32 %v3870, 0.0
    %v3887 = vmax.f32 %v3871, 0.0
    %v3888 = vmax.f32 %v3872, 0.0
    %v3889 = vmax.f32 %v3873, 0.0
    %v3890 = vmax.f32 %v3874, 0.0
    %v3891 = vmax.f32 %v3875, 0.0
    %v3892 = vpack.c.bf16 %v3877, %v3876
    %v3893 = vpack.c.bf16 %v3879, %v3878
    %v3894 = vpack.c.bf16 %v3881, %v3880
    %v3895 = vpack.c.bf16 %v3883, %v3882
    %v3896 = vpack.c.bf16 %v3885, %v3884
    %v3897 = vpack.c.bf16 %v3887, %v3886
    %v3898 = vpack.c.bf16 %v3889, %v3888
    %v3899 = vpack.c.bf16 %v3891, %v3890
    %v3900 = vld [vmem:[%s3] sm:$0xf]
    %v3901 = vld [vmem:[%s3 + $0x4] sm:$0xf]
    %v3902 = vld [vmem:[%s3 + $0x8] sm:$0xf]
    %v3903 = vld [vmem:[%s3 + $0xc] sm:$0xf]
    %v3904 = vld [vmem:[%s3 + $0x10] sm:$0xf]
    %v3905 = vld [vmem:[%s3 + $0x14] sm:$0xf]
    %v3906 = vld [vmem:[%s3 + $0x18] sm:$0xf]
    %v3907 = vld [vmem:[%s3 + $0x1c] sm:$0xf]
    %v3908 = vld [vmem:[%s3 + $0x20] sm:$0xf]
    %v3909 = vld [vmem:[%s3 + $0x24] sm:$0xf]
    %v3910 = vld [vmem:[%s3 + $0x28] sm:$0xf]
    %v3911 = vld [vmem:[%s3 + $0x2c] sm:$0xf]
    %v3912 = vld [vmem:[%s3 + $0x30] sm:$0xf]
    %v3913 = vld [vmem:[%s3 + $0x34] sm:$0xf]
    %v3914 = vld [vmem:[%s3 + $0x38] sm:$0xf]
    %v3915 = vld [vmem:[%s3 + $0x3c] sm:$0xf]
    %v3932 = vunpack.c.l.b16 %v3900
    %v3933 = vunpack.c.l.b16 %v3901
    %v3934 = vunpack.c.l.b16 %v3902
    %v3935 = vunpack.c.l.b16 %v3903
    %v3936 = vunpack.c.l.b16 %v3904
    %v3937 = vunpack.c.l.b16 %v3905
    %v3938 = vunpack.c.l.b16 %v3906
    %v3939 = vunpack.c.l.b16 %v3907
    %v3940 = vunpack.c.l.b16 %v3908
    %v3941 = vunpack.c.l.b16 %v3909
    %v3942 = vunpack.c.l.b16 %v3910
    %v3943 = vunpack.c.l.b16 %v3911
    %v3944 = vunpack.c.l.b16 %v3912
    %v3945 = vunpack.c.l.b16 %v3913
    %v3946 = vunpack.c.l.b16 %v3914
    %v3947 = vunpack.c.l.b16 %v3915
    %v3948 = vpack.c.b16 %v3933, %v3932
    %v3949 = vpack.c.b16 %v3935, %v3934
    %v3950 = vpack.c.b16 %v3937, %v3936
    %v3951 = vpack.c.b16 %v3939, %v3938
    %v3952 = vpack.c.b16 %v3941, %v3940
    %v3953 = vpack.c.b16 %v3943, %v3942
    %v3954 = vpack.c.b16 %v3945, %v3944
    %v3955 = vpack.c.b16 %v3947, %v3946
    %3964 = vmatprep.subr.bf16.mxu0 0
    %3965 = vmatpush1.bf16.msra.mxu0 %v3955
    %3966 = vmatprep.subr.bf16.mxu0 0
    %3967 = vmatpush1.bf16.msra.mxu0 %v3954
    %3968 = vmatprep.subr.bf16.mxu0 0
    %3969 = vmatpush1.bf16.msra.mxu0 %v3953
    %3970 = vmatprep.subr.bf16.mxu0 0
    %3971 = vmatpush1.bf16.msra.mxu0 %v3952
    %3972 = vmatprep.subr.bf16.mxu0 0
    %3973 = vmatpush1.bf16.msra.mxu0 %v3951
    %3974 = vmatprep.subr.bf16.mxu0 0
    %3975 = vmatpush1.bf16.msra.mxu0 %v3950
    %3976 = vmatprep.subr.bf16.mxu0 0
    %3977 = vmatpush1.bf16.msra.mxu0 %v3949
    %3978 = vmatprep.subr.bf16.mxu0 0
    %3979 = vmatpush1.bf16.msra.mxu0 %v3948
    %3980 = vmatprep.subr.bf16.mxu0 0
    %3981 = vmatpush2.bf16.msra.mxu0 0
    %3982 = vmatprep.subr.bf16.mxu0 0
    %3983 = vmatpush2.bf16.msra.mxu0 0
    %3984 = vmatprep.subr.bf16.mxu0 0
    %3985 = vmatpush2.bf16.msra.mxu0 0
    %3986 = vmatprep.subr.bf16.mxu0 0
    %3987 = vmatpush2.bf16.msra.mxu0 0
    %3988 = vmatprep.subr.bf16.mxu0 0
    %3989 = vmatpush2.bf16.msra.mxu0 0
    %3990 = vmatprep.subr.bf16.mxu0 0
    %3991 = vmatpush2.bf16.msra.mxu0 0
    %3992 = vmatprep.subr.bf16.mxu0 0
    %3993 = vmatpush2.bf16.msra.mxu0 0
    %3994 = vmatprep.subr.bf16.mxu0 0
    %3995 = vmatpush2.bf16.msra.mxu0 0
    %3996 = vmatprep.mubr.bf16.mxu0 0
    %3997 = vmatmul.mubr.bf16.gmra.mxu0 %v3892
    %v3998 = vpop.f32.mrf.mxu0
    %v3999 = vadd.f32 0.0, %v3998
    %v4000 = vpop.f32.mrf.mxu0
    %v4001 = vpop.f32.mrf.mxu0
    %v4002 = vadd.f32 0.0, %v4001
    %v4003 = vpop.f32.mrf.mxu0
    %4004 = vmatprep.mubr.bf16.mxu0 0
    %4005 = vmatmul.mubr.bf16.gmra.mxu0 %v3893
    %v4006 = vpop.f32.mrf.mxu0
    %v4007 = vadd.f32 0.0, %v4006
    %v4008 = vpop.f32.mrf.mxu0
    %v4009 = vpop.f32.mrf.mxu0
    %v4010 = vadd.f32 0.0, %v4009
    %v4011 = vpop.f32.mrf.mxu0
    %4012 = vmatprep.mubr.bf16.mxu0 0
    %4013 = vmatmul.mubr.bf16.gmra.mxu0 %v3894
    %v4014 = vpop.f32.mrf.mxu0
    %v4015 = vadd.f32 0.0, %v4014
    %v4016 = vpop.f32.mrf.mxu0
    %v4017 = vpop.f32.mrf.mxu0
    %v4018 = vadd.f32 0.0, %v4017
    %v4019 = vpop.f32.mrf.mxu0
    %4020 = vmatprep.mubr.bf16.mxu0 0
    %4021 = vmatmul.mubr.bf16.gmra.mxu0 %v3895
    %v4022 = vpop.f32.mrf.mxu0
    %v4023 = vadd.f32 0.0, %v4022
    %v4024 = vpop.f32.mrf.mxu0
    %v4025 = vpop.f32.mrf.mxu0
    %v4026 = vadd.f32 0.0, %v4025
    %v4027 = vpop.f32.mrf.mxu0
    %4028 = vmatprep.mubr.bf16.mxu0 0
    %4029 = vmatmul.mubr.bf16.gmra.mxu0 %v3896
    %v4030 = vpop.f32.mrf.mxu0
    %v4031 = vadd.f32 0.0, %v4030
    %v4032 = vpop.f32.mrf.mxu0
    %v4033 = vpop.f32.mrf.mxu0
    %v4034 = vadd.f32 0.0, %v4033
    %v4035 = vpop.f32.mrf.mxu0
    %4036 = vmatprep.mubr.bf16.mxu0 0
    %4037 = vmatmul.mubr.bf16.gmra.mxu0 %v3897
    %v4038 = vpop.f32.mrf.mxu0
    %v4039 = vadd.f32 0.0, %v4038
    %v4040 = vpop.f32.mrf.mxu0
    %v4041 = vpop.f32.mrf.mxu0
    %v4042 = vadd.f32 0.0, %v4041
    %v4043 = vpop.f32.mrf.mxu0
    %4044 = vmatprep.mubr.bf16.mxu0 0
    %4045 = vmatmul.mubr.bf16.gmra.mxu0 %v3898
    %v4046 = vpop.f32.mrf.mxu0
    %v4047 = vadd.f32 0.0, %v4046
    %v4048 = vpop.f32.mrf.mxu0
    %v4049 = vpop.f32.mrf.mxu0
    %v4050 = vadd.f32 0.0, %v4049
    %v4051 = vpop.f32.mrf.mxu0
    %4052 = vmatprep.mubr.bf16.mxu0 0
    %4053 = vmatmul.mubr.bf16.gmra.mxu0 %v3899
    %v4054 = vpop.f32.mrf.mxu0
    %v4055 = vadd.f32 0.0, %v4054
    %v4056 = vpop.f32.mrf.mxu0
    %v4057 = vpop.f32.mrf.mxu0
    %v4058 = vadd.f32 0.0, %v4057
    %v4059 = vpop.f32.mrf.mxu0
    %4060 = vdwg.mxu0
    %v4061 = vadd.f32 %v3999, %v4002
    %v4062 = vadd.f32 %v4061, %v4007
    %v4063 = vadd.f32 %v4062, %v4010
    %v4064 = vadd.f32 %v4063, %v4015
    %v4065 = vadd.f32 %v4064, %v4018
    %v4066 = vadd.f32 %v4065, %v4023
    %v4067 = vadd.f32 %v4066, %v4026
    %v4068 = vadd.f32 %v4067, %v4031
    %v4069 = vadd.f32 %v4068, %v4034
    %v4070 = vadd.f32 %v4069, %v4039
    %v4071 = vadd.f32 %v4070, %v4042
    %v4072 = vadd.f32 %v4071, %v4047
    %v4073 = vadd.f32 %v4072, %v4050
    %v4074 = vadd.f32 %v4073, %v4055
    %v4075 = vadd.f32 %v4074, %v4058
    %v4076 = vrot.slane %v4075, 4
    %v4077 = vadd.f32 %v4075, %v4076
    %v4078 = vrot.slane %v4077, 2
    %v4079 = vadd.f32 %v4077, %v4078
    %v4080 = vrot.slane %v4079, 1
    %v4081 = vadd.f32 %v4079, %v4080
    %v4082 = vmul.f32 %v3999, %v3999
    %v4083 = vmul.f32 %v4002, %v4002
    %v4084 = vmul.f32 %v4007, %v4007
    %v4085 = vmul.f32 %v4010, %v4010
    %v4086 = vmul.f32 %v4015, %v4015
    %v4087 = vmul.f32 %v4018, %v4018
    %v4088 = vmul.f32 %v4023, %v4023
    %v4089 = vmul.f32 %v4026, %v4026
    %v4090 = vmul.f32 %v4031, %v4031
    %v4091 = vmul.f32 %v4034, %v4034
    %v4092 = vmul.f32 %v4039, %v4039
    %v4093 = vmul.f32 %v4042, %v4042
    %v4094 = vmul.f32 %v4047, %v4047
    %v4095 = vmul.f32 %v4050, %v4050
    %v4096 = vmul.f32 %v4055, %v4055
    %v4097 = vmul.f32 %v4058, %v4058
    %v4098 = vadd.f32 %v4082, %v4083
    %v4099 = vadd.f32 %v4098, %v4084
    %v4100 = vadd.f32 %v4099, %v4085
    %v4101 = vadd.f32 %v4100, %v4086
    %v4102 = vadd.f32 %v4101, %v4087
    %v4103 = vadd.f32 %v4102, %v4088
    %v4104 = vadd.f32 %v4103, %v4089
    %v4105 = vadd.f32 %v4104, %v4090
    %v4106 = vadd.f32 %v4105, %v4091
    %v4107 = vadd.f32 %v4106, %v4092
    %v4108 = vadd.f32 %v4107, %v4093
    %v4109 = vadd.f32 %v4108, %v4094
    %v4110 = vadd.f32 %v4109, %v4095
    %v4111 = vadd.f32 %v4110, %v4096
    %v4112 = vadd.f32 %v4111, %v4097
    %v4113 = vrot.slane %v4112, 4
    %v4114 = vadd.f32 %v4112, %v4113
    %v4115 = vrot.slane %v4114, 2
    %v4116 = vadd.f32 %v4114, %v4115
    %v4117 = vrot.slane %v4116, 1
    %v4118 = vadd.f32 %v4116, %v4117
    %v4119 = vmul.f32 %v4081, %v3823
    %v4120 = vmul.f32 %v4118, %v3823
    %v4121 = vmul.f32 %v4119, %v4119
    %v4122 = vsub.f32 %v4120, %v4121
    %v4123 = vadd.f32 %v4122, 1e-05
    %v4124 = vrsqrt.pop %v4123
    %v4125 = vmul.f32 %v22, %v4124
    %v4126 = vmul.f32 %v4119, %v4125
    %v4128 = vrot.slane %v4126, 7
    %v4130 = vsub.f32 %v22, %v4128
    %v4131 = vlaneseq
    %v4132 = vshrl.u32 %v4131, 7
    %v4133 = vsub.s32 4, %v4132
    %v4134 = vrot.slane %v4125, %v4133
    %v4135 = vmul.f32 %v3999, %v4134
    %v4136 = vmul.f32 %v4002, %v4134
    %v4137 = vmul.f32 %v4007, %v4134
    %v4138 = vmul.f32 %v4010, %v4134
    %v4139 = vmul.f32 %v4015, %v4134
    %v4140 = vmul.f32 %v4018, %v4134
    %v4141 = vmul.f32 %v4023, %v4134
    %v4142 = vmul.f32 %v4026, %v4134
    %v4143 = vmul.f32 %v4031, %v4134
    %v4144 = vmul.f32 %v4034, %v4134
    %v4145 = vmul.f32 %v4039, %v4134
    %v4146 = vmul.f32 %v4042, %v4134
    %v4147 = vmul.f32 %v4047, %v4134
    %v4148 = vmul.f32 %v4050, %v4134
    %v4149 = vmul.f32 %v4055, %v4134
    %v4150 = vmul.f32 %v4058, %v4134
    %v4151 = vlaneseq
    %v4152 = vshrl.u32 %v4151, 7
    %v4153 = vsub.s32 5, %v4152
    %v4154 = vrot.slane %v4130, %v4153
    %v4155 = vadd.f32 %v4135, %v4154
    %v4156 = vadd.f32 %v4136, %v4154
    %v4157 = vadd.f32 %v4137, %v4154
    %v4158 = vadd.f32 %v4138, %v4154
    %v4159 = vadd.f32 %v4139, %v4154
    %v4160 = vadd.f32 %v4140, %v4154
    %v4161 = vadd.f32 %v4141, %v4154
    %v4162 = vadd.f32 %v4142, %v4154
    %v4163 = vadd.f32 %v4143, %v4154
    %v4164 = vadd.f32 %v4144, %v4154
    %v4165 = vadd.f32 %v4145, %v4154
    %v4166 = vadd.f32 %v4146, %v4154
    %v4167 = vadd.f32 %v4147, %v4154
    %v4168 = vadd.f32 %v4148, %v4154
    %v4169 = vadd.f32 %v4149, %v4154
    %v4170 = vadd.f32 %v4150, %v4154
    %4171 = vst [vmem:[#allocation3] sm:$0xff] %v4155
    %4172 = vst [vmem:[#allocation3 + $0x8] sm:$0xff] %v4156
    %4173 = vst [vmem:[#allocation3 + $0x10] sm:$0xff] %v4157
    %4174 = vst [vmem:[#allocation3 + $0x18] sm:$0xff] %v4158
    %4175 = vst [vmem:[#allocation3 + $0x20] sm:$0xff] %v4159
    %4176 = vst [vmem:[#allocation3 + $0x28] sm:$0xff] %v4160
    %4177 = vst [vmem:[#allocation3 + $0x30] sm:$0xff] %v4161
    %4178 = vst [vmem:[#allocation3 + $0x38] sm:$0xff] %v4162
    %4179 = vst [vmem:[#allocation3 + $0x40] sm:$0xff] %v4163
    %4180 = vst [vmem:[#allocation3 + $0x48] sm:$0xff] %v4164
    %4181 = vst [vmem:[#allocation3 + $0x50] sm:$0xff] %v4165
    %4182 = vst [vmem:[#allocation3 + $0x58] sm:$0xff] %v4166
    %4183 = vst [vmem:[#allocation3 + $0x60] sm:$0xff] %v4167
    %4184 = vst [vmem:[#allocation3 + $0x68] sm:$0xff] %v4168
    %4185 = vst [vmem:[#allocation3 + $0x70] sm:$0xff] %v4169
    %4186 = vst [vmem:[#allocation3 + $0x78] sm:$0xff] %v4170
    // Predicated region
    $region22: #{tpu_custom_call.1} parent=1 // pred_check
      _
    $region23: #{tpu_custom_call.1} parent=1 // pred_check_branch
      %4188 = sbr.rel (0) target = $region25
    $region24: #{tpu_custom_call.1} parent=1 // pred_region
      %s4190 = ssub.s32 2048, 2048
      %4191 = vsyncadd [#allocation4], %s4190
      %s4192 = sshll.u32 [#allocation3], 4
      %s4193 = int_to_ptr.vmem [resolvable:$true] %s4192
      %4198 = dma.vmem_to_hbm [thread:$0]  %s4193, 2048, %s5, [#allocation4], 128, 128, 8
    $region25: #{tpu_custom_call.1} parent=1 // pred_fallthru
      _
    // Predicated region
    $region26: #{tpu_custom_call.1} parent=1 // pred_check
      _
    $region27: #{tpu_custom_call.1} parent=1 // pred_check_branch
      %4200 = sbr.rel (0) target = $region29
    $region28: #{tpu_custom_call.1} parent=1 // pred_region
      %4201 = dma.done [#allocation4], 2048
    $region29: #{tpu_custom_call.1} parent=1 // pred_fallthru
      _
    %4202 = vsyncpa [#allocation4], 1

</llo_original>
